<compile_context>
chip_gen: v5e
topology: v5e:2x2
jax: 0.10.0
libtpu: 0.0.40
codegen_flags: <defaults>
</compile_context>

<pallas_src>
import functools
import math

import numpy as np
import jax
import jax.numpy as jnp
from jax import lax
from jax.experimental import pallas as pl
from jax.experimental.pallas import tpu as pltpu


# ----------------------------- in-kernel helpers -----------------------------

def _layer_norm(x, g, b, eps=1e-5):
    # single-pass layernorm: one sum + one sum-of-squares reduction
    inv_n = 1.0 / x.shape[-1]
    mu = jnp.sum(x, axis=-1, keepdims=True) * inv_n
    ms = jnp.sum(x * x, axis=-1, keepdims=True) * inv_n
    var = ms - mu * mu
    return (x - mu) * lax.rsqrt(var + eps) * g + b


def decoder_stack_kernel(emb_ref, enc_ref,
                         sscale_ref, sbias_ref, escale_ref, ebias_ref,
                         wq1_ref, wk1_ref, wv1_ref, wo1_ref, g1_ref, b1_ref,
                         wq2_ref, wk2_ref, wv2_ref, wo2_ref, g2_ref, b2_ref,
                         wf1_ref, wf2_ref, g3_ref, b3_ref,
                         out_ref, sattn_ref, eattn_ref,
                         ctx_ref,
                         *, batch, tgt_len, n_heads, d_k, d_v):
    layer = pl.program_id(0)

    # layer 0: load embedded inputs into the resident activation buffer
    @pl.when(layer == 0)
    def _():
        out_ref[...] = emb_ref[...]

    x = out_ref[...]            # [B*T, D], resident in VMEM across layer iterations
    enc = enc_ref[...]          # [B*S, D]
    enc_len = enc.shape[0] // batch

    def mha(q_in, kv_in, kv_len, wq, wk, wv, wo, mscale_ref, mbias_ref, attn_ref):
        # fused, full-width projections (whole batch folded into sublanes)
        q = jnp.dot(q_in, wq, preferred_element_type=jnp.float32)    # [B*T, H*dk]
        k = jnp.dot(kv_in, wk, preferred_element_type=jnp.float32)   # [B*L, H*dk]
        v = jnp.dot(kv_in, wv, preferred_element_type=jnp.float32)   # [B*L, H*dv]
        for b in range(batch):                                       # static unroll
            qb = q[b * tgt_len:(b + 1) * tgt_len]
            kb = k[b * kv_len:(b + 1) * kv_len]
            vb = v[b * kv_len:(b + 1) * kv_len]
            mscale = mscale_ref[b]          # (1-mask)/sqrt(d_k), hoisted to wrapper
            mbias = mbias_ref[b]            # -1e9 * mask
            for h in range(n_heads):                                 # static unroll
                qh = qb[:, h * d_k:(h + 1) * d_k]
                kh = kb[:, h * d_k:(h + 1) * d_k]
                vh = vb[:, h * d_v:(h + 1) * d_v]
                # q @ k^T with the transpose folded into the MXU operand feed
                s = lax.dot_general(qh, kh, (((1,), (1,)), ((), ())),
                                    preferred_element_type=jnp.float32)
                s = s * mscale + mbias      # exact masked_fill(-1e9) semantics
                s = s - jnp.max(s, axis=-1, keepdims=True)
                e = jnp.exp(s)
                attn = e * pl.reciprocal(jnp.sum(e, axis=-1, keepdims=True),
                                         approx=True)
                attn_ref[0, b, h] = attn
                ctx_ref[b * tgt_len:(b + 1) * tgt_len,
                        h * d_v:(h + 1) * d_v] = jnp.dot(
                    attn, vh, preferred_element_type=jnp.float32)
        # concat-over-heads + output fc == one full-width matmul on the packed context
        return jnp.dot(ctx_ref[...], wo, preferred_element_type=jnp.float32)

    # --- decoder self-attention sub-layer ---
    sa = mha(x, x, tgt_len, wq1_ref[0], wk1_ref[0], wv1_ref[0], wo1_ref[0],
             sscale_ref, sbias_ref, sattn_ref)
    y = _layer_norm(sa + x, g1_ref[0], b1_ref[0])

    # --- encoder-decoder attention sub-layer ---
    ca = mha(y, enc, enc_len, wq2_ref[0], wk2_ref[0], wv2_ref[0], wo2_ref[0],
             escale_ref, ebias_ref, eattn_ref)
    z = _layer_norm(ca + y, g2_ref[0], b2_ref[0])

    # --- position-wise feed-forward sub-layer ---
    h1 = jnp.maximum(jnp.dot(z, wf1_ref[0], preferred_element_type=jnp.float32), 0.0)
    ff = jnp.dot(h1, wf2_ref[0], preferred_element_type=jnp.float32)
    out_ref[...] = _layer_norm(ff + z, g3_ref[0], b3_ref[0])


# ----------------------------- pallas_call wrapper -----------------------------

def decoder_stack(dec_emb, enc_outputs, sscale, sbias, escale, ebias, stacked,
                  *, n_heads, d_k, d_v):
    B, T, D = dec_emb.shape
    S = enc_outputs.shape[1]
    L = stacked[0].shape[0]
    H = n_heads

    emb_flat = dec_emb.reshape(B * T, D).astype(jnp.float32)
    enc_flat = enc_outputs.reshape(B * S, D).astype(jnp.float32)

    def const_spec(shape):
        n = len(shape)
        return pl.BlockSpec(shape, lambda l, _n=n: (0,) * _n)

    def per_layer_spec(shape_tail):
        n = len(shape_tail)
        return pl.BlockSpec((1,) + tuple(shape_tail),
                            lambda l, _n=n: (l,) + (0,) * _n)

    in_specs = ([const_spec((B * T, D)), const_spec((B * S, D)),
                 const_spec((B, T, T)), const_spec((B, T, T)),
                 const_spec((B, T, S)), const_spec((B, T, S))]
                + [per_layer_spec(w.shape[1:]) for w in stacked])

    out_specs = [const_spec((B * T, D)),
                 per_layer_spec((B, H, T, T)),
                 per_layer_spec((B, H, T, S))]
    out_shape = [jax.ShapeDtypeStruct((B * T, D), jnp.float32),
                 jax.ShapeDtypeStruct((L, B, H, T, T), jnp.float32),
                 jax.ShapeDtypeStruct((L, B, H, T, S), jnp.float32)]

    kernel = functools.partial(decoder_stack_kernel,
                               batch=B, tgt_len=T, n_heads=H, d_k=d_k, d_v=d_v)

    out_flat, sattn, eattn = pl.pallas_call(
        kernel,
        out_shape=out_shape,
        grid_spec=pltpu.PrefetchScalarGridSpec(
            num_scalar_prefetch=0, grid=(L,),
            in_specs=in_specs, out_specs=out_specs,
            scratch_shapes=[pltpu.VMEM((B * T, H * d_v), jnp.float32)]),
        compiler_params=pltpu.CompilerParams(
            dimension_semantics=("arbitrary",)),   # layers are sequential
    )(emb_flat, enc_flat, sscale, sbias, escale, ebias, *stacked)

    return out_flat.reshape(B, T, D), sattn, eattn


# ----------------------------- plain-JAX glue (embedding / masks) -----------------------------

def get_sinusoid_encoding_table(n_position, d_model):
    def cal_angle(position, hid_idx):
        return position / np.power(10000, 2 * (hid_idx // 2) / d_model)
    table = np.array([[cal_angle(pos, j) for j in range(d_model)]
                      for pos in range(n_position)], dtype=np.float64)
    table[:, 0::2] = np.sin(table[:, 0::2])
    table[:, 1::2] = np.cos(table[:, 1::2])
    return jnp.asarray(table, dtype=jnp.float32)


def get_attn_pad_mask(seq_q, seq_k):
    B, Lq = seq_q.shape
    Lk = seq_k.shape[1]
    pad = (seq_k == 0)[:, None, :]                  # [B, 1, Lk]
    return jnp.broadcast_to(pad, (B, Lq, Lk))


def get_attn_subsequence_mask(seq):
    B, L = seq.shape
    sub = jnp.triu(jnp.ones((L, L), jnp.int32), k=1)
    return jnp.broadcast_to(sub[None], (B, L, L))


def decoder_forward(dec_inputs, enc_inputs, enc_outputs, params,
                    *, n_heads, d_k, d_v):
    # embedding (pos_emb indexed by TOKEN ids, exactly as in the reference)
    word_emb = params["tgt_emb"][dec_inputs]
    pos_emb = params["pos_emb"][dec_inputs]
    dec_emb = (word_emb + pos_emb).astype(jnp.float32)

    pad = get_attn_pad_mask(dec_inputs, dec_inputs)
    sub = get_attn_subsequence_mask(dec_inputs)
    # trans=True semantics (trans=False branch in the reference is ill-defined)
    smask = ((pad.astype(jnp.int32) + sub) > 0).astype(jnp.float32)   # 1 == masked
    emask = get_attn_pad_mask(dec_inputs, enc_inputs).astype(jnp.float32)

    # hoisted mask algebra: scores * ((1-mask)/sqrt(dk)) + (-1e9 * mask)
    scale = jnp.float32(1.0 / math.sqrt(d_k))
    sscale = (1.0 - smask) * scale
    sbias = smask * jnp.float32(-1e9)
    escale = (1.0 - emask) * scale
    ebias = emask * jnp.float32(-1e9)

    # stack per-layer weights along a leading layer axis for the fused kernel
    n_params = len(params["layers"][0])
    stacked = [jnp.stack([lp[i] for lp in params["layers"]]) for i in range(n_params)]

    dec_out, sattn, eattn = decoder_stack(dec_emb, enc_outputs,
                                          sscale, sbias, escale, ebias, stacked,
                                          n_heads=n_heads, d_k=d_k, d_v=d_v)
    n_layers = len(params["layers"])
    self_attns = [sattn[i] for i in range(n_layers)]
    enc_attns = [eattn[i] for i in range(n_layers)]
    return dec_out, self_attns, enc_attns


# ----------------------------- pure-JAX reference (for verification) -----------------------------

def _ref_ln(x, g, b, eps=1e-5):
    mu = jnp.mean(x, axis=-1, keepdims=True)
    var = jnp.mean((x - mu) ** 2, axis=-1, keepdims=True)
    return (x - mu) / jnp.sqrt(var + eps) * g + b


def _ref_mha(q_in, kv_in, wq, wk, wv, wo, g, b, mask, n_heads, d_k, d_v):
    B, Lq, D = q_in.shape
    Lk = kv_in.shape[1]
    Q = (q_in @ wq).reshape(B, Lq, n_heads, d_k).transpose(0, 2, 1, 3)
    K = (kv_in @ wk).reshape(B, Lk, n_heads, d_k).transpose(0, 2, 1, 3)
    V = (kv_in @ wv).reshape(B, Lk, n_heads, d_v).transpose(0, 2, 1, 3)
    scores = jnp.einsum('bhqd,bhkd->bhqk', Q, K) / math.sqrt(d_k)
    scores = jnp.where(mask[:, None] > 0, -1e9, scores)
    attn = jax.nn.softmax(scores, axis=-1)
    ctx = jnp.einsum('bhqk,bhkd->bhqd', attn, V).transpose(0, 2, 1, 3)
    ctx = ctx.reshape(B, Lq, n_heads * d_v)
    return _ref_ln(ctx @ wo + q_in, g, b), attn


def ref_decoder_forward(dec_inputs, enc_inputs, enc_outputs, params,
                        *, n_heads, d_k, d_v):
    x = (params["tgt_emb"][dec_inputs] + params["pos_emb"][dec_inputs]).astype(jnp.float32)
    pad = get_attn_pad_mask(dec_inputs, dec_inputs)
    sub = get_attn_subsequence_mask(dec_inputs)
    smask = ((pad.astype(jnp.int32) + sub) > 0).astype(jnp.float32)
    emask = get_attn_pad_mask(dec_inputs, enc_inputs).astype(jnp.float32)
    sas, eas = [], []
    for (wq1, wk1, wv1, wo1, g1, b1,
         wq2, wk2, wv2, wo2, g2, b2,
         wf1, wf2, g3, b3) in params["layers"]:
        x, sa = _ref_mha(x, x, wq1, wk1, wv1, wo1, g1, b1, smask, n_heads, d_k, d_v)
        x, ea = _ref_mha(x, enc_outputs, wq2, wk2, wv2, wo2, g2, b2, emask, n_heads, d_k, d_v)
        x = _ref_ln(jnp.maximum(x @ wf1, 0.0) @ wf2 + x, g3, b3)
        sas.append(sa)
        eas.append(ea)
    return x, sas, eas


# ----------------------------- parameter init -----------------------------

def init_params(key, tgt_vocab, d_model, d_k, d_v, n_heads, d_ff, n_layers):
    keys = jax.random.split(key, 1 + n_layers)
    tgt_emb = jax.random.normal(keys[0], (tgt_vocab, d_model), jnp.float32) * 0.02
    pos_emb = get_sinusoid_encoding_table(tgt_vocab, d_model)
    layers = []
    for li in range(n_layers):
        ks = jax.random.split(keys[1 + li], 10)
        def w(k, i, o):
            return jax.random.normal(k, (i, o), jnp.float32) * 0.05
        g = lambda: jnp.ones((1, d_model), jnp.float32)
        z = lambda: jnp.zeros((1, d_model), jnp.float32)
        layer = (
            w(ks[0], d_model, n_heads * d_k),  # wq1
            w(ks[1], d_model, n_heads * d_k),  # wk1
            w(ks[2], d_model, n_heads * d_v),  # wv1
            w(ks[3], n_heads * d_v, d_model),  # wo1
            g(), z(),                          # ln1
            w(ks[4], d_model, n_heads * d_k),  # wq2
            w(ks[5], d_model, n_heads * d_k),  # wk2
            w(ks[6], d_model, n_heads * d_v),  # wv2
            w(ks[7], n_heads * d_v, d_model),  # wo2
            g(), z(),                          # ln2
            w(ks[8], d_model, d_ff),           # wf1
            w(ks[9], d_ff, d_model),           # wf2
            g(), z(),                          # ln3
        )
        layers.append(layer)
    return {"tgt_emb": tgt_emb, "pos_emb": pos_emb, "layers": layers}


# ----------------------------- main -----------------------------

if __name__ == "__main__":
    tgt_vocab = 50
    d_model, d_k, d_v, n_heads, d_ff, n_layers = 32, 8, 8, 4, 64, 2
    B, tgt_len, src_len = 2, 8, 8

    root = jax.random.PRNGKey(0)
    kp, kd, ke, ko = jax.random.split(root, 4)
    params = init_params(kp, tgt_vocab, d_model, d_k, d_v, n_heads, d_ff, n_layers)

    dec_inputs = jax.random.randint(kd, (B, tgt_len), 0, tgt_vocab, dtype=jnp.int32)
    enc_inputs = jax.random.randint(ke, (B, src_len), 0, tgt_vocab, dtype=jnp.int32)
    # make sure at least one pad token exists (exercises the pad masks)
    dec_inputs = dec_inputs.at[0, -1].set(0)
    enc_inputs = enc_inputs.at[1, -1].set(0)
    enc_outputs = jax.random.normal(ko, (B, src_len, d_model), jnp.float32)

    dec_out, self_attns, enc_attns = decoder_forward(
        dec_inputs, enc_inputs, enc_outputs, params,
        n_heads=n_heads, d_k=d_k, d_v=d_v)
    dec_out = jax.block_until_ready(dec_out)
    self_attns = [jax.block_until_ready(a) for a in self_attns]
    enc_attns = [jax.block_until_ready(a) for a in enc_attns]

    # verify against a pure-JAX reference of the same math.
    # tolerance 2e-2 accounts for pl.reciprocal(approx=True) in the softmax.
    ref_out, ref_sas, ref_eas = ref_decoder_forward(
        dec_inputs, enc_inputs, enc_outputs, params,
        n_heads=n_heads, d_k=d_k, d_v=d_v)
    np.testing.assert_allclose(np.asarray(dec_out), np.asarray(ref_out),
                               rtol=2e-2, atol=2e-2)
    for a, r in zip(self_attns, ref_sas):
        np.testing.assert_allclose(np.asarray(a), np.asarray(r), rtol=2e-2, atol=2e-2)
    for a, r in zip(enc_attns, ref_eas):
        np.testing.assert_allclose(np.asarray(a), np.asarray(r), rtol=2e-2, atol=2e-2)

    print("KERNEL_OK")
</pallas_src>

<mosaic_0001>
module attributes {stable_mosaic.version = 11 : i64} {
  func.func @decoder_stack_kernel(%arg0: i32, %arg1: memref<16x32xf32, #tpu.memory_space<vmem>>, %arg2: memref<16x32xf32, #tpu.memory_space<vmem>>, %arg3: memref<2x8x8xf32, #tpu.memory_space<vmem>>, %arg4: memref<2x8x8xf32, #tpu.memory_space<vmem>>, %arg5: memref<2x8x8xf32, #tpu.memory_space<vmem>>, %arg6: memref<2x8x8xf32, #tpu.memory_space<vmem>>, %arg7: memref<1x32x32xf32, #tpu.memory_space<vmem>>, %arg8: memref<1x32x32xf32, #tpu.memory_space<vmem>>, %arg9: memref<1x32x32xf32, #tpu.memory_space<vmem>>, %arg10: memref<1x32x32xf32, #tpu.memory_space<vmem>>, %arg11: memref<1x1x32xf32, #tpu.memory_space<vmem>>, %arg12: memref<1x1x32xf32, #tpu.memory_space<vmem>>, %arg13: memref<1x32x32xf32, #tpu.memory_space<vmem>>, %arg14: memref<1x32x32xf32, #tpu.memory_space<vmem>>, %arg15: memref<1x32x32xf32, #tpu.memory_space<vmem>>, %arg16: memref<1x32x32xf32, #tpu.memory_space<vmem>>, %arg17: memref<1x1x32xf32, #tpu.memory_space<vmem>>, %arg18: memref<1x1x32xf32, #tpu.memory_space<vmem>>, %arg19: memref<1x32x64xf32, #tpu.memory_space<vmem>>, %arg20: memref<1x64x32xf32, #tpu.memory_space<vmem>>, %arg21: memref<1x1x32xf32, #tpu.memory_space<vmem>>, %arg22: memref<1x1x32xf32, #tpu.memory_space<vmem>>, %arg23: memref<16x32xf32, #tpu.memory_space<vmem>>, %arg24: memref<1x2x4x8x8xf32, #tpu.memory_space<vmem>>, %arg25: memref<1x2x4x8x8xf32, #tpu.memory_space<vmem>>, %arg26: memref<16x32xf32, #tpu.memory_space<vmem>>) attributes {dimension_semantics = [#tpu.dimension_semantics<arbitrary>], iteration_bounds = array<i64: 2>, scalar_prefetch = 0 : i64, scratch_operands = 1 : i64, tpu.core_type = #tpu.core_type<tc>, window_params = [{pipeline_mode = #tpu.pipeline_mode<synchronous>, transform_indices = @transform_0, window_bounds = array<i64: 16, 32>}, {pipeline_mode = #tpu.pipeline_mode<synchronous>, transform_indices = @transform_1, window_bounds = array<i64: 16, 32>}, {pipeline_mode = #tpu.pipeline_mode<synchronous>, transform_indices = @transform_2, window_bounds = array<i64: 2, 8, 8>}, {pipeline_mode = #tpu.pipeline_mode<synchronous>, transform_indices = @transform_3, window_bounds = array<i64: 2, 8, 8>}, {pipeline_mode = #tpu.pipeline_mode<synchronous>, transform_indices = @transform_4, window_bounds = array<i64: 2, 8, 8>}, {pipeline_mode = #tpu.pipeline_mode<synchronous>, transform_indices = @transform_5, window_bounds = array<i64: 2, 8, 8>}, {transform_indices = @transform_6, window_bounds = array<i64: 1, 32, 32>}, {transform_indices = @transform_7, window_bounds = array<i64: 1, 32, 32>}, {transform_indices = @transform_8, window_bounds = array<i64: 1, 32, 32>}, {transform_indices = @transform_9, window_bounds = array<i64: 1, 32, 32>}, {transform_indices = @transform_10, window_bounds = array<i64: 1, 1, 32>}, {transform_indices = @transform_11, window_bounds = array<i64: 1, 1, 32>}, {transform_indices = @transform_12, window_bounds = array<i64: 1, 32, 32>}, {transform_indices = @transform_13, window_bounds = array<i64: 1, 32, 32>}, {transform_indices = @transform_14, window_bounds = array<i64: 1, 32, 32>}, {transform_indices = @transform_15, window_bounds = array<i64: 1, 32, 32>}, {transform_indices = @transform_16, window_bounds = array<i64: 1, 1, 32>}, {transform_indices = @transform_17, window_bounds = array<i64: 1, 1, 32>}, {transform_indices = @transform_18, window_bounds = array<i64: 1, 32, 64>}, {transform_indices = @transform_19, window_bounds = array<i64: 1, 64, 32>}, {transform_indices = @transform_20, window_bounds = array<i64: 1, 1, 32>}, {transform_indices = @transform_21, window_bounds = array<i64: 1, 1, 32>}, {pipeline_mode = #tpu.pipeline_mode<synchronous>, transform_indices = @transform_22, window_bounds = array<i64: 16, 32>}, {transform_indices = @transform_23, window_bounds = array<i64: 1, 2, 4, 8, 8>}, {transform_indices = @transform_24, window_bounds = array<i64: 1, 2, 4, 8, 8>}]} {
    %c0_i32 = arith.constant 0 : i32
    %0 = arith.cmpi eq, %arg0, %c0_i32 : i32
    %1 = arith.extui %0 : i1 to i32
    %c0_i32_0 = arith.constant 0 : i32
    %2 = arith.cmpi ne, %1, %c0_i32_0 : i32
    scf.if %2 {
      %c0_277 = arith.constant 0 : index
      %c0_278 = arith.constant 0 : index
      %485 = vector.load %arg1[%c0_277, %c0_278] : memref<16x32xf32, #tpu.memory_space<vmem>>, vector<16x32xf32>
      %c0_279 = arith.constant 0 : index
      %c0_280 = arith.constant 0 : index
      %486 = vector.load %arg23[%c0_279, %c0_280] : memref<16x32xf32, #tpu.memory_space<vmem>>, vector<16x32xf32>
      tpu.vector_store %arg23[%c0_279, %c0_280], %485 {strides = array<i32>} : memref<16x32xf32, #tpu.memory_space<vmem>>, vector<16x32xf32>,
    } else {
    }
    %c0 = arith.constant 0 : index
    %c0_1 = arith.constant 0 : index
    %3 = vector.load %arg23[%c0, %c0_1] : memref<16x32xf32, #tpu.memory_space<vmem>>, vector<16x32xf32>
    %c0_2 = arith.constant 0 : index
    %c0_3 = arith.constant 0 : index
    %4 = vector.load %arg2[%c0_2, %c0_3] : memref<16x32xf32, #tpu.memory_space<vmem>>, vector<16x32xf32>
    %c0_4 = arith.constant 0 : index
    %c0_5 = arith.constant 0 : index
    %c0_6 = arith.constant 0 : index
    %5 = vector.load %arg7[%c0_4, %c0_5, %c0_6] : memref<1x32x32xf32, #tpu.memory_space<vmem>>, vector<1x32x32xf32>
    %6 = vector.shape_cast %5 : vector<1x32x32xf32> to vector<32x32xf32>
    %c0_7 = arith.constant 0 : index
    %c0_8 = arith.constant 0 : index
    %c0_9 = arith.constant 0 : index
    %7 = vector.load %arg8[%c0_7, %c0_8, %c0_9] : memref<1x32x32xf32, #tpu.memory_space<vmem>>, vector<1x32x32xf32>
    %8 = vector.shape_cast %7 : vector<1x32x32xf32> to vector<32x32xf32>
    %c0_10 = arith.constant 0 : index
    %c0_11 = arith.constant 0 : index
    %c0_12 = arith.constant 0 : index
    %9 = vector.load %arg9[%c0_10, %c0_11, %c0_12] : memref<1x32x32xf32, #tpu.memory_space<vmem>>, vector<1x32x32xf32>
    %10 = vector.shape_cast %9 : vector<1x32x32xf32> to vector<32x32xf32>
    %c0_13 = arith.constant 0 : index
    %c0_14 = arith.constant 0 : index
    %c0_15 = arith.constant 0 : index
    %11 = vector.load %arg10[%c0_13, %c0_14, %c0_15] : memref<1x32x32xf32, #tpu.memory_space<vmem>>, vector<1x32x32xf32>
    %12 = vector.shape_cast %11 : vector<1x32x32xf32> to vector<32x32xf32>
    %cst = arith.constant dense<0.000000e+00> : vector<16x32xf32>
    %13 = tpu.matmul %3, %6, %cst {dimension_numbers = #tpu.dot_dimension_numbers<[1], [0], [0], [1], [0, 0, 1, 1], [], []>} : vector<16x32xf32>, vector<32x32xf32>, vector<16x32xf32> -> vector<16x32xf32>
    %cst_16 = arith.constant dense<0.000000e+00> : vector<16x32xf32>
    %14 = tpu.matmul %3, %8, %cst_16 {dimension_numbers = #tpu.dot_dimension_numbers<[1], [0], [0], [1], [0, 0, 1, 1], [], []>} : vector<16x32xf32>, vector<32x32xf32>, vector<16x32xf32> -> vector<16x32xf32>
    %cst_17 = arith.constant dense<0.000000e+00> : vector<16x32xf32>
    %15 = tpu.matmul %3, %10, %cst_17 {dimension_numbers = #tpu.dot_dimension_numbers<[1], [0], [0], [1], [0, 0, 1, 1], [], []>} : vector<16x32xf32>, vector<32x32xf32>, vector<16x32xf32> -> vector<16x32xf32>
    %16 = vector.extract_strided_slice %13 {offsets = [0, 0], sizes = [8, 32], strides = [1, 1]} : vector<16x32xf32> to vector<8x32xf32>
    %17 = vector.extract_strided_slice %14 {offsets = [0, 0], sizes = [8, 32], strides = [1, 1]} : vector<16x32xf32> to vector<8x32xf32>
    %18 = vector.extract_strided_slice %15 {offsets = [0, 0], sizes = [8, 32], strides = [1, 1]} : vector<16x32xf32> to vector<8x32xf32>
    %c0_18 = arith.constant 0 : index
    %c0_19 = arith.constant 0 : index
    %c0_20 = arith.constant 0 : index
    %19 = vector.load %arg3[%c0_18, %c0_19, %c0_20] : memref<2x8x8xf32, #tpu.memory_space<vmem>>, vector<1x8x8xf32>
    %20 = vector.shape_cast %19 : vector<1x8x8xf32> to vector<8x8xf32>
    %c0_21 = arith.constant 0 : index
    %c0_22 = arith.constant 0 : index
    %c0_23 = arith.constant 0 : index
    %21 = vector.load %arg4[%c0_21, %c0_22, %c0_23] : memref<2x8x8xf32, #tpu.memory_space<vmem>>, vector<1x8x8xf32>
    %22 = vector.shape_cast %21 : vector<1x8x8xf32> to vector<8x8xf32>
    %23 = vector.extract_strided_slice %16 {offsets = [0, 0], sizes = [8, 8], strides = [1, 1]} : vector<8x32xf32> to vector<8x8xf32>
    %24 = vector.extract_strided_slice %17 {offsets = [0, 0], sizes = [8, 8], strides = [1, 1]} : vector<8x32xf32> to vector<8x8xf32>
    %25 = vector.extract_strided_slice %18 {offsets = [0, 0], sizes = [8, 8], strides = [1, 1]} : vector<8x32xf32> to vector<8x8xf32>
    %cst_24 = arith.constant dense<0.000000e+00> : vector<8x8xf32>
    %26 = tpu.matmul %23, %24, %cst_24 {dimension_numbers = #tpu.dot_dimension_numbers<[1], [1], [0], [0], [0, 0, 1, 0], [], []>} : vector<8x8xf32>, vector<8x8xf32>, vector<8x8xf32> -> vector<8x8xf32>
    %27 = arith.mulf %26, %20 : vector<8x8xf32>
    %28 = arith.addf %27, %22 : vector<8x8xf32>
    %cst_25 = arith.constant dense<0xFF800000> : vector<8xf32>
    %29 = vector.multi_reduction <maximumf>, %28, %cst_25 [1] : vector<8x8xf32> to vector<8xf32>
    %30 = vector.shape_cast %29 : vector<8xf32> to vector<8x1xf32>
    %31 = vector.broadcast %30 : vector<8x1xf32> to vector<8x8xf32>
    %32 = arith.subf %28, %31 : vector<8x8xf32>
    %33 = math.exp %32 : vector<8x8xf32>
    %cst_26 = arith.constant dense<0.000000e+00> : vector<8xf32>
    %34 = vector.multi_reduction <add>, %33, %cst_26 [1] : vector<8x8xf32> to vector<8xf32>
    %35 = vector.shape_cast %34 : vector<8xf32> to vector<8x1xf32>
    %36 = tpu.reciprocal %35 {approx = true} : vector<8x1xf32> -> vector<8x1xf32>
    %37 = vector.broadcast %36 : vector<8x1xf32> to vector<8x8xf32>
    %38 = arith.mulf %33, %37 : vector<8x8xf32>
    %c0_27 = arith.constant 0 : index
    %c0_28 = arith.constant 0 : index
    %c0_29 = arith.constant 0 : index
    %c0_30 = arith.constant 0 : index
    %c0_31 = arith.constant 0 : index
    %39 = vector.load %arg24[%c0_27, %c0_28, %c0_29, %c0_30, %c0_31] : memref<1x2x4x8x8xf32, #tpu.memory_space<vmem>>, vector<1x1x1x8x8xf32>
    %40 = vector.shape_cast %39 : vector<1x1x1x8x8xf32> to vector<8x8xf32>
    %41 = vector.shape_cast %38 : vector<8x8xf32> to vector<1x1x1x8x8xf32>
    tpu.vector_store %arg24[%c0_27, %c0_28, %c0_29, %c0_30, %c0_31], %41 {strides = array<i32>} : memref<1x2x4x8x8xf32, #tpu.memory_space<vmem>>, vector<1x1x1x8x8xf32>,
    %cst_32 = arith.constant dense<0.000000e+00> : vector<8x8xf32>
    %42 = tpu.matmul %38, %25, %cst_32 {dimension_numbers = #tpu.dot_dimension_numbers<[1], [0], [0], [1], [0, 0, 1, 1], [], []>} : vector<8x8xf32>, vector<8x8xf32>, vector<8x8xf32> -> vector<8x8xf32>
    %c0_33 = arith.constant 0 : index
    %c0_34 = arith.constant 0 : index
    %43 = vector.load %arg26[%c0_33, %c0_34] : memref<16x32xf32, #tpu.memory_space<vmem>>, vector<8x8xf32>
    tpu.vector_store %arg26[%c0_33, %c0_34], %42 {strides = array<i32>} : memref<16x32xf32, #tpu.memory_space<vmem>>, vector<8x8xf32>,
    %44 = vector.extract_strided_slice %16 {offsets = [0, 8], sizes = [8, 8], strides = [1, 1]} : vector<8x32xf32> to vector<8x8xf32>
    %45 = vector.extract_strided_slice %17 {offsets = [0, 8], sizes = [8, 8], strides = [1, 1]} : vector<8x32xf32> to vector<8x8xf32>
    %46 = vector.extract_strided_slice %18 {offsets = [0, 8], sizes = [8, 8], strides = [1, 1]} : vector<8x32xf32> to vector<8x8xf32>
    %cst_35 = arith.constant dense<0.000000e+00> : vector<8x8xf32>
    %47 = tpu.matmul %44, %45, %cst_35 {dimension_numbers = #tpu.dot_dimension_numbers<[1], [1], [0], [0], [0, 0, 1, 0], [], []>} : vector<8x8xf32>, vector<8x8xf32>, vector<8x8xf32> -> vector<8x8xf32>
    %48 = arith.mulf %47, %20 : vector<8x8xf32>
    %49 = arith.addf %48, %22 : vector<8x8xf32>
    %cst_36 = arith.constant dense<0xFF800000> : vector<8xf32>
    %50 = vector.multi_reduction <maximumf>, %49, %cst_36 [1] : vector<8x8xf32> to vector<8xf32>
    %51 = vector.shape_cast %50 : vector<8xf32> to vector<8x1xf32>
    %52 = vector.broadcast %51 : vector<8x1xf32> to vector<8x8xf32>
    %53 = arith.subf %49, %52 : vector<8x8xf32>
    %54 = math.exp %53 : vector<8x8xf32>
    %cst_37 = arith.constant dense<0.000000e+00> : vector<8xf32>
    %55 = vector.multi_reduction <add>, %54, %cst_37 [1] : vector<8x8xf32> to vector<8xf32>
    %56 = vector.shape_cast %55 : vector<8xf32> to vector<8x1xf32>
    %57 = tpu.reciprocal %56 {approx = true} : vector<8x1xf32> -> vector<8x1xf32>
    %58 = vector.broadcast %57 : vector<8x1xf32> to vector<8x8xf32>
    %59 = arith.mulf %54, %58 : vector<8x8xf32>
    %c0_38 = arith.constant 0 : index
    %c0_39 = arith.constant 0 : index
    %c1 = arith.constant 1 : index
    %c0_40 = arith.constant 0 : index
    %c0_41 = arith.constant 0 : index
    %60 = vector.load %arg24[%c0_38, %c0_39, %c1, %c0_40, %c0_41] : memref<1x2x4x8x8xf32, #tpu.memory_space<vmem>>, vector<1x1x1x8x8xf32>
    %61 = vector.shape_cast %60 : vector<1x1x1x8x8xf32> to vector<8x8xf32>
    %62 = vector.shape_cast %59 : vector<8x8xf32> to vector<1x1x1x8x8xf32>
    tpu.vector_store %arg24[%c0_38, %c0_39, %c1, %c0_40, %c0_41], %62 {strides = array<i32>} : memref<1x2x4x8x8xf32, #tpu.memory_space<vmem>>, vector<1x1x1x8x8xf32>,
    %cst_42 = arith.constant dense<0.000000e+00> : vector<8x8xf32>
    %63 = tpu.matmul %59, %46, %cst_42 {dimension_numbers = #tpu.dot_dimension_numbers<[1], [0], [0], [1], [0, 0, 1, 1], [], []>} : vector<8x8xf32>, vector<8x8xf32>, vector<8x8xf32> -> vector<8x8xf32>
    %c0_43 = arith.constant 0 : index
    %c8 = arith.constant 8 : index
    %64 = vector.load %arg26[%c0_43, %c8] : memref<16x32xf32, #tpu.memory_space<vmem>>, vector<8x8xf32>
    tpu.vector_store %arg26[%c0_43, %c8], %63 {strides = array<i32>} : memref<16x32xf32, #tpu.memory_space<vmem>>, vector<8x8xf32>,
    %65 = vector.extract_strided_slice %16 {offsets = [0, 16], sizes = [8, 8], strides = [1, 1]} : vector<8x32xf32> to vector<8x8xf32>
    %66 = vector.extract_strided_slice %17 {offsets = [0, 16], sizes = [8, 8], strides = [1, 1]} : vector<8x32xf32> to vector<8x8xf32>
    %67 = vector.extract_strided_slice %18 {offsets = [0, 16], sizes = [8, 8], strides = [1, 1]} : vector<8x32xf32> to vector<8x8xf32>
    %cst_44 = arith.constant dense<0.000000e+00> : vector<8x8xf32>
    %68 = tpu.matmul %65, %66, %cst_44 {dimension_numbers = #tpu.dot_dimension_numbers<[1], [1], [0], [0], [0, 0, 1, 0], [], []>} : vector<8x8xf32>, vector<8x8xf32>, vector<8x8xf32> -> vector<8x8xf32>
    %69 = arith.mulf %68, %20 : vector<8x8xf32>
    %70 = arith.addf %69, %22 : vector<8x8xf32>
    %cst_45 = arith.constant dense<0xFF800000> : vector<8xf32>
    %71 = vector.multi_reduction <maximumf>, %70, %cst_45 [1] : vector<8x8xf32> to vector<8xf32>
    %72 = vector.shape_cast %71 : vector<8xf32> to vector<8x1xf32>
    %73 = vector.broadcast %72 : vector<8x1xf32> to vector<8x8xf32>
    %74 = arith.subf %70, %73 : vector<8x8xf32>
    %75 = math.exp %74 : vector<8x8xf32>
    %cst_46 = arith.constant dense<0.000000e+00> : vector<8xf32>
    %76 = vector.multi_reduction <add>, %75, %cst_46 [1] : vector<8x8xf32> to vector<8xf32>
    %77 = vector.shape_cast %76 : vector<8xf32> to vector<8x1xf32>
    %78 = tpu.reciprocal %77 {approx = true} : vector<8x1xf32> -> vector<8x1xf32>
    %79 = vector.broadcast %78 : vector<8x1xf32> to vector<8x8xf32>
    %80 = arith.mulf %75, %79 : vector<8x8xf32>
    %c0_47 = arith.constant 0 : index
    %c0_48 = arith.constant 0 : index
    %c2 = arith.constant 2 : index
    %c0_49 = arith.constant 0 : index
    %c0_50 = arith.constant 0 : index
    %81 = vector.load %arg24[%c0_47, %c0_48, %c2, %c0_49, %c0_50] : memref<1x2x4x8x8xf32, #tpu.memory_space<vmem>>, vector<1x1x1x8x8xf32>
    %82 = vector.shape_cast %81 : vector<1x1x1x8x8xf32> to vector<8x8xf32>
    %83 = vector.shape_cast %80 : vector<8x8xf32> to vector<1x1x1x8x8xf32>
    tpu.vector_store %arg24[%c0_47, %c0_48, %c2, %c0_49, %c0_50], %83 {strides = array<i32>} : memref<1x2x4x8x8xf32, #tpu.memory_space<vmem>>, vector<1x1x1x8x8xf32>,
    %cst_51 = arith.constant dense<0.000000e+00> : vector<8x8xf32>
    %84 = tpu.matmul %80, %67, %cst_51 {dimension_numbers = #tpu.dot_dimension_numbers<[1], [0], [0], [1], [0, 0, 1, 1], [], []>} : vector<8x8xf32>, vector<8x8xf32>, vector<8x8xf32> -> vector<8x8xf32>
    %c0_52 = arith.constant 0 : index
    %c16 = arith.constant 16 : index
    %85 = vector.load %arg26[%c0_52, %c16] : memref<16x32xf32, #tpu.memory_space<vmem>>, vector<8x8xf32>
    tpu.vector_store %arg26[%c0_52, %c16], %84 {strides = array<i32>} : memref<16x32xf32, #tpu.memory_space<vmem>>, vector<8x8xf32>,
    %86 = vector.extract_strided_slice %16 {offsets = [0, 24], sizes = [8, 8], strides = [1, 1]} : vector<8x32xf32> to vector<8x8xf32>
    %87 = vector.extract_strided_slice %17 {offsets = [0, 24], sizes = [8, 8], strides = [1, 1]} : vector<8x32xf32> to vector<8x8xf32>
    %88 = vector.extract_strided_slice %18 {offsets = [0, 24], sizes = [8, 8], strides = [1, 1]} : vector<8x32xf32> to vector<8x8xf32>
    %cst_53 = arith.constant dense<0.000000e+00> : vector<8x8xf32>
    %89 = tpu.matmul %86, %87, %cst_53 {dimension_numbers = #tpu.dot_dimension_numbers<[1], [1], [0], [0], [0, 0, 1, 0], [], []>} : vector<8x8xf32>, vector<8x8xf32>, vector<8x8xf32> -> vector<8x8xf32>
    %90 = arith.mulf %89, %20 : vector<8x8xf32>
    %91 = arith.addf %90, %22 : vector<8x8xf32>
    %cst_54 = arith.constant dense<0xFF800000> : vector<8xf32>
    %92 = vector.multi_reduction <maximumf>, %91, %cst_54 [1] : vector<8x8xf32> to vector<8xf32>
    %93 = vector.shape_cast %92 : vector<8xf32> to vector<8x1xf32>
    %94 = vector.broadcast %93 : vector<8x1xf32> to vector<8x8xf32>
    %95 = arith.subf %91, %94 : vector<8x8xf32>
    %96 = math.exp %95 : vector<8x8xf32>
    %cst_55 = arith.constant dense<0.000000e+00> : vector<8xf32>
    %97 = vector.multi_reduction <add>, %96, %cst_55 [1] : vector<8x8xf32> to vector<8xf32>
    %98 = vector.shape_cast %97 : vector<8xf32> to vector<8x1xf32>
    %99 = tpu.reciprocal %98 {approx = true} : vector<8x1xf32> -> vector<8x1xf32>
    %100 = vector.broadcast %99 : vector<8x1xf32> to vector<8x8xf32>
    %101 = arith.mulf %96, %100 : vector<8x8xf32>
    %c0_56 = arith.constant 0 : index
    %c0_57 = arith.constant 0 : index
    %c3 = arith.constant 3 : index
    %c0_58 = arith.constant 0 : index
    %c0_59 = arith.constant 0 : index
    %102 = vector.load %arg24[%c0_56, %c0_57, %c3, %c0_58, %c0_59] : memref<1x2x4x8x8xf32, #tpu.memory_space<vmem>>, vector<1x1x1x8x8xf32>
    %103 = vector.shape_cast %102 : vector<1x1x1x8x8xf32> to vector<8x8xf32>
    %104 = vector.shape_cast %101 : vector<8x8xf32> to vector<1x1x1x8x8xf32>
    tpu.vector_store %arg24[%c0_56, %c0_57, %c3, %c0_58, %c0_59], %104 {strides = array<i32>} : memref<1x2x4x8x8xf32, #tpu.memory_space<vmem>>, vector<1x1x1x8x8xf32>,
    %cst_60 = arith.constant dense<0.000000e+00> : vector<8x8xf32>
    %105 = tpu.matmul %101, %88, %cst_60 {dimension_numbers = #tpu.dot_dimension_numbers<[1], [0], [0], [1], [0, 0, 1, 1], [], []>} : vector<8x8xf32>, vector<8x8xf32>, vector<8x8xf32> -> vector<8x8xf32>
    %c0_61 = arith.constant 0 : index
    %c24 = arith.constant 24 : index
    %106 = vector.load %arg26[%c0_61, %c24] : memref<16x32xf32, #tpu.memory_space<vmem>>, vector<8x8xf32>
    tpu.vector_store %arg26[%c0_61, %c24], %105 {strides = array<i32>} : memref<16x32xf32, #tpu.memory_space<vmem>>, vector<8x8xf32>,
    %107 = vector.extract_strided_slice %13 {offsets = [8, 0], sizes = [8, 32], strides = [1, 1]} : vector<16x32xf32> to vector<8x32xf32>
    %108 = vector.extract_strided_slice %14 {offsets = [8, 0], sizes = [8, 32], strides = [1, 1]} : vector<16x32xf32> to vector<8x32xf32>
    %109 = vector.extract_strided_slice %15 {offsets = [8, 0], sizes = [8, 32], strides = [1, 1]} : vector<16x32xf32> to vector<8x32xf32>
    %c1_62 = arith.constant 1 : index
    %c0_63 = arith.constant 0 : index
    %c0_64 = arith.constant 0 : index
    %110 = vector.load %arg3[%c1_62, %c0_63, %c0_64] : memref<2x8x8xf32, #tpu.memory_space<vmem>>, vector<1x8x8xf32>
    %111 = vector.shape_cast %110 : vector<1x8x8xf32> to vector<8x8xf32>
    %c1_65 = arith.constant 1 : index
    %c0_66 = arith.constant 0 : index
    %c0_67 = arith.constant 0 : index
    %112 = vector.load %arg4[%c1_65, %c0_66, %c0_67] : memref<2x8x8xf32, #tpu.memory_space<vmem>>, vector<1x8x8xf32>
    %113 = vector.shape_cast %112 : vector<1x8x8xf32> to vector<8x8xf32>
    %114 = vector.extract_strided_slice %107 {offsets = [0, 0], sizes = [8, 8], strides = [1, 1]} : vector<8x32xf32> to vector<8x8xf32>
    %115 = vector.extract_strided_slice %108 {offsets = [0, 0], sizes = [8, 8], strides = [1, 1]} : vector<8x32xf32> to vector<8x8xf32>
    %116 = vector.extract_strided_slice %109 {offsets = [0, 0], sizes = [8, 8], strides = [1, 1]} : vector<8x32xf32> to vector<8x8xf32>
    %cst_68 = arith.constant dense<0.000000e+00> : vector<8x8xf32>
    %117 = tpu.matmul %114, %115, %cst_68 {dimension_numbers = #tpu.dot_dimension_numbers<[1], [1], [0], [0], [0, 0, 1, 0], [], []>} : vector<8x8xf32>, vector<8x8xf32>, vector<8x8xf32> -> vector<8x8xf32>
    %118 = arith.mulf %117, %111 : vector<8x8xf32>
    %119 = arith.addf %118, %113 : vector<8x8xf32>
    %cst_69 = arith.constant dense<0xFF800000> : vector<8xf32>
    %120 = vector.multi_reduction <maximumf>, %119, %cst_69 [1] : vector<8x8xf32> to vector<8xf32>
    %121 = vector.shape_cast %120 : vector<8xf32> to vector<8x1xf32>
    %122 = vector.broadcast %121 : vector<8x1xf32> to vector<8x8xf32>
    %123 = arith.subf %119, %122 : vector<8x8xf32>
    %124 = math.exp %123 : vector<8x8xf32>
    %cst_70 = arith.constant dense<0.000000e+00> : vector<8xf32>
    %125 = vector.multi_reduction <add>, %124, %cst_70 [1] : vector<8x8xf32> to vector<8xf32>
    %126 = vector.shape_cast %125 : vector<8xf32> to vector<8x1xf32>
    %127 = tpu.reciprocal %126 {approx = true} : vector<8x1xf32> -> vector<8x1xf32>
    %128 = vector.broadcast %127 : vector<8x1xf32> to vector<8x8xf32>
    %129 = arith.mulf %124, %128 : vector<8x8xf32>
    %c0_71 = arith.constant 0 : index
    %c1_72 = arith.constant 1 : index
    %c0_73 = arith.constant 0 : index
    %c0_74 = arith.constant 0 : index
    %c0_75 = arith.constant 0 : index
    %130 = vector.load %arg24[%c0_71, %c1_72, %c0_73, %c0_74, %c0_75] : memref<1x2x4x8x8xf32, #tpu.memory_space<vmem>>, vector<1x1x1x8x8xf32>
    %131 = vector.shape_cast %130 : vector<1x1x1x8x8xf32> to vector<8x8xf32>
    %132 = vector.shape_cast %129 : vector<8x8xf32> to vector<1x1x1x8x8xf32>
    tpu.vector_store %arg24[%c0_71, %c1_72, %c0_73, %c0_74, %c0_75], %132 {strides = array<i32>} : memref<1x2x4x8x8xf32, #tpu.memory_space<vmem>>, vector<1x1x1x8x8xf32>,
    %cst_76 = arith.constant dense<0.000000e+00> : vector<8x8xf32>
    %133 = tpu.matmul %129, %116, %cst_76 {dimension_numbers = #tpu.dot_dimension_numbers<[1], [0], [0], [1], [0, 0, 1, 1], [], []>} : vector<8x8xf32>, vector<8x8xf32>, vector<8x8xf32> -> vector<8x8xf32>
    %c8_77 = arith.constant 8 : index
    %c0_78 = arith.constant 0 : index
    %134 = vector.load %arg26[%c8_77, %c0_78] : memref<16x32xf32, #tpu.memory_space<vmem>>, vector<8x8xf32>
    tpu.vector_store %arg26[%c8_77, %c0_78], %133 {strides = array<i32>} : memref<16x32xf32, #tpu.memory_space<vmem>>, vector<8x8xf32>,
    %135 = vector.extract_strided_slice %107 {offsets = [0, 8], sizes = [8, 8], strides = [1, 1]} : vector<8x32xf32> to vector<8x8xf32>
    %136 = vector.extract_strided_slice %108 {offsets = [0, 8], sizes = [8, 8], strides = [1, 1]} : vector<8x32xf32> to vector<8x8xf32>
    %137 = vector.extract_strided_slice %109 {offsets = [0, 8], sizes = [8, 8], strides = [1, 1]} : vector<8x32xf32> to vector<8x8xf32>
    %cst_79 = arith.constant dense<0.000000e+00> : vector<8x8xf32>
    %138 = tpu.matmul %135, %136, %cst_79 {dimension_numbers = #tpu.dot_dimension_numbers<[1], [1], [0], [0], [0, 0, 1, 0], [], []>} : vector<8x8xf32>, vector<8x8xf32>, vector<8x8xf32> -> vector<8x8xf32>
    %139 = arith.mulf %138, %111 : vector<8x8xf32>
    %140 = arith.addf %139, %113 : vector<8x8xf32>
    %cst_80 = arith.constant dense<0xFF800000> : vector<8xf32>
    %141 = vector.multi_reduction <maximumf>, %140, %cst_80 [1] : vector<8x8xf32> to vector<8xf32>
    %142 = vector.shape_cast %141 : vector<8xf32> to vector<8x1xf32>
    %143 = vector.broadcast %142 : vector<8x1xf32> to vector<8x8xf32>
    %144 = arith.subf %140, %143 : vector<8x8xf32>
    %145 = math.exp %144 : vector<8x8xf32>
    %cst_81 = arith.constant dense<0.000000e+00> : vector<8xf32>
    %146 = vector.multi_reduction <add>, %145, %cst_81 [1] : vector<8x8xf32> to vector<8xf32>
    %147 = vector.shape_cast %146 : vector<8xf32> to vector<8x1xf32>
    %148 = tpu.reciprocal %147 {approx = true} : vector<8x1xf32> -> vector<8x1xf32>
    %149 = vector.broadcast %148 : vector<8x1xf32> to vector<8x8xf32>
    %150 = arith.mulf %145, %149 : vector<8x8xf32>
    %c0_82 = arith.constant 0 : index
    %c1_83 = arith.constant 1 : index
    %c1_84 = arith.constant 1 : index
    %c0_85 = arith.constant 0 : index
    %c0_86 = arith.constant 0 : index
    %151 = vector.load %arg24[%c0_82, %c1_83, %c1_84, %c0_85, %c0_86] : memref<1x2x4x8x8xf32, #tpu.memory_space<vmem>>, vector<1x1x1x8x8xf32>
    %152 = vector.shape_cast %151 : vector<1x1x1x8x8xf32> to vector<8x8xf32>
    %153 = vector.shape_cast %150 : vector<8x8xf32> to vector<1x1x1x8x8xf32>
    tpu.vector_store %arg24[%c0_82, %c1_83, %c1_84, %c0_85, %c0_86], %153 {strides = array<i32>} : memref<1x2x4x8x8xf32, #tpu.memory_space<vmem>>, vector<1x1x1x8x8xf32>,
    %cst_87 = arith.constant dense<0.000000e+00> : vector<8x8xf32>
    %154 = tpu.matmul %150, %137, %cst_87 {dimension_numbers = #tpu.dot_dimension_numbers<[1], [0], [0], [1], [0, 0, 1, 1], [], []>} : vector<8x8xf32>, vector<8x8xf32>, vector<8x8xf32> -> vector<8x8xf32>
    %c8_88 = arith.constant 8 : index
    %c8_89 = arith.constant 8 : index
    %155 = vector.load %arg26[%c8_88, %c8_89] : memref<16x32xf32, #tpu.memory_space<vmem>>, vector<8x8xf32>
    tpu.vector_store %arg26[%c8_88, %c8_89], %154 {strides = array<i32>} : memref<16x32xf32, #tpu.memory_space<vmem>>, vector<8x8xf32>,
    %156 = vector.extract_strided_slice %107 {offsets = [0, 16], sizes = [8, 8], strides = [1, 1]} : vector<8x32xf32> to vector<8x8xf32>
    %157 = vector.extract_strided_slice %108 {offsets = [0, 16], sizes = [8, 8], strides = [1, 1]} : vector<8x32xf32> to vector<8x8xf32>
    %158 = vector.extract_strided_slice %109 {offsets = [0, 16], sizes = [8, 8], strides = [1, 1]} : vector<8x32xf32> to vector<8x8xf32>
    %cst_90 = arith.constant dense<0.000000e+00> : vector<8x8xf32>
    %159 = tpu.matmul %156, %157, %cst_90 {dimension_numbers = #tpu.dot_dimension_numbers<[1], [1], [0], [0], [0, 0, 1, 0], [], []>} : vector<8x8xf32>, vector<8x8xf32>, vector<8x8xf32> -> vector<8x8xf32>
    %160 = arith.mulf %159, %111 : vector<8x8xf32>
    %161 = arith.addf %160, %113 : vector<8x8xf32>
    %cst_91 = arith.constant dense<0xFF800000> : vector<8xf32>
    %162 = vector.multi_reduction <maximumf>, %161, %cst_91 [1] : vector<8x8xf32> to vector<8xf32>
    %163 = vector.shape_cast %162 : vector<8xf32> to vector<8x1xf32>
    %164 = vector.broadcast %163 : vector<8x1xf32> to vector<8x8xf32>
    %165 = arith.subf %161, %164 : vector<8x8xf32>
    %166 = math.exp %165 : vector<8x8xf32>
    %cst_92 = arith.constant dense<0.000000e+00> : vector<8xf32>
    %167 = vector.multi_reduction <add>, %166, %cst_92 [1] : vector<8x8xf32> to vector<8xf32>
    %168 = vector.shape_cast %167 : vector<8xf32> to vector<8x1xf32>
    %169 = tpu.reciprocal %168 {approx = true} : vector<8x1xf32> -> vector<8x1xf32>
    %170 = vector.broadcast %169 : vector<8x1xf32> to vector<8x8xf32>
    %171 = arith.mulf %166, %170 : vector<8x8xf32>
    %c0_93 = arith.constant 0 : index
    %c1_94 = arith.constant 1 : index
    %c2_95 = arith.constant 2 : index
    %c0_96 = arith.constant 0 : index
    %c0_97 = arith.constant 0 : index
    %172 = vector.load %arg24[%c0_93, %c1_94, %c2_95, %c0_96, %c0_97] : memref<1x2x4x8x8xf32, #tpu.memory_space<vmem>>, vector<1x1x1x8x8xf32>
    %173 = vector.shape_cast %172 : vector<1x1x1x8x8xf32> to vector<8x8xf32>
    %174 = vector.shape_cast %171 : vector<8x8xf32> to vector<1x1x1x8x8xf32>
    tpu.vector_store %arg24[%c0_93, %c1_94, %c2_95, %c0_96, %c0_97], %174 {strides = array<i32>} : memref<1x2x4x8x8xf32, #tpu.memory_space<vmem>>, vector<1x1x1x8x8xf32>,
    %cst_98 = arith.constant dense<0.000000e+00> : vector<8x8xf32>
    %175 = tpu.matmul %171, %158, %cst_98 {dimension_numbers = #tpu.dot_dimension_numbers<[1], [0], [0], [1], [0, 0, 1, 1], [], []>} : vector<8x8xf32>, vector<8x8xf32>, vector<8x8xf32> -> vector<8x8xf32>
    %c8_99 = arith.constant 8 : index
    %c16_100 = arith.constant 16 : index
    %176 = vector.load %arg26[%c8_99, %c16_100] : memref<16x32xf32, #tpu.memory_space<vmem>>, vector<8x8xf32>
    tpu.vector_store %arg26[%c8_99, %c16_100], %175 {strides = array<i32>} : memref<16x32xf32, #tpu.memory_space<vmem>>, vector<8x8xf32>,
    %177 = vector.extract_strided_slice %107 {offsets = [0, 24], sizes = [8, 8], strides = [1, 1]} : vector<8x32xf32> to vector<8x8xf32>
    %178 = vector.extract_strided_slice %108 {offsets = [0, 24], sizes = [8, 8], strides = [1, 1]} : vector<8x32xf32> to vector<8x8xf32>
    %179 = vector.extract_strided_slice %109 {offsets = [0, 24], sizes = [8, 8], strides = [1, 1]} : vector<8x32xf32> to vector<8x8xf32>
    %cst_101 = arith.constant dense<0.000000e+00> : vector<8x8xf32>
    %180 = tpu.matmul %177, %178, %cst_101 {dimension_numbers = #tpu.dot_dimension_numbers<[1], [1], [0], [0], [0, 0, 1, 0], [], []>} : vector<8x8xf32>, vector<8x8xf32>, vector<8x8xf32> -> vector<8x8xf32>
    %181 = arith.mulf %180, %111 : vector<8x8xf32>
    %182 = arith.addf %181, %113 : vector<8x8xf32>
    %cst_102 = arith.constant dense<0xFF800000> : vector<8xf32>
    %183 = vector.multi_reduction <maximumf>, %182, %cst_102 [1] : vector<8x8xf32> to vector<8xf32>
    %184 = vector.shape_cast %183 : vector<8xf32> to vector<8x1xf32>
    %185 = vector.broadcast %184 : vector<8x1xf32> to vector<8x8xf32>
    %186 = arith.subf %182, %185 : vector<8x8xf32>
    %187 = math.exp %186 : vector<8x8xf32>
    %cst_103 = arith.constant dense<0.000000e+00> : vector<8xf32>
    %188 = vector.multi_reduction <add>, %187, %cst_103 [1] : vector<8x8xf32> to vector<8xf32>
    %189 = vector.shape_cast %188 : vector<8xf32> to vector<8x1xf32>
    %190 = tpu.reciprocal %189 {approx = true} : vector<8x1xf32> -> vector<8x1xf32>
    %191 = vector.broadcast %190 : vector<8x1xf32> to vector<8x8xf32>
    %192 = arith.mulf %187, %191 : vector<8x8xf32>
    %c0_104 = arith.constant 0 : index
    %c1_105 = arith.constant 1 : index
    %c3_106 = arith.constant 3 : index
    %c0_107 = arith.constant 0 : index
    %c0_108 = arith.constant 0 : index
    %193 = vector.load %arg24[%c0_104, %c1_105, %c3_106, %c0_107, %c0_108] : memref<1x2x4x8x8xf32, #tpu.memory_space<vmem>>, vector<1x1x1x8x8xf32>
    %194 = vector.shape_cast %193 : vector<1x1x1x8x8xf32> to vector<8x8xf32>
    %195 = vector.shape_cast %192 : vector<8x8xf32> to vector<1x1x1x8x8xf32>
    tpu.vector_store %arg24[%c0_104, %c1_105, %c3_106, %c0_107, %c0_108], %195 {strides = array<i32>} : memref<1x2x4x8x8xf32, #tpu.memory_space<vmem>>, vector<1x1x1x8x8xf32>,
    %cst_109 = arith.constant dense<0.000000e+00> : vector<8x8xf32>
    %196 = tpu.matmul %192, %179, %cst_109 {dimension_numbers = #tpu.dot_dimension_numbers<[1], [0], [0], [1], [0, 0, 1, 1], [], []>} : vector<8x8xf32>, vector<8x8xf32>, vector<8x8xf32> -> vector<8x8xf32>
    %c8_110 = arith.constant 8 : index
    %c24_111 = arith.constant 24 : index
    %197 = vector.load %arg26[%c8_110, %c24_111] : memref<16x32xf32, #tpu.memory_space<vmem>>, vector<8x8xf32>
    tpu.vector_store %arg26[%c8_110, %c24_111], %196 {strides = array<i32>} : memref<16x32xf32, #tpu.memory_space<vmem>>, vector<8x8xf32>,
    %c0_112 = arith.constant 0 : index
    %c0_113 = arith.constant 0 : index
    %198 = vector.load %arg26[%c0_112, %c0_113] : memref<16x32xf32, #tpu.memory_space<vmem>>, vector<16x32xf32>
    %cst_114 = arith.constant dense<0.000000e+00> : vector<16x32xf32>
    %199 = tpu.matmul %198, %12, %cst_114 {dimension_numbers = #tpu.dot_dimension_numbers<[1], [0], [0], [1], [0, 0, 1, 1], [], []>} : vector<16x32xf32>, vector<32x32xf32>, vector<16x32xf32> -> vector<16x32xf32>
    %200 = arith.addf %199, %3 : vector<16x32xf32>
    %c0_115 = arith.constant 0 : index
    %c0_116 = arith.constant 0 : index
    %c0_117 = arith.constant 0 : index
    %201 = vector.load %arg11[%c0_115, %c0_116, %c0_117] : memref<1x1x32xf32, #tpu.memory_space<vmem>>, vector<1x1x32xf32>
    %202 = vector.shape_cast %201 : vector<1x1x32xf32> to vector<1x32xf32>
    %c0_118 = arith.constant 0 : index
    %c0_119 = arith.constant 0 : index
    %c0_120 = arith.constant 0 : index
    %203 = vector.load %arg12[%c0_118, %c0_119, %c0_120] : memref<1x1x32xf32, #tpu.memory_space<vmem>>, vector<1x1x32xf32>
    %204 = vector.shape_cast %203 : vector<1x1x32xf32> to vector<1x32xf32>
    %cst_121 = arith.constant dense<0.000000e+00> : vector<16xf32>
    %205 = vector.multi_reduction <add>, %200, %cst_121 [1] : vector<16x32xf32> to vector<16xf32>
    %206 = vector.shape_cast %205 : vector<16xf32> to vector<16x1xf32>
    %cst_122 = arith.constant 3.125000e-02 : f32
    %207 = vector.broadcast %cst_122 : f32 to vector<16x1xf32>
    %208 = arith.mulf %206, %207 : vector<16x1xf32>
    %209 = arith.mulf %200, %200 : vector<16x32xf32>
    %cst_123 = arith.constant dense<0.000000e+00> : vector<16xf32>
    %210 = vector.multi_reduction <add>, %209, %cst_123 [1] : vector<16x32xf32> to vector<16xf32>
    %211 = vector.shape_cast %210 : vector<16xf32> to vector<16x1xf32>
    %cst_124 = arith.constant 3.125000e-02 : f32
    %212 = vector.broadcast %cst_124 : f32 to vector<16x1xf32>
    %213 = arith.mulf %211, %212 : vector<16x1xf32>
    %214 = arith.mulf %208, %208 : vector<16x1xf32>
    %215 = arith.subf %213, %214 : vector<16x1xf32>
    %216 = vector.broadcast %208 : vector<16x1xf32> to vector<16x32xf32>
    %217 = arith.subf %200, %216 : vector<16x32xf32>
    %cst_125 = arith.constant 9.99999974E-6 : f32
    %218 = vector.broadcast %cst_125 : f32 to vector<16x1xf32>
    %219 = arith.addf %215, %218 : vector<16x1xf32>
    %220 = math.rsqrt %219 : vector<16x1xf32>
    %221 = vector.broadcast %220 : vector<16x1xf32> to vector<16x32xf32>
    %222 = arith.mulf %217, %221 : vector<16x32xf32>
    %223 = vector.broadcast %202 : vector<1x32xf32> to vector<16x32xf32>
    %224 = arith.mulf %222, %223 : vector<16x32xf32>
    %225 = vector.broadcast %204 : vector<1x32xf32> to vector<16x32xf32>
    %226 = arith.addf %224, %225 : vector<16x32xf32>
    %c0_126 = arith.constant 0 : index
    %c0_127 = arith.constant 0 : index
    %c0_128 = arith.constant 0 : index
    %227 = vector.load %arg13[%c0_126, %c0_127, %c0_128] : memref<1x32x32xf32, #tpu.memory_space<vmem>>, vector<1x32x32xf32>
    %228 = vector.shape_cast %227 : vector<1x32x32xf32> to vector<32x32xf32>
    %c0_129 = arith.constant 0 : index
    %c0_130 = arith.constant 0 : index
    %c0_131 = arith.constant 0 : index
    %229 = vector.load %arg14[%c0_129, %c0_130, %c0_131] : memref<1x32x32xf32, #tpu.memory_space<vmem>>, vector<1x32x32xf32>
    %230 = vector.shape_cast %229 : vector<1x32x32xf32> to vector<32x32xf32>
    %c0_132 = arith.constant 0 : index
    %c0_133 = arith.constant 0 : index
    %c0_134 = arith.constant 0 : index
    %231 = vector.load %arg15[%c0_132, %c0_133, %c0_134] : memref<1x32x32xf32, #tpu.memory_space<vmem>>, vector<1x32x32xf32>
    %232 = vector.shape_cast %231 : vector<1x32x32xf32> to vector<32x32xf32>
    %c0_135 = arith.constant 0 : index
    %c0_136 = arith.constant 0 : index
    %c0_137 = arith.constant 0 : index
    %233 = vector.load %arg16[%c0_135, %c0_136, %c0_137] : memref<1x32x32xf32, #tpu.memory_space<vmem>>, vector<1x32x32xf32>
    %234 = vector.shape_cast %233 : vector<1x32x32xf32> to vector<32x32xf32>
    %cst_138 = arith.constant dense<0.000000e+00> : vector<16x32xf32>
    %235 = tpu.matmul %226, %228, %cst_138 {dimension_numbers = #tpu.dot_dimension_numbers<[1], [0], [0], [1], [0, 0, 1, 1], [], []>} : vector<16x32xf32>, vector<32x32xf32>, vector<16x32xf32> -> vector<16x32xf32>
    %cst_139 = arith.constant dense<0.000000e+00> : vector<16x32xf32>
    %236 = tpu.matmul %4, %230, %cst_139 {dimension_numbers = #tpu.dot_dimension_numbers<[1], [0], [0], [1], [0, 0, 1, 1], [], []>} : vector<16x32xf32>, vector<32x32xf32>, vector<16x32xf32> -> vector<16x32xf32>
    %cst_140 = arith.constant dense<0.000000e+00> : vector<16x32xf32>
    %237 = tpu.matmul %4, %232, %cst_140 {dimension_numbers = #tpu.dot_dimension_numbers<[1], [0], [0], [1], [0, 0, 1, 1], [], []>} : vector<16x32xf32>, vector<32x32xf32>, vector<16x32xf32> -> vector<16x32xf32>
    %238 = vector.extract_strided_slice %235 {offsets = [0, 0], sizes = [8, 32], strides = [1, 1]} : vector<16x32xf32> to vector<8x32xf32>
    %239 = vector.extract_strided_slice %236 {offsets = [0, 0], sizes = [8, 32], strides = [1, 1]} : vector<16x32xf32> to vector<8x32xf32>
    %240 = vector.extract_strided_slice %237 {offsets = [0, 0], sizes = [8, 32], strides = [1, 1]} : vector<16x32xf32> to vector<8x32xf32>
    %c0_141 = arith.constant 0 : index
    %c0_142 = arith.constant 0 : index
    %c0_143 = arith.constant 0 : index
    %241 = vector.load %arg5[%c0_141, %c0_142, %c0_143] : memref<2x8x8xf32, #tpu.memory_space<vmem>>, vector<1x8x8xf32>
    %242 = vector.shape_cast %241 : vector<1x8x8xf32> to vector<8x8xf32>
    %c0_144 = arith.constant 0 : index
    %c0_145 = arith.constant 0 : index
    %c0_146 = arith.constant 0 : index
    %243 = vector.load %arg6[%c0_144, %c0_145, %c0_146] : memref<2x8x8xf32, #tpu.memory_space<vmem>>, vector<1x8x8xf32>
    %244 = vector.shape_cast %243 : vector<1x8x8xf32> to vector<8x8xf32>
    %245 = vector.extract_strided_slice %238 {offsets = [0, 0], sizes = [8, 8], strides = [1, 1]} : vector<8x32xf32> to vector<8x8xf32>
    %246 = vector.extract_strided_slice %239 {offsets = [0, 0], sizes = [8, 8], strides = [1, 1]} : vector<8x32xf32> to vector<8x8xf32>
    %247 = vector.extract_strided_slice %240 {offsets = [0, 0], sizes = [8, 8], strides = [1, 1]} : vector<8x32xf32> to vector<8x8xf32>
    %cst_147 = arith.constant dense<0.000000e+00> : vector<8x8xf32>
    %248 = tpu.matmul %245, %246, %cst_147 {dimension_numbers = #tpu.dot_dimension_numbers<[1], [1], [0], [0], [0, 0, 1, 0], [], []>} : vector<8x8xf32>, vector<8x8xf32>, vector<8x8xf32> -> vector<8x8xf32>
    %249 = arith.mulf %248, %242 : vector<8x8xf32>
    %250 = arith.addf %249, %244 : vector<8x8xf32>
    %cst_148 = arith.constant dense<0xFF800000> : vector<8xf32>
    %251 = vector.multi_reduction <maximumf>, %250, %cst_148 [1] : vector<8x8xf32> to vector<8xf32>
    %252 = vector.shape_cast %251 : vector<8xf32> to vector<8x1xf32>
    %253 = vector.broadcast %252 : vector<8x1xf32> to vector<8x8xf32>
    %254 = arith.subf %250, %253 : vector<8x8xf32>
    %255 = math.exp %254 : vector<8x8xf32>
    %cst_149 = arith.constant dense<0.000000e+00> : vector<8xf32>
    %256 = vector.multi_reduction <add>, %255, %cst_149 [1] : vector<8x8xf32> to vector<8xf32>
    %257 = vector.shape_cast %256 : vector<8xf32> to vector<8x1xf32>
    %258 = tpu.reciprocal %257 {approx = true} : vector<8x1xf32> -> vector<8x1xf32>
    %259 = vector.broadcast %258 : vector<8x1xf32> to vector<8x8xf32>
    %260 = arith.mulf %255, %259 : vector<8x8xf32>
    %c0_150 = arith.constant 0 : index
    %c0_151 = arith.constant 0 : index
    %c0_152 = arith.constant 0 : index
    %c0_153 = arith.constant 0 : index
    %c0_154 = arith.constant 0 : index
    %261 = vector.load %arg25[%c0_150, %c0_151, %c0_152, %c0_153, %c0_154] : memref<1x2x4x8x8xf32, #tpu.memory_space<vmem>>, vector<1x1x1x8x8xf32>
    %262 = vector.shape_cast %261 : vector<1x1x1x8x8xf32> to vector<8x8xf32>
    %263 = vector.shape_cast %260 : vector<8x8xf32> to vector<1x1x1x8x8xf32>
    tpu.vector_store %arg25[%c0_150, %c0_151, %c0_152, %c0_153, %c0_154], %263 {strides = array<i32>} : memref<1x2x4x8x8xf32, #tpu.memory_space<vmem>>, vector<1x1x1x8x8xf32>,
    %cst_155 = arith.constant dense<0.000000e+00> : vector<8x8xf32>
    %264 = tpu.matmul %260, %247, %cst_155 {dimension_numbers = #tpu.dot_dimension_numbers<[1], [0], [0], [1], [0, 0, 1, 1], [], []>} : vector<8x8xf32>, vector<8x8xf32>, vector<8x8xf32> -> vector<8x8xf32>
    %c0_156 = arith.constant 0 : index
    %c0_157 = arith.constant 0 : index
    %265 = vector.load %arg26[%c0_156, %c0_157] : memref<16x32xf32, #tpu.memory_space<vmem>>, vector<8x8xf32>
    tpu.vector_store %arg26[%c0_156, %c0_157], %264 {strides = array<i32>} : memref<16x32xf32, #tpu.memory_space<vmem>>, vector<8x8xf32>,
    %266 = vector.extract_strided_slice %238 {offsets = [0, 8], sizes = [8, 8], strides = [1, 1]} : vector<8x32xf32> to vector<8x8xf32>
    %267 = vector.extract_strided_slice %239 {offsets = [0, 8], sizes = [8, 8], strides = [1, 1]} : vector<8x32xf32> to vector<8x8xf32>
    %268 = vector.extract_strided_slice %240 {offsets = [0, 8], sizes = [8, 8], strides = [1, 1]} : vector<8x32xf32> to vector<8x8xf32>
    %cst_158 = arith.constant dense<0.000000e+00> : vector<8x8xf32>
    %269 = tpu.matmul %266, %267, %cst_158 {dimension_numbers = #tpu.dot_dimension_numbers<[1], [1], [0], [0], [0, 0, 1, 0], [], []>} : vector<8x8xf32>, vector<8x8xf32>, vector<8x8xf32> -> vector<8x8xf32>
    %270 = arith.mulf %269, %242 : vector<8x8xf32>
    %271 = arith.addf %270, %244 : vector<8x8xf32>
    %cst_159 = arith.constant dense<0xFF800000> : vector<8xf32>
    %272 = vector.multi_reduction <maximumf>, %271, %cst_159 [1] : vector<8x8xf32> to vector<8xf32>
    %273 = vector.shape_cast %272 : vector<8xf32> to vector<8x1xf32>
    %274 = vector.broadcast %273 : vector<8x1xf32> to vector<8x8xf32>
    %275 = arith.subf %271, %274 : vector<8x8xf32>
    %276 = math.exp %275 : vector<8x8xf32>
    %cst_160 = arith.constant dense<0.000000e+00> : vector<8xf32>
    %277 = vector.multi_reduction <add>, %276, %cst_160 [1] : vector<8x8xf32> to vector<8xf32>
    %278 = vector.shape_cast %277 : vector<8xf32> to vector<8x1xf32>
    %279 = tpu.reciprocal %278 {approx = true} : vector<8x1xf32> -> vector<8x1xf32>
    %280 = vector.broadcast %279 : vector<8x1xf32> to vector<8x8xf32>
    %281 = arith.mulf %276, %280 : vector<8x8xf32>
    %c0_161 = arith.constant 0 : index
    %c0_162 = arith.constant 0 : index
    %c1_163 = arith.constant 1 : index
    %c0_164 = arith.constant 0 : index
    %c0_165 = arith.constant 0 : index
    %282 = vector.load %arg25[%c0_161, %c0_162, %c1_163, %c0_164, %c0_165] : memref<1x2x4x8x8xf32, #tpu.memory_space<vmem>>, vector<1x1x1x8x8xf32>
    %283 = vector.shape_cast %282 : vector<1x1x1x8x8xf32> to vector<8x8xf32>
    %284 = vector.shape_cast %281 : vector<8x8xf32> to vector<1x1x1x8x8xf32>
    tpu.vector_store %arg25[%c0_161, %c0_162, %c1_163, %c0_164, %c0_165], %284 {strides = array<i32>} : memref<1x2x4x8x8xf32, #tpu.memory_space<vmem>>, vector<1x1x1x8x8xf32>,
    %cst_166 = arith.constant dense<0.000000e+00> : vector<8x8xf32>
    %285 = tpu.matmul %281, %268, %cst_166 {dimension_numbers = #tpu.dot_dimension_numbers<[1], [0], [0], [1], [0, 0, 1, 1], [], []>} : vector<8x8xf32>, vector<8x8xf32>, vector<8x8xf32> -> vector<8x8xf32>
    %c0_167 = arith.constant 0 : index
    %c8_168 = arith.constant 8 : index
    %286 = vector.load %arg26[%c0_167, %c8_168] : memref<16x32xf32, #tpu.memory_space<vmem>>, vector<8x8xf32>
    tpu.vector_store %arg26[%c0_167, %c8_168], %285 {strides = array<i32>} : memref<16x32xf32, #tpu.memory_space<vmem>>, vector<8x8xf32>,
    %287 = vector.extract_strided_slice %238 {offsets = [0, 16], sizes = [8, 8], strides = [1, 1]} : vector<8x32xf32> to vector<8x8xf32>
    %288 = vector.extract_strided_slice %239 {offsets = [0, 16], sizes = [8, 8], strides = [1, 1]} : vector<8x32xf32> to vector<8x8xf32>
    %289 = vector.extract_strided_slice %240 {offsets = [0, 16], sizes = [8, 8], strides = [1, 1]} : vector<8x32xf32> to vector<8x8xf32>
    %cst_169 = arith.constant dense<0.000000e+00> : vector<8x8xf32>
    %290 = tpu.matmul %287, %288, %cst_169 {dimension_numbers = #tpu.dot_dimension_numbers<[1], [1], [0], [0], [0, 0, 1, 0], [], []>} : vector<8x8xf32>, vector<8x8xf32>, vector<8x8xf32> -> vector<8x8xf32>
    %291 = arith.mulf %290, %242 : vector<8x8xf32>
    %292 = arith.addf %291, %244 : vector<8x8xf32>
    %cst_170 = arith.constant dense<0xFF800000> : vector<8xf32>
    %293 = vector.multi_reduction <maximumf>, %292, %cst_170 [1] : vector<8x8xf32> to vector<8xf32>
    %294 = vector.shape_cast %293 : vector<8xf32> to vector<8x1xf32>
    %295 = vector.broadcast %294 : vector<8x1xf32> to vector<8x8xf32>
    %296 = arith.subf %292, %295 : vector<8x8xf32>
    %297 = math.exp %296 : vector<8x8xf32>
    %cst_171 = arith.constant dense<0.000000e+00> : vector<8xf32>
    %298 = vector.multi_reduction <add>, %297, %cst_171 [1] : vector<8x8xf32> to vector<8xf32>
    %299 = vector.shape_cast %298 : vector<8xf32> to vector<8x1xf32>
    %300 = tpu.reciprocal %299 {approx = true} : vector<8x1xf32> -> vector<8x1xf32>
    %301 = vector.broadcast %300 : vector<8x1xf32> to vector<8x8xf32>
    %302 = arith.mulf %297, %301 : vector<8x8xf32>
    %c0_172 = arith.constant 0 : index
    %c0_173 = arith.constant 0 : index
    %c2_174 = arith.constant 2 : index
    %c0_175 = arith.constant 0 : index
    %c0_176 = arith.constant 0 : index
    %303 = vector.load %arg25[%c0_172, %c0_173, %c2_174, %c0_175, %c0_176] : memref<1x2x4x8x8xf32, #tpu.memory_space<vmem>>, vector<1x1x1x8x8xf32>
    %304 = vector.shape_cast %303 : vector<1x1x1x8x8xf32> to vector<8x8xf32>
    %305 = vector.shape_cast %302 : vector<8x8xf32> to vector<1x1x1x8x8xf32>
    tpu.vector_store %arg25[%c0_172, %c0_173, %c2_174, %c0_175, %c0_176], %305 {strides = array<i32>} : memref<1x2x4x8x8xf32, #tpu.memory_space<vmem>>, vector<1x1x1x8x8xf32>,
    %cst_177 = arith.constant dense<0.000000e+00> : vector<8x8xf32>
    %306 = tpu.matmul %302, %289, %cst_177 {dimension_numbers = #tpu.dot_dimension_numbers<[1], [0], [0], [1], [0, 0, 1, 1], [], []>} : vector<8x8xf32>, vector<8x8xf32>, vector<8x8xf32> -> vector<8x8xf32>
    %c0_178 = arith.constant 0 : index
    %c16_179 = arith.constant 16 : index
    %307 = vector.load %arg26[%c0_178, %c16_179] : memref<16x32xf32, #tpu.memory_space<vmem>>, vector<8x8xf32>
    tpu.vector_store %arg26[%c0_178, %c16_179], %306 {strides = array<i32>} : memref<16x32xf32, #tpu.memory_space<vmem>>, vector<8x8xf32>,
    %308 = vector.extract_strided_slice %238 {offsets = [0, 24], sizes = [8, 8], strides = [1, 1]} : vector<8x32xf32> to vector<8x8xf32>
    %309 = vector.extract_strided_slice %239 {offsets = [0, 24], sizes = [8, 8], strides = [1, 1]} : vector<8x32xf32> to vector<8x8xf32>
    %310 = vector.extract_strided_slice %240 {offsets = [0, 24], sizes = [8, 8], strides = [1, 1]} : vector<8x32xf32> to vector<8x8xf32>
    %cst_180 = arith.constant dense<0.000000e+00> : vector<8x8xf32>
    %311 = tpu.matmul %308, %309, %cst_180 {dimension_numbers = #tpu.dot_dimension_numbers<[1], [1], [0], [0], [0, 0, 1, 0], [], []>} : vector<8x8xf32>, vector<8x8xf32>, vector<8x8xf32> -> vector<8x8xf32>
    %312 = arith.mulf %311, %242 : vector<8x8xf32>
    %313 = arith.addf %312, %244 : vector<8x8xf32>
    %cst_181 = arith.constant dense<0xFF800000> : vector<8xf32>
    %314 = vector.multi_reduction <maximumf>, %313, %cst_181 [1] : vector<8x8xf32> to vector<8xf32>
    %315 = vector.shape_cast %314 : vector<8xf32> to vector<8x1xf32>
    %316 = vector.broadcast %315 : vector<8x1xf32> to vector<8x8xf32>
    %317 = arith.subf %313, %316 : vector<8x8xf32>
    %318 = math.exp %317 : vector<8x8xf32>
    %cst_182 = arith.constant dense<0.000000e+00> : vector<8xf32>
    %319 = vector.multi_reduction <add>, %318, %cst_182 [1] : vector<8x8xf32> to vector<8xf32>
    %320 = vector.shape_cast %319 : vector<8xf32> to vector<8x1xf32>
    %321 = tpu.reciprocal %320 {approx = true} : vector<8x1xf32> -> vector<8x1xf32>
    %322 = vector.broadcast %321 : vector<8x1xf32> to vector<8x8xf32>
    %323 = arith.mulf %318, %322 : vector<8x8xf32>
    %c0_183 = arith.constant 0 : index
    %c0_184 = arith.constant 0 : index
    %c3_185 = arith.constant 3 : index
    %c0_186 = arith.constant 0 : index
    %c0_187 = arith.constant 0 : index
    %324 = vector.load %arg25[%c0_183, %c0_184, %c3_185, %c0_186, %c0_187] : memref<1x2x4x8x8xf32, #tpu.memory_space<vmem>>, vector<1x1x1x8x8xf32>
    %325 = vector.shape_cast %324 : vector<1x1x1x8x8xf32> to vector<8x8xf32>
    %326 = vector.shape_cast %323 : vector<8x8xf32> to vector<1x1x1x8x8xf32>
    tpu.vector_store %arg25[%c0_183, %c0_184, %c3_185, %c0_186, %c0_187], %326 {strides = array<i32>} : memref<1x2x4x8x8xf32, #tpu.memory_space<vmem>>, vector<1x1x1x8x8xf32>,
    %cst_188 = arith.constant dense<0.000000e+00> : vector<8x8xf32>
    %327 = tpu.matmul %323, %310, %cst_188 {dimension_numbers = #tpu.dot_dimension_numbers<[1], [0], [0], [1], [0, 0, 1, 1], [], []>} : vector<8x8xf32>, vector<8x8xf32>, vector<8x8xf32> -> vector<8x8xf32>
    %c0_189 = arith.constant 0 : index
    %c24_190 = arith.constant 24 : index
    %328 = vector.load %arg26[%c0_189, %c24_190] : memref<16x32xf32, #tpu.memory_space<vmem>>, vector<8x8xf32>
    tpu.vector_store %arg26[%c0_189, %c24_190], %327 {strides = array<i32>} : memref<16x32xf32, #tpu.memory_space<vmem>>, vector<8x8xf32>,
    %329 = vector.extract_strided_slice %235 {offsets = [8, 0], sizes = [8, 32], strides = [1, 1]} : vector<16x32xf32> to vector<8x32xf32>
    %330 = vector.extract_strided_slice %236 {offsets = [8, 0], sizes = [8, 32], strides = [1, 1]} : vector<16x32xf32> to vector<8x32xf32>
    %331 = vector.extract_strided_slice %237 {offsets = [8, 0], sizes = [8, 32], strides = [1, 1]} : vector<16x32xf32> to vector<8x32xf32>
    %c1_191 = arith.constant 1 : index
    %c0_192 = arith.constant 0 : index
    %c0_193 = arith.constant 0 : index
    %332 = vector.load %arg5[%c1_191, %c0_192, %c0_193] : memref<2x8x8xf32, #tpu.memory_space<vmem>>, vector<1x8x8xf32>
    %333 = vector.shape_cast %332 : vector<1x8x8xf32> to vector<8x8xf32>
    %c1_194 = arith.constant 1 : index
    %c0_195 = arith.constant 0 : index
    %c0_196 = arith.constant 0 : index
    %334 = vector.load %arg6[%c1_194, %c0_195, %c0_196] : memref<2x8x8xf32, #tpu.memory_space<vmem>>, vector<1x8x8xf32>
    %335 = vector.shape_cast %334 : vector<1x8x8xf32> to vector<8x8xf32>
    %336 = vector.extract_strided_slice %329 {offsets = [0, 0], sizes = [8, 8], strides = [1, 1]} : vector<8x32xf32> to vector<8x8xf32>
    %337 = vector.extract_strided_slice %330 {offsets = [0, 0], sizes = [8, 8], strides = [1, 1]} : vector<8x32xf32> to vector<8x8xf32>
    %338 = vector.extract_strided_slice %331 {offsets = [0, 0], sizes = [8, 8], strides = [1, 1]} : vector<8x32xf32> to vector<8x8xf32>
    %cst_197 = arith.constant dense<0.000000e+00> : vector<8x8xf32>
    %339 = tpu.matmul %336, %337, %cst_197 {dimension_numbers = #tpu.dot_dimension_numbers<[1], [1], [0], [0], [0, 0, 1, 0], [], []>} : vector<8x8xf32>, vector<8x8xf32>, vector<8x8xf32> -> vector<8x8xf32>
    %340 = arith.mulf %339, %333 : vector<8x8xf32>
    %341 = arith.addf %340, %335 : vector<8x8xf32>
    %cst_198 = arith.constant dense<0xFF800000> : vector<8xf32>
    %342 = vector.multi_reduction <maximumf>, %341, %cst_198 [1] : vector<8x8xf32> to vector<8xf32>
    %343 = vector.shape_cast %342 : vector<8xf32> to vector<8x1xf32>
    %344 = vector.broadcast %343 : vector<8x1xf32> to vector<8x8xf32>
    %345 = arith.subf %341, %344 : vector<8x8xf32>
    %346 = math.exp %345 : vector<8x8xf32>
    %cst_199 = arith.constant dense<0.000000e+00> : vector<8xf32>
    %347 = vector.multi_reduction <add>, %346, %cst_199 [1] : vector<8x8xf32> to vector<8xf32>
    %348 = vector.shape_cast %347 : vector<8xf32> to vector<8x1xf32>
    %349 = tpu.reciprocal %348 {approx = true} : vector<8x1xf32> -> vector<8x1xf32>
    %350 = vector.broadcast %349 : vector<8x1xf32> to vector<8x8xf32>
    %351 = arith.mulf %346, %350 : vector<8x8xf32>
    %c0_200 = arith.constant 0 : index
    %c1_201 = arith.constant 1 : index
    %c0_202 = arith.constant 0 : index
    %c0_203 = arith.constant 0 : index
    %c0_204 = arith.constant 0 : index
    %352 = vector.load %arg25[%c0_200, %c1_201, %c0_202, %c0_203, %c0_204] : memref<1x2x4x8x8xf32, #tpu.memory_space<vmem>>, vector<1x1x1x8x8xf32>
    %353 = vector.shape_cast %352 : vector<1x1x1x8x8xf32> to vector<8x8xf32>
    %354 = vector.shape_cast %351 : vector<8x8xf32> to vector<1x1x1x8x8xf32>
    tpu.vector_store %arg25[%c0_200, %c1_201, %c0_202, %c0_203, %c0_204], %354 {strides = array<i32>} : memref<1x2x4x8x8xf32, #tpu.memory_space<vmem>>, vector<1x1x1x8x8xf32>,
    %cst_205 = arith.constant dense<0.000000e+00> : vector<8x8xf32>
    %355 = tpu.matmul %351, %338, %cst_205 {dimension_numbers = #tpu.dot_dimension_numbers<[1], [0], [0], [1], [0, 0, 1, 1], [], []>} : vector<8x8xf32>, vector<8x8xf32>, vector<8x8xf32> -> vector<8x8xf32>
    %c8_206 = arith.constant 8 : index
    %c0_207 = arith.constant 0 : index
    %356 = vector.load %arg26[%c8_206, %c0_207] : memref<16x32xf32, #tpu.memory_space<vmem>>, vector<8x8xf32>
    tpu.vector_store %arg26[%c8_206, %c0_207], %355 {strides = array<i32>} : memref<16x32xf32, #tpu.memory_space<vmem>>, vector<8x8xf32>,
    %357 = vector.extract_strided_slice %329 {offsets = [0, 8], sizes = [8, 8], strides = [1, 1]} : vector<8x32xf32> to vector<8x8xf32>
    %358 = vector.extract_strided_slice %330 {offsets = [0, 8], sizes = [8, 8], strides = [1, 1]} : vector<8x32xf32> to vector<8x8xf32>
    %359 = vector.extract_strided_slice %331 {offsets = [0, 8], sizes = [8, 8], strides = [1, 1]} : vector<8x32xf32> to vector<8x8xf32>
    %cst_208 = arith.constant dense<0.000000e+00> : vector<8x8xf32>
    %360 = tpu.matmul %357, %358, %cst_208 {dimension_numbers = #tpu.dot_dimension_numbers<[1], [1], [0], [0], [0, 0, 1, 0], [], []>} : vector<8x8xf32>, vector<8x8xf32>, vector<8x8xf32> -> vector<8x8xf32>
    %361 = arith.mulf %360, %333 : vector<8x8xf32>
    %362 = arith.addf %361, %335 : vector<8x8xf32>
    %cst_209 = arith.constant dense<0xFF800000> : vector<8xf32>
    %363 = vector.multi_reduction <maximumf>, %362, %cst_209 [1] : vector<8x8xf32> to vector<8xf32>
    %364 = vector.shape_cast %363 : vector<8xf32> to vector<8x1xf32>
    %365 = vector.broadcast %364 : vector<8x1xf32> to vector<8x8xf32>
    %366 = arith.subf %362, %365 : vector<8x8xf32>
    %367 = math.exp %366 : vector<8x8xf32>
    %cst_210 = arith.constant dense<0.000000e+00> : vector<8xf32>
    %368 = vector.multi_reduction <add>, %367, %cst_210 [1] : vector<8x8xf32> to vector<8xf32>
    %369 = vector.shape_cast %368 : vector<8xf32> to vector<8x1xf32>
    %370 = tpu.reciprocal %369 {approx = true} : vector<8x1xf32> -> vector<8x1xf32>
    %371 = vector.broadcast %370 : vector<8x1xf32> to vector<8x8xf32>
    %372 = arith.mulf %367, %371 : vector<8x8xf32>
    %c0_211 = arith.constant 0 : index
    %c1_212 = arith.constant 1 : index
    %c1_213 = arith.constant 1 : index
    %c0_214 = arith.constant 0 : index
    %c0_215 = arith.constant 0 : index
    %373 = vector.load %arg25[%c0_211, %c1_212, %c1_213, %c0_214, %c0_215] : memref<1x2x4x8x8xf32, #tpu.memory_space<vmem>>, vector<1x1x1x8x8xf32>
    %374 = vector.shape_cast %373 : vector<1x1x1x8x8xf32> to vector<8x8xf32>
    %375 = vector.shape_cast %372 : vector<8x8xf32> to vector<1x1x1x8x8xf32>
    tpu.vector_store %arg25[%c0_211, %c1_212, %c1_213, %c0_214, %c0_215], %375 {strides = array<i32>} : memref<1x2x4x8x8xf32, #tpu.memory_space<vmem>>, vector<1x1x1x8x8xf32>,
    %cst_216 = arith.constant dense<0.000000e+00> : vector<8x8xf32>
    %376 = tpu.matmul %372, %359, %cst_216 {dimension_numbers = #tpu.dot_dimension_numbers<[1], [0], [0], [1], [0, 0, 1, 1], [], []>} : vector<8x8xf32>, vector<8x8xf32>, vector<8x8xf32> -> vector<8x8xf32>
    %c8_217 = arith.constant 8 : index
    %c8_218 = arith.constant 8 : index
    %377 = vector.load %arg26[%c8_217, %c8_218] : memref<16x32xf32, #tpu.memory_space<vmem>>, vector<8x8xf32>
    tpu.vector_store %arg26[%c8_217, %c8_218], %376 {strides = array<i32>} : memref<16x32xf32, #tpu.memory_space<vmem>>, vector<8x8xf32>,
    %378 = vector.extract_strided_slice %329 {offsets = [0, 16], sizes = [8, 8], strides = [1, 1]} : vector<8x32xf32> to vector<8x8xf32>
    %379 = vector.extract_strided_slice %330 {offsets = [0, 16], sizes = [8, 8], strides = [1, 1]} : vector<8x32xf32> to vector<8x8xf32>
    %380 = vector.extract_strided_slice %331 {offsets = [0, 16], sizes = [8, 8], strides = [1, 1]} : vector<8x32xf32> to vector<8x8xf32>
    %cst_219 = arith.constant dense<0.000000e+00> : vector<8x8xf32>
    %381 = tpu.matmul %378, %379, %cst_219 {dimension_numbers = #tpu.dot_dimension_numbers<[1], [1], [0], [0], [0, 0, 1, 0], [], []>} : vector<8x8xf32>, vector<8x8xf32>, vector<8x8xf32> -> vector<8x8xf32>
    %382 = arith.mulf %381, %333 : vector<8x8xf32>
    %383 = arith.addf %382, %335 : vector<8x8xf32>
    %cst_220 = arith.constant dense<0xFF800000> : vector<8xf32>
    %384 = vector.multi_reduction <maximumf>, %383, %cst_220 [1] : vector<8x8xf32> to vector<8xf32>
    %385 = vector.shape_cast %384 : vector<8xf32> to vector<8x1xf32>
    %386 = vector.broadcast %385 : vector<8x1xf32> to vector<8x8xf32>
    %387 = arith.subf %383, %386 : vector<8x8xf32>
    %388 = math.exp %387 : vector<8x8xf32>
    %cst_221 = arith.constant dense<0.000000e+00> : vector<8xf32>
    %389 = vector.multi_reduction <add>, %388, %cst_221 [1] : vector<8x8xf32> to vector<8xf32>
    %390 = vector.shape_cast %389 : vector<8xf32> to vector<8x1xf32>
    %391 = tpu.reciprocal %390 {approx = true} : vector<8x1xf32> -> vector<8x1xf32>
    %392 = vector.broadcast %391 : vector<8x1xf32> to vector<8x8xf32>
    %393 = arith.mulf %388, %392 : vector<8x8xf32>
    %c0_222 = arith.constant 0 : index
    %c1_223 = arith.constant 1 : index
    %c2_224 = arith.constant 2 : index
    %c0_225 = arith.constant 0 : index
    %c0_226 = arith.constant 0 : index
    %394 = vector.load %arg25[%c0_222, %c1_223, %c2_224, %c0_225, %c0_226] : memref<1x2x4x8x8xf32, #tpu.memory_space<vmem>>, vector<1x1x1x8x8xf32>
    %395 = vector.shape_cast %394 : vector<1x1x1x8x8xf32> to vector<8x8xf32>
    %396 = vector.shape_cast %393 : vector<8x8xf32> to vector<1x1x1x8x8xf32>
    tpu.vector_store %arg25[%c0_222, %c1_223, %c2_224, %c0_225, %c0_226], %396 {strides = array<i32>} : memref<1x2x4x8x8xf32, #tpu.memory_space<vmem>>, vector<1x1x1x8x8xf32>,
    %cst_227 = arith.constant dense<0.000000e+00> : vector<8x8xf32>
    %397 = tpu.matmul %393, %380, %cst_227 {dimension_numbers = #tpu.dot_dimension_numbers<[1], [0], [0], [1], [0, 0, 1, 1], [], []>} : vector<8x8xf32>, vector<8x8xf32>, vector<8x8xf32> -> vector<8x8xf32>
    %c8_228 = arith.constant 8 : index
    %c16_229 = arith.constant 16 : index
    %398 = vector.load %arg26[%c8_228, %c16_229] : memref<16x32xf32, #tpu.memory_space<vmem>>, vector<8x8xf32>
    tpu.vector_store %arg26[%c8_228, %c16_229], %397 {strides = array<i32>} : memref<16x32xf32, #tpu.memory_space<vmem>>, vector<8x8xf32>,
    %399 = vector.extract_strided_slice %329 {offsets = [0, 24], sizes = [8, 8], strides = [1, 1]} : vector<8x32xf32> to vector<8x8xf32>
    %400 = vector.extract_strided_slice %330 {offsets = [0, 24], sizes = [8, 8], strides = [1, 1]} : vector<8x32xf32> to vector<8x8xf32>
    %401 = vector.extract_strided_slice %331 {offsets = [0, 24], sizes = [8, 8], strides = [1, 1]} : vector<8x32xf32> to vector<8x8xf32>
    %cst_230 = arith.constant dense<0.000000e+00> : vector<8x8xf32>
    %402 = tpu.matmul %399, %400, %cst_230 {dimension_numbers = #tpu.dot_dimension_numbers<[1], [1], [0], [0], [0, 0, 1, 0], [], []>} : vector<8x8xf32>, vector<8x8xf32>, vector<8x8xf32> -> vector<8x8xf32>
    %403 = arith.mulf %402, %333 : vector<8x8xf32>
    %404 = arith.addf %403, %335 : vector<8x8xf32>
    %cst_231 = arith.constant dense<0xFF800000> : vector<8xf32>
    %405 = vector.multi_reduction <maximumf>, %404, %cst_231 [1] : vector<8x8xf32> to vector<8xf32>
    %406 = vector.shape_cast %405 : vector<8xf32> to vector<8x1xf32>
    %407 = vector.broadcast %406 : vector<8x1xf32> to vector<8x8xf32>
    %408 = arith.subf %404, %407 : vector<8x8xf32>
    %409 = math.exp %408 : vector<8x8xf32>
    %cst_232 = arith.constant dense<0.000000e+00> : vector<8xf32>
    %410 = vector.multi_reduction <add>, %409, %cst_232 [1] : vector<8x8xf32> to vector<8xf32>
    %411 = vector.shape_cast %410 : vector<8xf32> to vector<8x1xf32>
    %412 = tpu.reciprocal %411 {approx = true} : vector<8x1xf32> -> vector<8x1xf32>
    %413 = vector.broadcast %412 : vector<8x1xf32> to vector<8x8xf32>
    %414 = arith.mulf %409, %413 : vector<8x8xf32>
    %c0_233 = arith.constant 0 : index
    %c1_234 = arith.constant 1 : index
    %c3_235 = arith.constant 3 : index
    %c0_236 = arith.constant 0 : index
    %c0_237 = arith.constant 0 : index
    %415 = vector.load %arg25[%c0_233, %c1_234, %c3_235, %c0_236, %c0_237] : memref<1x2x4x8x8xf32, #tpu.memory_space<vmem>>, vector<1x1x1x8x8xf32>
    %416 = vector.shape_cast %415 : vector<1x1x1x8x8xf32> to vector<8x8xf32>
    %417 = vector.shape_cast %414 : vector<8x8xf32> to vector<1x1x1x8x8xf32>
    tpu.vector_store %arg25[%c0_233, %c1_234, %c3_235, %c0_236, %c0_237], %417 {strides = array<i32>} : memref<1x2x4x8x8xf32, #tpu.memory_space<vmem>>, vector<1x1x1x8x8xf32>,
    %cst_238 = arith.constant dense<0.000000e+00> : vector<8x8xf32>
    %418 = tpu.matmul %414, %401, %cst_238 {dimension_numbers = #tpu.dot_dimension_numbers<[1], [0], [0], [1], [0, 0, 1, 1], [], []>} : vector<8x8xf32>, vector<8x8xf32>, vector<8x8xf32> -> vector<8x8xf32>
    %c8_239 = arith.constant 8 : index
    %c24_240 = arith.constant 24 : index
    %419 = vector.load %arg26[%c8_239, %c24_240] : memref<16x32xf32, #tpu.memory_space<vmem>>, vector<8x8xf32>
    tpu.vector_store %arg26[%c8_239, %c24_240], %418 {strides = array<i32>} : memref<16x32xf32, #tpu.memory_space<vmem>>, vector<8x8xf32>,
    %c0_241 = arith.constant 0 : index
    %c0_242 = arith.constant 0 : index
    %420 = vector.load %arg26[%c0_241, %c0_242] : memref<16x32xf32, #tpu.memory_space<vmem>>, vector<16x32xf32>
    %cst_243 = arith.constant dense<0.000000e+00> : vector<16x32xf32>
    %421 = tpu.matmul %420, %234, %cst_243 {dimension_numbers = #tpu.dot_dimension_numbers<[1], [0], [0], [1], [0, 0, 1, 1], [], []>} : vector<16x32xf32>, vector<32x32xf32>, vector<16x32xf32> -> vector<16x32xf32>
    %422 = arith.addf %421, %226 : vector<16x32xf32>
    %c0_244 = arith.constant 0 : index
    %c0_245 = arith.constant 0 : index
    %c0_246 = arith.constant 0 : index
    %423 = vector.load %arg17[%c0_244, %c0_245, %c0_246] : memref<1x1x32xf32, #tpu.memory_space<vmem>>, vector<1x1x32xf32>
    %424 = vector.shape_cast %423 : vector<1x1x32xf32> to vector<1x32xf32>
    %c0_247 = arith.constant 0 : index
    %c0_248 = arith.constant 0 : index
    %c0_249 = arith.constant 0 : index
    %425 = vector.load %arg18[%c0_247, %c0_248, %c0_249] : memref<1x1x32xf32, #tpu.memory_space<vmem>>, vector<1x1x32xf32>
    %426 = vector.shape_cast %425 : vector<1x1x32xf32> to vector<1x32xf32>
    %cst_250 = arith.constant dense<0.000000e+00> : vector<16xf32>
    %427 = vector.multi_reduction <add>, %422, %cst_250 [1] : vector<16x32xf32> to vector<16xf32>
    %428 = vector.shape_cast %427 : vector<16xf32> to vector<16x1xf32>
    %cst_251 = arith.constant 3.125000e-02 : f32
    %429 = vector.broadcast %cst_251 : f32 to vector<16x1xf32>
    %430 = arith.mulf %428, %429 : vector<16x1xf32>
    %431 = arith.mulf %422, %422 : vector<16x32xf32>
    %cst_252 = arith.constant dense<0.000000e+00> : vector<16xf32>
    %432 = vector.multi_reduction <add>, %431, %cst_252 [1] : vector<16x32xf32> to vector<16xf32>
    %433 = vector.shape_cast %432 : vector<16xf32> to vector<16x1xf32>
    %cst_253 = arith.constant 3.125000e-02 : f32
    %434 = vector.broadcast %cst_253 : f32 to vector<16x1xf32>
    %435 = arith.mulf %433, %434 : vector<16x1xf32>
    %436 = arith.mulf %430, %430 : vector<16x1xf32>
    %437 = arith.subf %435, %436 : vector<16x1xf32>
    %438 = vector.broadcast %430 : vector<16x1xf32> to vector<16x32xf32>
    %439 = arith.subf %422, %438 : vector<16x32xf32>
    %cst_254 = arith.constant 9.99999974E-6 : f32
    %440 = vector.broadcast %cst_254 : f32 to vector<16x1xf32>
    %441 = arith.addf %437, %440 : vector<16x1xf32>
    %442 = math.rsqrt %441 : vector<16x1xf32>
    %443 = vector.broadcast %442 : vector<16x1xf32> to vector<16x32xf32>
    %444 = arith.mulf %439, %443 : vector<16x32xf32>
    %445 = vector.broadcast %424 : vector<1x32xf32> to vector<16x32xf32>
    %446 = arith.mulf %444, %445 : vector<16x32xf32>
    %447 = vector.broadcast %426 : vector<1x32xf32> to vector<16x32xf32>
    %448 = arith.addf %446, %447 : vector<16x32xf32>
    %c0_255 = arith.constant 0 : index
    %c0_256 = arith.constant 0 : index
    %c0_257 = arith.constant 0 : index
    %449 = vector.load %arg19[%c0_255, %c0_256, %c0_257] : memref<1x32x64xf32, #tpu.memory_space<vmem>>, vector<1x32x64xf32>
    %450 = vector.shape_cast %449 : vector<1x32x64xf32> to vector<32x64xf32>
    %cst_258 = arith.constant dense<0.000000e+00> : vector<16x64xf32>
    %451 = tpu.matmul %448, %450, %cst_258 {dimension_numbers = #tpu.dot_dimension_numbers<[1], [0], [0], [1], [0, 0, 1, 1], [], []>} : vector<16x32xf32>, vector<32x64xf32>, vector<16x64xf32> -> vector<16x64xf32>
    %cst_259 = arith.constant 0.000000e+00 : f32
    %452 = vector.broadcast %cst_259 : f32 to vector<16x64xf32>
    %453 = arith.maximumf %451, %452 : vector<16x64xf32>
    %c0_260 = arith.constant 0 : index
    %c0_261 = arith.constant 0 : index
    %c0_262 = arith.constant 0 : index
    %454 = vector.load %arg20[%c0_260, %c0_261, %c0_262] : memref<1x64x32xf32, #tpu.memory_space<vmem>>, vector<1x64x32xf32>
    %455 = vector.shape_cast %454 : vector<1x64x32xf32> to vector<64x32xf32>
    %cst_263 = arith.constant dense<0.000000e+00> : vector<16x32xf32>
    %456 = tpu.matmul %453, %455, %cst_263 {dimension_numbers = #tpu.dot_dimension_numbers<[1], [0], [0], [1], [0, 0, 1, 1], [], []>} : vector<16x64xf32>, vector<64x32xf32>, vector<16x32xf32> -> vector<16x32xf32>
    %457 = arith.addf %456, %448 : vector<16x32xf32>
    %c0_264 = arith.constant 0 : index
    %c0_265 = arith.constant 0 : index
    %c0_266 = arith.constant 0 : index
    %458 = vector.load %arg21[%c0_264, %c0_265, %c0_266] : memref<1x1x32xf32, #tpu.memory_space<vmem>>, vector<1x1x32xf32>
    %459 = vector.shape_cast %458 : vector<1x1x32xf32> to vector<1x32xf32>
    %c0_267 = arith.constant 0 : index
    %c0_268 = arith.constant 0 : index
    %c0_269 = arith.constant 0 : index
    %460 = vector.load %arg22[%c0_267, %c0_268, %c0_269] : memref<1x1x32xf32, #tpu.memory_space<vmem>>, vector<1x1x32xf32>
    %461 = vector.shape_cast %460 : vector<1x1x32xf32> to vector<1x32xf32>
    %cst_270 = arith.constant dense<0.000000e+00> : vector<16xf32>
    %462 = vector.multi_reduction <add>, %457, %cst_270 [1] : vector<16x32xf32> to vector<16xf32>
    %463 = vector.shape_cast %462 : vector<16xf32> to vector<16x1xf32>
    %cst_271 = arith.constant 3.125000e-02 : f32
    %464 = vector.broadcast %cst_271 : f32 to vector<16x1xf32>
    %465 = arith.mulf %463, %464 : vector<16x1xf32>
    %466 = arith.mulf %457, %457 : vector<16x32xf32>
    %cst_272 = arith.constant dense<0.000000e+00> : vector<16xf32>
    %467 = vector.multi_reduction <add>, %466, %cst_272 [1] : vector<16x32xf32> to vector<16xf32>
    %468 = vector.shape_cast %467 : vector<16xf32> to vector<16x1xf32>
    %cst_273 = arith.constant 3.125000e-02 : f32
    %469 = vector.broadcast %cst_273 : f32 to vector<16x1xf32>
    %470 = arith.mulf %468, %469 : vector<16x1xf32>
    %471 = arith.mulf %465, %465 : vector<16x1xf32>
    %472 = arith.subf %470, %471 : vector<16x1xf32>
    %473 = vector.broadcast %465 : vector<16x1xf32> to vector<16x32xf32>
    %474 = arith.subf %457, %473 : vector<16x32xf32>
    %cst_274 = arith.constant 9.99999974E-6 : f32
    %475 = vector.broadcast %cst_274 : f32 to vector<16x1xf32>
    %476 = arith.addf %472, %475 : vector<16x1xf32>
    %477 = math.rsqrt %476 : vector<16x1xf32>
    %478 = vector.broadcast %477 : vector<16x1xf32> to vector<16x32xf32>
    %479 = arith.mulf %474, %478 : vector<16x32xf32>
    %480 = vector.broadcast %459 : vector<1x32xf32> to vector<16x32xf32>
    %481 = arith.mulf %479, %480 : vector<16x32xf32>
    %482 = vector.broadcast %461 : vector<1x32xf32> to vector<16x32xf32>
    %483 = arith.addf %481, %482 : vector<16x32xf32>
    %c0_275 = arith.constant 0 : index
    %c0_276 = arith.constant 0 : index
    %484 = vector.load %arg23[%c0_275, %c0_276] : memref<16x32xf32, #tpu.memory_space<vmem>>, vector<16x32xf32>
    tpu.vector_store %arg23[%c0_275, %c0_276], %483 {strides = array<i32>} : memref<16x32xf32, #tpu.memory_space<vmem>>, vector<16x32xf32>,
    return
  }
  func.func @transform_0(%arg0: i32) -> (i32, i32) {
    %c0_i32 = arith.constant 0 : i32
    %c0_i32_0 = arith.constant 0 : i32
    %c0_i32_1 = arith.constant 0 : i32
    return %c0_i32, %c0_i32_0 : i32, i32
  }
  func.func @transform_1(%arg0: i32) -> (i32, i32) {
    %c0_i32 = arith.constant 0 : i32
    %c0_i32_0 = arith.constant 0 : i32
    %c0_i32_1 = arith.constant 0 : i32
    return %c0_i32, %c0_i32_0 : i32, i32
  }
  func.func @transform_2(%arg0: i32) -> (i32, i32, i32) {
    %c0_i32 = arith.constant 0 : i32
    %c0_i32_0 = arith.constant 0 : i32
    %c0_i32_1 = arith.constant 0 : i32
    %c0_i32_2 = arith.constant 0 : i32
    return %c0_i32, %c0_i32_0, %c0_i32_1 : i32, i32, i32
  }
  func.func @transform_3(%arg0: i32) -> (i32, i32, i32) {
    %c0_i32 = arith.constant 0 : i32
    %c0_i32_0 = arith.constant 0 : i32
    %c0_i32_1 = arith.constant 0 : i32
    %c0_i32_2 = arith.constant 0 : i32
    return %c0_i32, %c0_i32_0, %c0_i32_1 : i32, i32, i32
  }
  func.func @transform_4(%arg0: i32) -> (i32, i32, i32) {
    %c0_i32 = arith.constant 0 : i32
    %c0_i32_0 = arith.constant 0 : i32
    %c0_i32_1 = arith.constant 0 : i32
    %c0_i32_2 = arith.constant 0 : i32
    return %c0_i32, %c0_i32_0, %c0_i32_1 : i32, i32, i32
  }
  func.func @transform_5(%arg0: i32) -> (i32, i32, i32) {
    %c0_i32 = arith.constant 0 : i32
    %c0_i32_0 = arith.constant 0 : i32
    %c0_i32_1 = arith.constant 0 : i32
    %c0_i32_2 = arith.constant 0 : i32
    return %c0_i32, %c0_i32_0, %c0_i32_1 : i32, i32, i32
  }
  func.func @transform_6(%arg0: i32) -> (i32, i32, i32) {
    %c0_i32 = arith.constant 0 : i32
    %c0_i32_0 = arith.constant 0 : i32
    %c0_i32_1 = arith.constant 0 : i32
    return %arg0, %c0_i32, %c0_i32_0 : i32, i32, i32
  }
  func.func @transform_7(%arg0: i32) -> (i32, i32, i32) {
    %c0_i32 = arith.constant 0 : i32
    %c0_i32_0 = arith.constant 0 : i32
    %c0_i32_1 = arith.constant 0 : i32
    return %arg0, %c0_i32, %c0_i32_0 : i32, i32, i32
  }
  func.func @transform_8(%arg0: i32) -> (i32, i32, i32) {
    %c0_i32 = arith.constant 0 : i32
    %c0_i32_0 = arith.constant 0 : i32
    %c0_i32_1 = arith.constant 0 : i32
    return %arg0, %c0_i32, %c0_i32_0 : i32, i32, i32
  }
  func.func @transform_9(%arg0: i32) -> (i32, i32, i32) {
    %c0_i32 = arith.constant 0 : i32
    %c0_i32_0 = arith.constant 0 : i32
    %c0_i32_1 = arith.constant 0 : i32
    return %arg0, %c0_i32, %c0_i32_0 : i32, i32, i32
  }
  func.func @transform_10(%arg0: i32) -> (i32, i32, i32) {
    %c0_i32 = arith.constant 0 : i32
    %c0_i32_0 = arith.constant 0 : i32
    %c0_i32_1 = arith.constant 0 : i32
    return %arg0, %c0_i32, %c0_i32_0 : i32, i32, i32
  }
  func.func @transform_11(%arg0: i32) -> (i32, i32, i32) {
    %c0_i32 = arith.constant 0 : i32
    %c0_i32_0 = arith.constant 0 : i32
    %c0_i32_1 = arith.constant 0 : i32
    return %arg0, %c0_i32, %c0_i32_0 : i32, i32, i32
  }
  func.func @transform_12(%arg0: i32) -> (i32, i32, i32) {
    %c0_i32 = arith.constant 0 : i32
    %c0_i32_0 = arith.constant 0 : i32
    %c0_i32_1 = arith.constant 0 : i32
    return %arg0, %c0_i32, %c0_i32_0 : i32, i32, i32
  }
  func.func @transform_13(%arg0: i32) -> (i32, i32, i32) {
    %c0_i32 = arith.constant 0 : i32
    %c0_i32_0 = arith.constant 0 : i32
    %c0_i32_1 = arith.constant 0 : i32
    return %arg0, %c0_i32, %c0_i32_0 : i32, i32, i32
  }
  func.func @transform_14(%arg0: i32) -> (i32, i32, i32) {
    %c0_i32 = arith.constant 0 : i32
    %c0_i32_0 = arith.constant 0 : i32
    %c0_i32_1 = arith.constant 0 : i32
    return %arg0, %c0_i32, %c0_i32_0 : i32, i32, i32
  }
  func.func @transform_15(%arg0: i32) -> (i32, i32, i32) {
    %c0_i32 = arith.constant 0 : i32
    %c0_i32_0 = arith.constant 0 : i32
    %c0_i32_1 = arith.constant 0 : i32
    return %arg0, %c0_i32, %c0_i32_0 : i32, i32, i32
  }
  func.func @transform_16(%arg0: i32) -> (i32, i32, i32) {
    %c0_i32 = arith.constant 0 : i32
    %c0_i32_0 = arith.constant 0 : i32
    %c0_i32_1 = arith.constant 0 : i32
    return %arg0, %c0_i32, %c0_i32_0 : i32, i32, i32
  }
  func.func @transform_17(%arg0: i32) -> (i32, i32, i32) {
    %c0_i32 = arith.constant 0 : i32
    %c0_i32_0 = arith.constant 0 : i32
    %c0_i32_1 = arith.constant 0 : i32
    return %arg0, %c0_i32, %c0_i32_0 : i32, i32, i32
  }
  func.func @transform_18(%arg0: i32) -> (i32, i32, i32) {
    %c0_i32 = arith.constant 0 : i32
    %c0_i32_0 = arith.constant 0 : i32
    %c0_i32_1 = arith.constant 0 : i32
    return %arg0, %c0_i32, %c0_i32_0 : i32, i32, i32
  }
  func.func @transform_19(%arg0: i32) -> (i32, i32, i32) {
    %c0_i32 = arith.constant 0 : i32
    %c0_i32_0 = arith.constant 0 : i32
    %c0_i32_1 = arith.constant 0 : i32
    return %arg0, %c0_i32, %c0_i32_0 : i32, i32, i32
  }
  func.func @transform_20(%arg0: i32) -> (i32, i32, i32) {
    %c0_i32 = arith.constant 0 : i32
    %c0_i32_0 = arith.constant 0 : i32
    %c0_i32_1 = arith.constant 0 : i32
    return %arg0, %c0_i32, %c0_i32_0 : i32, i32, i32
  }
  func.func @transform_21(%arg0: i32) -> (i32, i32, i32) {
    %c0_i32 = arith.constant 0 : i32
    %c0_i32_0 = arith.constant 0 : i32
    %c0_i32_1 = arith.constant 0 : i32
    return %arg0, %c0_i32, %c0_i32_0 : i32, i32, i32
  }
  func.func @transform_22(%arg0: i32) -> (i32, i32) {
    %c0_i32 = arith.constant 0 : i32
    %c0_i32_0 = arith.constant 0 : i32
    %c0_i32_1 = arith.constant 0 : i32
    return %c0_i32, %c0_i32_0 : i32, i32
  }
  func.func @transform_23(%arg0: i32) -> (i32, i32, i32, i32, i32) {
    %c0_i32 = arith.constant 0 : i32
    %c0_i32_0 = arith.constant 0 : i32
    %c0_i32_1 = arith.constant 0 : i32
    %c0_i32_2 = arith.constant 0 : i32
    %c0_i32_3 = arith.constant 0 : i32
    return %arg0, %c0_i32, %c0_i32_0, %c0_i32_1, %c0_i32_2 : i32, i32, i32, i32, i32
  }
  func.func @transform_24(%arg0: i32) -> (i32, i32, i32, i32, i32) {
    %c0_i32 = arith.constant 0 : i32
    %c0_i32_0 = arith.constant 0 : i32
    %c0_i32_1 = arith.constant 0 : i32
    %c0_i32_2 = arith.constant 0 : i32
    %c0_i32_3 = arith.constant 0 : i32
    return %arg0, %c0_i32, %c0_i32_0, %c0_i32_1, %c0_i32_2 : i32, i32, i32, i32, i32
  }
}

</mosaic_0001>

<llo_original>
// kernel: tpu_custom_call.1
$region0: #{tpu_custom_call.1}
  #allocation0 [shape = 'u32[]', space=smem, size = 0x4, offset = 0x4, fixed_abs, tag = 'smem constant byte address 0x4 - core index']
  #allocation1 [shape = 'u32[72,128]{1,0:T(1,128)}', space=vmem, size = 0x9000, scoped, tag = 'internal scratch']
  #allocation2 [shape = 'f32[16,32]{1,0:T(8,128)}', space=vmem, size = 0x2000, scoped, tag = 'scratch operand']
  %s0 = inlined_call_operand.hbm [shape: f32[16,32], index: 0, kind: input, shape index: {}]
  %s1 = inlined_call_operand.hbm [shape: f32[16,32], index: 1, kind: input, shape index: {}]
  %s2 = inlined_call_operand.hbm [shape: f32[2,8,8], index: 2, kind: input, shape index: {}]
  %s3 = inlined_call_operand.hbm [shape: f32[2,8,8], index: 3, kind: input, shape index: {}]
  %s4 = inlined_call_operand.hbm [shape: f32[2,8,8], index: 4, kind: input, shape index: {}]
  %s5 = inlined_call_operand.hbm [shape: f32[2,8,8], index: 5, kind: input, shape index: {}]
  %s6 = inlined_call_operand.vmem [shape: f32[2,32,32], index: 6, kind: input, shape index: {}]
  %s7 = inlined_call_operand.vmem [shape: f32[2,32,32], index: 7, kind: input, shape index: {}]
  %s8 = inlined_call_operand.vmem [shape: f32[2,32,32], index: 8, kind: input, shape index: {}]
  %s9 = inlined_call_operand.hbm [shape: f32[2,32,32], index: 9, kind: input, shape index: {}]
  %s10 = inlined_call_operand.vmem [shape: f32[2,1,32], index: 10, kind: input, shape index: {}]
  %s11 = inlined_call_operand.vmem [shape: f32[2,1,32], index: 11, kind: input, shape index: {}]
  %s12 = inlined_call_operand.hbm [shape: f32[2,32,32], index: 12, kind: input, shape index: {}]
  %s13 = inlined_call_operand.hbm [shape: f32[2,32,32], index: 13, kind: input, shape index: {}]
  %s14 = inlined_call_operand.hbm [shape: f32[2,32,32], index: 14, kind: input, shape index: {}]
  %s15 = inlined_call_operand.hbm [shape: f32[2,32,32], index: 15, kind: input, shape index: {}]
  %s16 = inlined_call_operand.vmem [shape: f32[2,1,32], index: 16, kind: input, shape index: {}]
  %s17 = inlined_call_operand.vmem [shape: f32[2,1,32], index: 17, kind: input, shape index: {}]
  %s18 = inlined_call_operand.hbm [shape: f32[2,32,64], index: 18, kind: input, shape index: {}]
  %s19 = inlined_call_operand.vmem [shape: f32[2,64,32], index: 19, kind: input, shape index: {}]
  %s20 = inlined_call_operand.vmem [shape: f32[2,1,32], index: 20, kind: input, shape index: {}]
  %s21 = inlined_call_operand.vmem [shape: f32[2,1,32], index: 21, kind: input, shape index: {}]
  %s22 = inlined_call_operand.hbm [shape: f32[16,32], index: 22, kind: output, shape index: {0}]
  %s23 = inlined_call_operand.hbm [shape: f32[2,2,4,8,8], index: 23, kind: output, shape index: {1}]
  %s24 = inlined_call_operand.hbm [shape: f32[2,2,4,8,8], index: 24, kind: output, shape index: {2}]
  %25 = xla_tuple %s22, %s23, %s24
  %s26 = sld [smem:[#allocation0]]
  $region189: #{tpu_custom_call.1} parent=0
    _
  %s28 = ssub.s32 1, %s26
  %s29 = scalar_select 0, %s28, %s26
  $region1: #{tpu_custom_call.1} parent=0
    #allocation3 [shape = 'u8[8192]{0}', space=vmem, size = 0x2000, scoped, tag = 'input window, operand 0, single buffered']
    #allocation4 [shape = 's32[2]{0}', space=sflag, size = 0x8, scoped, tag = 'scoped memory for tpu_custom_call.1']
    #allocation5 [shape = 's32[2]{0}', space=sflag, size = 0x8, scoped, tag = 'scoped memory for tpu_custom_call.1']
    #allocation6 [shape = 'u8[8192]{0}', space=vmem, size = 0x2000, scoped, tag = 'input window, operand 1, single buffered']
    #allocation7 [shape = 's32[1]{0}', space=sflag, size = 0x4, scoped, tag = 'scoped memory for tpu_custom_call.1']
    #allocation8 [shape = 'u8[8192]{0}', space=vmem, size = 0x2000, scoped, tag = 'input window, operand 2, single buffered']
    #allocation9 [shape = 'u8[8192]{0}', space=vmem, size = 0x2000, scoped, tag = 'input window, operand 3, single buffered']
    #allocation10 [shape = 's32[1]{0}', space=sflag, size = 0x4, scoped, tag = 'scoped memory for tpu_custom_call.1']
    #allocation11 [shape = 'u8[8192]{0}', space=vmem, size = 0x2000, scoped, tag = 'input window, operand 4, single buffered']
    #allocation12 [shape = 'u8[8192]{0}', space=vmem, size = 0x2000, scoped, tag = 'input window, operand 5, single buffered']
    #allocation13 [shape = 's32[1]{0}', space=sflag, size = 0x4, scoped, tag = 'scoped memory for tpu_custom_call.1']
    #allocation14 [shape = 'u8[32768]{0}', space=vmem, size = 0x8000, scoped, tag = 'input window, operand 9']
    #allocation15 [shape = 'u8[32768]{0}', space=vmem, size = 0x8000, scoped, tag = 'input window, operand 12']
    #allocation16 [shape = 'u8[32768]{0}', space=vmem, size = 0x8000, scoped, tag = 'input window, operand 13']
    #allocation17 [shape = 'u8[32768]{0}', space=vmem, size = 0x8000, scoped, tag = 'input window, operand 14']
    #allocation18 [shape = 'u8[32768]{0}', space=vmem, size = 0x8000, scoped, tag = 'input window, operand 15']
    #allocation19 [shape = 'u8[32768]{0}', space=vmem, size = 0x8000, scoped, tag = 'input window, operand 18']
    #allocation20 [shape = 'u8[8192]{0}', space=vmem, size = 0x2000, scoped, tag = 'output window, operand 0, single buffered']
    #allocation21 [shape = 'u8[65536]{0}', space=vmem, size = 0x10000, scoped, tag = 'output window, operand 1']
    #allocation22 [shape = 's32[2]{0}', space=sflag, size = 0x8, scoped, tag = 'scoped memory for tpu_custom_call.1']
    #allocation23 [shape = 'u8[65536]{0}', space=vmem, size = 0x10000, scoped, tag = 'output window, operand 2']
    %30 = vsyncpa [#allocation4], 0
    %31 = vsyncpa [#allocation7], 0
    %32 = vsyncpa [#allocation10], 0
    %33 = vsyncpa [#allocation13], 0
    %34 = vsyncpa [#allocation5], 0
    %35 = vsyncpa [#allocation22], 0
    %s36 = scalar_lea.sflag [#allocation22], 1
    %37 = vsyncpa %s36, 0
    loop: start=0, step=1, limit=4
    $region2: #{tpu_custom_call.1} parent=1 // loop_pre_header
      _
    $region3: #{tpu_custom_call.1} parent=1 // loop_header
      %s39 = sphi 0, %s43
      %p40 = scmp.ge.s32.totalorder %s39, 4
      %s47 = sphi 0, %s47
      %s49 = sphi 0, %s47
      %s50 = sphi 0, %s49
      %s64 = sphi 0, %s50
      %s68 = sphi 0, %s68
      %s70 = sphi 0, %s68
      %s71 = sphi 0, %s70
      %s85 = sphi 0, %s71
      %s89 = sphi 0, %s89
      %s91 = sphi 0, %s89
      %s92 = sphi 0, %s91
      %s106 = sphi 0, %s92
      %s110 = sphi 0, %s110
      %s112 = sphi 0, %s110
      %s113 = sphi 0, %s112
      %s127 = sphi 0, %s113
      %s131 = sphi 0, %s131
      %s133 = sphi 0, %s131
      %s134 = sphi 0, %s133
      %s148 = sphi 0, %s134
      %s152 = sphi 0, %s152
      %s154 = sphi 0, %s152
      %s155 = sphi 0, %s154
      %s169 = sphi 0, %s155
      %s175 = sphi 0, %s177
      %s178 = sphi 0, %s175
      %s179 = sphi 0, %s178
      %s195 = sphi 0, %s179
      %s201 = sphi 0, %s203
      %s204 = sphi 0, %s201
      %s205 = sphi 0, %s204
      %s221 = sphi 0, %s205
      %s227 = sphi 0, %s229
      %s230 = sphi 0, %s227
      %s231 = sphi 0, %s230
      %s247 = sphi 0, %s231
      %s253 = sphi 0, %s255
      %s256 = sphi 0, %s253
      %s257 = sphi 0, %s256
      %s273 = sphi 0, %s257
      %s279 = sphi 0, %s281
      %s282 = sphi 0, %s279
      %s283 = sphi 0, %s282
      %s299 = sphi 0, %s283
      %s305 = sphi 0, %s307
      %s308 = sphi 0, %s305
      %s309 = sphi 0, %s308
      %s325 = sphi 0, %s309
      %s331 = sphi 0, %s333
      %s334 = sphi 0, %s331
      %s335 = sphi 0, %s334
      %s351 = sphi 0, %s335
      %s357 = sphi 0, %s359
      %s360 = sphi 0, %s357
      %s361 = sphi 0, %s360
      %s377 = sphi 0, %s361
      %s383 = sphi 0, %s385
      %s386 = sphi 0, %s383
      %s387 = sphi 0, %s386
      %s403 = sphi 0, %s387
      %s409 = sphi 0, %s411
      %s412 = sphi 0, %s409
      %s413 = sphi 0, %s412
      %s429 = sphi 0, %s413
      %s435 = sphi 0, %s437
      %s438 = sphi 0, %s435
      %s439 = sphi 0, %s438
      %s455 = sphi 0, %s439
      %s461 = sphi 0, %s463
      %s464 = sphi 0, %s461
      %s465 = sphi 0, %s464
      %s481 = sphi 0, %s465
      %s487 = sphi 0, %s489
      %s490 = sphi 0, %s487
      %s491 = sphi 0, %s490
      %s507 = sphi 0, %s491
      %s513 = sphi 0, %s515
      %s516 = sphi 0, %s513
      %s517 = sphi 0, %s516
      %s533 = sphi 0, %s517
      %s539 = sphi 0, %s541
      %s542 = sphi 0, %s539
      %s543 = sphi 0, %s542
      %s559 = sphi 0, %s543
      %s565 = sphi 0, %s567
      %s568 = sphi 0, %s565
      %s569 = sphi 0, %s568
      %s585 = sphi 0, %s569
      %s589 = sphi 0, %s589
      %s591 = sphi 0, %s589
      %s592 = sphi 0, %s591
      %s606 = sphi 0, %s592
      %s612 = sphi 0, %s614
      %s615 = sphi 0, %s612
      %s616 = sphi 0, %s615
      %s632 = sphi 0, %s616
      %s638 = sphi 0, %s640
      %s641 = sphi 0, %s638
      %s642 = sphi 0, %s641
      %s658 = sphi 0, %s642
    $region4: #{tpu_custom_call.1} parent=1 // loop_header_branch
      %42 = sbr.rel (%p40) target = $region8
    $region5: #{tpu_custom_call.1} parent=1 // loop_body
      %s44 = ssub.s32 %s39, 1
      %s45 = ssub.s32 %s39, 2
      %s46 = sadd.s32 %s39, 1
      %s48 = sadd.s32 %s47, 1
      %p51 = scmp.eq.s32.totalorder %s39, 1
      %p52 = scmp.ne.s32.totalorder %s47, %s49
      %p53 = scmp.eq.s32.totalorder %s39, 0
      %p54 = por %p52, %p53
      %p55 = scmp.ne.s32.totalorder %s47, %s49
      %p56 = scmp.eq.s32.totalorder %s44, 1
      %p57 = por %p55, %p56
      %p58 = scmp.ne.s32.totalorder %s49, %s50
      %p59 = scmp.eq.s32.totalorder %s44, 0
      %p60 = por %p58, %p59
      %p61 = scmp.ne.s32.totalorder %s49, %s50
      %p62 = scmp.eq.s32.totalorder %s45, 1
      %p63 = por %p61, %p62
      %p65 = scmp.ne.s32.totalorder %s50, %s64
      %p66 = scmp.eq.s32.totalorder %s45, 0
      %p67 = por %p65, %p66
      %s69 = sadd.s32 %s68, 1
      %p72 = scmp.eq.s32.totalorder %s39, 1
      %p73 = scmp.ne.s32.totalorder %s68, %s70
      %p74 = scmp.eq.s32.totalorder %s39, 0
      %p75 = por %p73, %p74
      %p76 = scmp.ne.s32.totalorder %s68, %s70
      %p77 = scmp.eq.s32.totalorder %s44, 1
      %p78 = por %p76, %p77
      %p79 = scmp.ne.s32.totalorder %s70, %s71
      %p80 = scmp.eq.s32.totalorder %s44, 0
      %p81 = por %p79, %p80
      %p82 = scmp.ne.s32.totalorder %s70, %s71
      %p83 = scmp.eq.s32.totalorder %s45, 1
      %p84 = por %p82, %p83
      %p86 = scmp.ne.s32.totalorder %s71, %s85
      %p87 = scmp.eq.s32.totalorder %s45, 0
      %p88 = por %p86, %p87
      %s90 = sadd.s32 %s89, 1
      %p93 = scmp.eq.s32.totalorder %s39, 1
      %p94 = scmp.ne.s32.totalorder %s89, %s91
      %p95 = scmp.eq.s32.totalorder %s39, 0
      %p96 = por %p94, %p95
      %p97 = scmp.ne.s32.totalorder %s89, %s91
      %p98 = scmp.eq.s32.totalorder %s44, 1
      %p99 = por %p97, %p98
      %p100 = scmp.ne.s32.totalorder %s91, %s92
      %p101 = scmp.eq.s32.totalorder %s44, 0
      %p102 = por %p100, %p101
      %p103 = scmp.ne.s32.totalorder %s91, %s92
      %p104 = scmp.eq.s32.totalorder %s45, 1
      %p105 = por %p103, %p104
      %p107 = scmp.ne.s32.totalorder %s92, %s106
      %p108 = scmp.eq.s32.totalorder %s45, 0
      %p109 = por %p107, %p108
      %s111 = sadd.s32 %s110, 1
      %p114 = scmp.eq.s32.totalorder %s39, 1
      %p115 = scmp.ne.s32.totalorder %s110, %s112
      %p116 = scmp.eq.s32.totalorder %s39, 0
      %p117 = por %p115, %p116
      %p118 = scmp.ne.s32.totalorder %s110, %s112
      %p119 = scmp.eq.s32.totalorder %s44, 1
      %p120 = por %p118, %p119
      %p121 = scmp.ne.s32.totalorder %s112, %s113
      %p122 = scmp.eq.s32.totalorder %s44, 0
      %p123 = por %p121, %p122
      %p124 = scmp.ne.s32.totalorder %s112, %s113
      %p125 = scmp.eq.s32.totalorder %s45, 1
      %p126 = por %p124, %p125
      %p128 = scmp.ne.s32.totalorder %s113, %s127
      %p129 = scmp.eq.s32.totalorder %s45, 0
      %p130 = por %p128, %p129
      %s132 = sadd.s32 %s131, 1
      %p135 = scmp.eq.s32.totalorder %s39, 1
      %p136 = scmp.ne.s32.totalorder %s131, %s133
      %p137 = scmp.eq.s32.totalorder %s39, 0
      %p138 = por %p136, %p137
      %p139 = scmp.ne.s32.totalorder %s131, %s133
      %p140 = scmp.eq.s32.totalorder %s44, 1
      %p141 = por %p139, %p140
      %p142 = scmp.ne.s32.totalorder %s133, %s134
      %p143 = scmp.eq.s32.totalorder %s44, 0
      %p144 = por %p142, %p143
      %p145 = scmp.ne.s32.totalorder %s133, %s134
      %p146 = scmp.eq.s32.totalorder %s45, 1
      %p147 = por %p145, %p146
      %p149 = scmp.ne.s32.totalorder %s134, %s148
      %p150 = scmp.eq.s32.totalorder %s45, 0
      %p151 = por %p149, %p150
      %s153 = sadd.s32 %s152, 1
      %p156 = scmp.eq.s32.totalorder %s39, 1
      %p157 = scmp.ne.s32.totalorder %s152, %s154
      %p158 = scmp.eq.s32.totalorder %s39, 0
      %p159 = por %p157, %p158
      %p160 = scmp.ne.s32.totalorder %s152, %s154
      %p161 = scmp.eq.s32.totalorder %s44, 1
      %p162 = por %p160, %p161
      %p163 = scmp.ne.s32.totalorder %s154, %s155
      %p164 = scmp.eq.s32.totalorder %s44, 0
      %p165 = por %p163, %p164
      %p166 = scmp.ne.s32.totalorder %s154, %s155
      %p167 = scmp.eq.s32.totalorder %s45, 1
      %p168 = por %p166, %p167
      %p170 = scmp.ne.s32.totalorder %s155, %s169
      %p171 = scmp.eq.s32.totalorder %s45, 0
      %p172 = por %p170, %p171
      %s173 = ssub.s32 %s39, %s46
      %p174 = scmp.eq.s32.totalorder %s173, 0
      %s176 = sadd.s32 %s175, 1
      %s177 = scalar_select %p174, %s175, %s176
      %p180 = pneg %p174
      %p181 = scmp.eq.s32.totalorder %s39, 1
      %p182 = por %p180, %p181
      %p183 = scmp.ne.s32.totalorder %s175, %s178
      %p184 = scmp.eq.s32.totalorder %s39, 0
      %p185 = por %p183, %p184
      %p186 = scmp.ne.s32.totalorder %s175, %s178
      %p187 = scmp.eq.s32.totalorder %s44, 1
      %p188 = por %p186, %p187
      %p189 = scmp.ne.s32.totalorder %s178, %s179
      %p190 = scmp.eq.s32.totalorder %s44, 0
      %p191 = por %p189, %p190
      %p192 = scmp.ne.s32.totalorder %s178, %s179
      %p193 = scmp.eq.s32.totalorder %s45, 1
      %p194 = por %p192, %p193
      %p196 = scmp.ne.s32.totalorder %s179, %s195
      %p197 = scmp.eq.s32.totalorder %s45, 0
      %p198 = por %p196, %p197
      %s199 = ssub.s32 %s39, %s46
      %p200 = scmp.eq.s32.totalorder %s199, 0
      %s202 = sadd.s32 %s201, 1
      %s203 = scalar_select %p200, %s201, %s202
      %p206 = pneg %p200
      %p207 = scmp.eq.s32.totalorder %s39, 1
      %p208 = por %p206, %p207
      %p209 = scmp.ne.s32.totalorder %s201, %s204
      %p210 = scmp.eq.s32.totalorder %s39, 0
      %p211 = por %p209, %p210
      %p212 = scmp.ne.s32.totalorder %s201, %s204
      %p213 = scmp.eq.s32.totalorder %s44, 1
      %p214 = por %p212, %p213
      %p215 = scmp.ne.s32.totalorder %s204, %s205
      %p216 = scmp.eq.s32.totalorder %s44, 0
      %p217 = por %p215, %p216
      %p218 = scmp.ne.s32.totalorder %s204, %s205
      %p219 = scmp.eq.s32.totalorder %s45, 1
      %p220 = por %p218, %p219
      %p222 = scmp.ne.s32.totalorder %s205, %s221
      %p223 = scmp.eq.s32.totalorder %s45, 0
      %p224 = por %p222, %p223
      %s225 = ssub.s32 %s39, %s46
      %p226 = scmp.eq.s32.totalorder %s225, 0
      %s228 = sadd.s32 %s227, 1
      %s229 = scalar_select %p226, %s227, %s228
      %p232 = pneg %p226
      %p233 = scmp.eq.s32.totalorder %s39, 1
      %p234 = por %p232, %p233
      %p235 = scmp.ne.s32.totalorder %s227, %s230
      %p236 = scmp.eq.s32.totalorder %s39, 0
      %p237 = por %p235, %p236
      %p238 = scmp.ne.s32.totalorder %s227, %s230
      %p239 = scmp.eq.s32.totalorder %s44, 1
      %p240 = por %p238, %p239
      %p241 = scmp.ne.s32.totalorder %s230, %s231
      %p242 = scmp.eq.s32.totalorder %s44, 0
      %p243 = por %p241, %p242
      %p244 = scmp.ne.s32.totalorder %s230, %s231
      %p245 = scmp.eq.s32.totalorder %s45, 1
      %p246 = por %p244, %p245
      %p248 = scmp.ne.s32.totalorder %s231, %s247
      %p249 = scmp.eq.s32.totalorder %s45, 0
      %p250 = por %p248, %p249
      %s251 = ssub.s32 %s39, %s46
      %p252 = scmp.eq.s32.totalorder %s251, 0
      %s254 = sadd.s32 %s253, 1
      %s255 = scalar_select %p252, %s253, %s254
      %p258 = pneg %p252
      %p259 = scmp.eq.s32.totalorder %s39, 1
      %p260 = por %p258, %p259
      %p261 = scmp.ne.s32.totalorder %s253, %s256
      %p262 = scmp.eq.s32.totalorder %s39, 0
      %p263 = por %p261, %p262
      %p264 = scmp.ne.s32.totalorder %s253, %s256
      %p265 = scmp.eq.s32.totalorder %s44, 1
      %p266 = por %p264, %p265
      %p267 = scmp.ne.s32.totalorder %s256, %s257
      %p268 = scmp.eq.s32.totalorder %s44, 0
      %p269 = por %p267, %p268
      %p270 = scmp.ne.s32.totalorder %s256, %s257
      %p271 = scmp.eq.s32.totalorder %s45, 1
      %p272 = por %p270, %p271
      %p274 = scmp.ne.s32.totalorder %s257, %s273
      %p275 = scmp.eq.s32.totalorder %s45, 0
      %p276 = por %p274, %p275
      %s277 = ssub.s32 %s39, %s46
      %p278 = scmp.eq.s32.totalorder %s277, 0
      %s280 = sadd.s32 %s279, 1
      %s281 = scalar_select %p278, %s279, %s280
      %p284 = pneg %p278
      %p285 = scmp.eq.s32.totalorder %s39, 1
      %p286 = por %p284, %p285
      %p287 = scmp.ne.s32.totalorder %s279, %s282
      %p288 = scmp.eq.s32.totalorder %s39, 0
      %p289 = por %p287, %p288
      %p290 = scmp.ne.s32.totalorder %s279, %s282
      %p291 = scmp.eq.s32.totalorder %s44, 1
      %p292 = por %p290, %p291
      %p293 = scmp.ne.s32.totalorder %s282, %s283
      %p294 = scmp.eq.s32.totalorder %s44, 0
      %p295 = por %p293, %p294
      %p296 = scmp.ne.s32.totalorder %s282, %s283
      %p297 = scmp.eq.s32.totalorder %s45, 1
      %p298 = por %p296, %p297
      %p300 = scmp.ne.s32.totalorder %s283, %s299
      %p301 = scmp.eq.s32.totalorder %s45, 0
      %p302 = por %p300, %p301
      %s303 = ssub.s32 %s39, %s46
      %p304 = scmp.eq.s32.totalorder %s303, 0
      %s306 = sadd.s32 %s305, 1
      %s307 = scalar_select %p304, %s305, %s306
      %p310 = pneg %p304
      %p311 = scmp.eq.s32.totalorder %s39, 1
      %p312 = por %p310, %p311
      %p313 = scmp.ne.s32.totalorder %s305, %s308
      %p314 = scmp.eq.s32.totalorder %s39, 0
      %p315 = por %p313, %p314
      %p316 = scmp.ne.s32.totalorder %s305, %s308
      %p317 = scmp.eq.s32.totalorder %s44, 1
      %p318 = por %p316, %p317
      %p319 = scmp.ne.s32.totalorder %s308, %s309
      %p320 = scmp.eq.s32.totalorder %s44, 0
      %p321 = por %p319, %p320
      %p322 = scmp.ne.s32.totalorder %s308, %s309
      %p323 = scmp.eq.s32.totalorder %s45, 1
      %p324 = por %p322, %p323
      %p326 = scmp.ne.s32.totalorder %s309, %s325
      %p327 = scmp.eq.s32.totalorder %s45, 0
      %p328 = por %p326, %p327
      %s329 = ssub.s32 %s39, %s46
      %p330 = scmp.eq.s32.totalorder %s329, 0
      %s332 = sadd.s32 %s331, 1
      %s333 = scalar_select %p330, %s331, %s332
      %p336 = pneg %p330
      %p337 = scmp.eq.s32.totalorder %s39, 1
      %p338 = por %p336, %p337
      %p339 = scmp.ne.s32.totalorder %s331, %s334
      %p340 = scmp.eq.s32.totalorder %s39, 0
      %p341 = por %p339, %p340
      %p342 = scmp.ne.s32.totalorder %s331, %s334
      %p343 = scmp.eq.s32.totalorder %s44, 1
      %p344 = por %p342, %p343
      %p345 = scmp.ne.s32.totalorder %s334, %s335
      %p346 = scmp.eq.s32.totalorder %s44, 0
      %p347 = por %p345, %p346
      %p348 = scmp.ne.s32.totalorder %s334, %s335
      %p349 = scmp.eq.s32.totalorder %s45, 1
      %p350 = por %p348, %p349
      %p352 = scmp.ne.s32.totalorder %s335, %s351
      %p353 = scmp.eq.s32.totalorder %s45, 0
      %p354 = por %p352, %p353
      %s355 = ssub.s32 %s39, %s46
      %p356 = scmp.eq.s32.totalorder %s355, 0
      %s358 = sadd.s32 %s357, 1
      %s359 = scalar_select %p356, %s357, %s358
      %p362 = pneg %p356
      %p363 = scmp.eq.s32.totalorder %s39, 1
      %p364 = por %p362, %p363
      %p365 = scmp.ne.s32.totalorder %s357, %s360
      %p366 = scmp.eq.s32.totalorder %s39, 0
      %p367 = por %p365, %p366
      %p368 = scmp.ne.s32.totalorder %s357, %s360
      %p369 = scmp.eq.s32.totalorder %s44, 1
      %p370 = por %p368, %p369
      %p371 = scmp.ne.s32.totalorder %s360, %s361
      %p372 = scmp.eq.s32.totalorder %s44, 0
      %p373 = por %p371, %p372
      %p374 = scmp.ne.s32.totalorder %s360, %s361
      %p375 = scmp.eq.s32.totalorder %s45, 1
      %p376 = por %p374, %p375
      %p378 = scmp.ne.s32.totalorder %s361, %s377
      %p379 = scmp.eq.s32.totalorder %s45, 0
      %p380 = por %p378, %p379
      %s381 = ssub.s32 %s39, %s46
      %p382 = scmp.eq.s32.totalorder %s381, 0
      %s384 = sadd.s32 %s383, 1
      %s385 = scalar_select %p382, %s383, %s384
      %p388 = pneg %p382
      %p389 = scmp.eq.s32.totalorder %s39, 1
      %p390 = por %p388, %p389
      %p391 = scmp.ne.s32.totalorder %s383, %s386
      %p392 = scmp.eq.s32.totalorder %s39, 0
      %p393 = por %p391, %p392
      %p394 = scmp.ne.s32.totalorder %s383, %s386
      %p395 = scmp.eq.s32.totalorder %s44, 1
      %p396 = por %p394, %p395
      %p397 = scmp.ne.s32.totalorder %s386, %s387
      %p398 = scmp.eq.s32.totalorder %s44, 0
      %p399 = por %p397, %p398
      %p400 = scmp.ne.s32.totalorder %s386, %s387
      %p401 = scmp.eq.s32.totalorder %s45, 1
      %p402 = por %p400, %p401
      %p404 = scmp.ne.s32.totalorder %s387, %s403
      %p405 = scmp.eq.s32.totalorder %s45, 0
      %p406 = por %p404, %p405
      %s407 = ssub.s32 %s39, %s46
      %p408 = scmp.eq.s32.totalorder %s407, 0
      %s410 = sadd.s32 %s409, 1
      %s411 = scalar_select %p408, %s409, %s410
      %p414 = pneg %p408
      %p415 = scmp.eq.s32.totalorder %s39, 1
      %p416 = por %p414, %p415
      %p417 = scmp.ne.s32.totalorder %s409, %s412
      %p418 = scmp.eq.s32.totalorder %s39, 0
      %p419 = por %p417, %p418
      %p420 = scmp.ne.s32.totalorder %s409, %s412
      %p421 = scmp.eq.s32.totalorder %s44, 1
      %p422 = por %p420, %p421
      %p423 = scmp.ne.s32.totalorder %s412, %s413
      %p424 = scmp.eq.s32.totalorder %s44, 0
      %p425 = por %p423, %p424
      %p426 = scmp.ne.s32.totalorder %s412, %s413
      %p427 = scmp.eq.s32.totalorder %s45, 1
      %p428 = por %p426, %p427
      %p430 = scmp.ne.s32.totalorder %s413, %s429
      %p431 = scmp.eq.s32.totalorder %s45, 0
      %p432 = por %p430, %p431
      %s433 = ssub.s32 %s39, %s46
      %p434 = scmp.eq.s32.totalorder %s433, 0
      %s436 = sadd.s32 %s435, 1
      %s437 = scalar_select %p434, %s435, %s436
      %p440 = pneg %p434
      %p441 = scmp.eq.s32.totalorder %s39, 1
      %p442 = por %p440, %p441
      %p443 = scmp.ne.s32.totalorder %s435, %s438
      %p444 = scmp.eq.s32.totalorder %s39, 0
      %p445 = por %p443, %p444
      %p446 = scmp.ne.s32.totalorder %s435, %s438
      %p447 = scmp.eq.s32.totalorder %s44, 1
      %p448 = por %p446, %p447
      %p449 = scmp.ne.s32.totalorder %s438, %s439
      %p450 = scmp.eq.s32.totalorder %s44, 0
      %p451 = por %p449, %p450
      %p452 = scmp.ne.s32.totalorder %s438, %s439
      %p453 = scmp.eq.s32.totalorder %s45, 1
      %p454 = por %p452, %p453
      %p456 = scmp.ne.s32.totalorder %s439, %s455
      %p457 = scmp.eq.s32.totalorder %s45, 0
      %p458 = por %p456, %p457
      %s459 = ssub.s32 %s39, %s46
      %p460 = scmp.eq.s32.totalorder %s459, 0
      %s462 = sadd.s32 %s461, 1
      %s463 = scalar_select %p460, %s461, %s462
      %p466 = pneg %p460
      %p467 = scmp.eq.s32.totalorder %s39, 1
      %p468 = por %p466, %p467
      %p469 = scmp.ne.s32.totalorder %s461, %s464
      %p470 = scmp.eq.s32.totalorder %s39, 0
      %p471 = por %p469, %p470
      %p472 = scmp.ne.s32.totalorder %s461, %s464
      %p473 = scmp.eq.s32.totalorder %s44, 1
      %p474 = por %p472, %p473
      %p475 = scmp.ne.s32.totalorder %s464, %s465
      %p476 = scmp.eq.s32.totalorder %s44, 0
      %p477 = por %p475, %p476
      %p478 = scmp.ne.s32.totalorder %s464, %s465
      %p479 = scmp.eq.s32.totalorder %s45, 1
      %p480 = por %p478, %p479
      %p482 = scmp.ne.s32.totalorder %s465, %s481
      %p483 = scmp.eq.s32.totalorder %s45, 0
      %p484 = por %p482, %p483
      %s485 = ssub.s32 %s39, %s46
      %p486 = scmp.eq.s32.totalorder %s485, 0
      %s488 = sadd.s32 %s487, 1
      %s489 = scalar_select %p486, %s487, %s488
      %p492 = pneg %p486
      %p493 = scmp.eq.s32.totalorder %s39, 1
      %p494 = por %p492, %p493
      %p495 = scmp.ne.s32.totalorder %s487, %s490
      %p496 = scmp.eq.s32.totalorder %s39, 0
      %p497 = por %p495, %p496
      %p498 = scmp.ne.s32.totalorder %s487, %s490
      %p499 = scmp.eq.s32.totalorder %s44, 1
      %p500 = por %p498, %p499
      %p501 = scmp.ne.s32.totalorder %s490, %s491
      %p502 = scmp.eq.s32.totalorder %s44, 0
      %p503 = por %p501, %p502
      %p504 = scmp.ne.s32.totalorder %s490, %s491
      %p505 = scmp.eq.s32.totalorder %s45, 1
      %p506 = por %p504, %p505
      %p508 = scmp.ne.s32.totalorder %s491, %s507
      %p509 = scmp.eq.s32.totalorder %s45, 0
      %p510 = por %p508, %p509
      %s511 = ssub.s32 %s39, %s46
      %p512 = scmp.eq.s32.totalorder %s511, 0
      %s514 = sadd.s32 %s513, 1
      %s515 = scalar_select %p512, %s513, %s514
      %p518 = pneg %p512
      %p519 = scmp.eq.s32.totalorder %s39, 1
      %p520 = por %p518, %p519
      %p521 = scmp.ne.s32.totalorder %s513, %s516
      %p522 = scmp.eq.s32.totalorder %s39, 0
      %p523 = por %p521, %p522
      %p524 = scmp.ne.s32.totalorder %s513, %s516
      %p525 = scmp.eq.s32.totalorder %s44, 1
      %p526 = por %p524, %p525
      %p527 = scmp.ne.s32.totalorder %s516, %s517
      %p528 = scmp.eq.s32.totalorder %s44, 0
      %p529 = por %p527, %p528
      %p530 = scmp.ne.s32.totalorder %s516, %s517
      %p531 = scmp.eq.s32.totalorder %s45, 1
      %p532 = por %p530, %p531
      %p534 = scmp.ne.s32.totalorder %s517, %s533
      %p535 = scmp.eq.s32.totalorder %s45, 0
      %p536 = por %p534, %p535
      %s537 = ssub.s32 %s39, %s46
      %p538 = scmp.eq.s32.totalorder %s537, 0
      %s540 = sadd.s32 %s539, 1
      %s541 = scalar_select %p538, %s539, %s540
      %p544 = pneg %p538
      %p545 = scmp.eq.s32.totalorder %s39, 1
      %p546 = por %p544, %p545
      %p547 = scmp.ne.s32.totalorder %s539, %s542
      %p548 = scmp.eq.s32.totalorder %s39, 0
      %p549 = por %p547, %p548
      %p550 = scmp.ne.s32.totalorder %s539, %s542
      %p551 = scmp.eq.s32.totalorder %s44, 1
      %p552 = por %p550, %p551
      %p553 = scmp.ne.s32.totalorder %s542, %s543
      %p554 = scmp.eq.s32.totalorder %s44, 0
      %p555 = por %p553, %p554
      %p556 = scmp.ne.s32.totalorder %s542, %s543
      %p557 = scmp.eq.s32.totalorder %s45, 1
      %p558 = por %p556, %p557
      %p560 = scmp.ne.s32.totalorder %s543, %s559
      %p561 = scmp.eq.s32.totalorder %s45, 0
      %p562 = por %p560, %p561
      %s563 = ssub.s32 %s39, %s46
      %p564 = scmp.eq.s32.totalorder %s563, 0
      %s566 = sadd.s32 %s565, 1
      %s567 = scalar_select %p564, %s565, %s566
      %p570 = pneg %p564
      %p571 = scmp.eq.s32.totalorder %s39, 1
      %p572 = por %p570, %p571
      %p573 = scmp.ne.s32.totalorder %s565, %s568
      %p574 = scmp.eq.s32.totalorder %s39, 0
      %p575 = por %p573, %p574
      %p576 = scmp.ne.s32.totalorder %s565, %s568
      %p577 = scmp.eq.s32.totalorder %s44, 1
      %p578 = por %p576, %p577
      %p579 = scmp.ne.s32.totalorder %s568, %s569
      %p580 = scmp.eq.s32.totalorder %s44, 0
      %p581 = por %p579, %p580
      %p582 = scmp.ne.s32.totalorder %s568, %s569
      %p583 = scmp.eq.s32.totalorder %s45, 1
      %p584 = por %p582, %p583
      %p586 = scmp.ne.s32.totalorder %s569, %s585
      %p587 = scmp.eq.s32.totalorder %s45, 0
      %p588 = por %p586, %p587
      %s590 = sadd.s32 %s589, 1
      %p593 = scmp.eq.s32.totalorder %s39, 1
      %p594 = scmp.ne.s32.totalorder %s589, %s591
      %p595 = scmp.eq.s32.totalorder %s39, 0
      %p596 = por %p594, %p595
      %p597 = scmp.ne.s32.totalorder %s589, %s591
      %p598 = scmp.eq.s32.totalorder %s44, 1
      %p599 = por %p597, %p598
      %p600 = scmp.ne.s32.totalorder %s591, %s592
      %p601 = scmp.eq.s32.totalorder %s44, 0
      %p602 = por %p600, %p601
      %p603 = scmp.ne.s32.totalorder %s591, %s592
      %p604 = scmp.eq.s32.totalorder %s45, 1
      %p605 = por %p603, %p604
      %p607 = scmp.ne.s32.totalorder %s592, %s606
      %p608 = scmp.eq.s32.totalorder %s45, 0
      %p609 = por %p607, %p608
      %s610 = ssub.s32 %s39, %s46
      %p611 = scmp.eq.s32.totalorder %s610, 0
      %s613 = sadd.s32 %s612, 1
      %s614 = scalar_select %p611, %s612, %s613
      %p617 = pneg %p611
      %p618 = scmp.eq.s32.totalorder %s39, 1
      %p619 = por %p617, %p618
      %p620 = scmp.ne.s32.totalorder %s612, %s615
      %p621 = scmp.eq.s32.totalorder %s39, 0
      %p622 = por %p620, %p621
      %p623 = scmp.ne.s32.totalorder %s612, %s615
      %p624 = scmp.eq.s32.totalorder %s44, 1
      %p625 = por %p623, %p624
      %p626 = scmp.ne.s32.totalorder %s615, %s616
      %p627 = scmp.eq.s32.totalorder %s44, 0
      %p628 = por %p626, %p627
      %p629 = scmp.ne.s32.totalorder %s615, %s616
      %p630 = scmp.eq.s32.totalorder %s45, 1
      %p631 = por %p629, %p630
      %p633 = scmp.ne.s32.totalorder %s616, %s632
      %p634 = scmp.eq.s32.totalorder %s45, 0
      %p635 = por %p633, %p634
      %s636 = ssub.s32 %s39, %s46
      %p637 = scmp.eq.s32.totalorder %s636, 0
      %s639 = sadd.s32 %s638, 1
      %s640 = scalar_select %p637, %s638, %s639
      %p643 = pneg %p637
      %p644 = scmp.eq.s32.totalorder %s39, 1
      %p645 = por %p643, %p644
      %p646 = scmp.ne.s32.totalorder %s638, %s641
      %p647 = scmp.eq.s32.totalorder %s39, 0
      %p648 = por %p646, %p647
      %p649 = scmp.ne.s32.totalorder %s638, %s641
      %p650 = scmp.eq.s32.totalorder %s44, 1
      %p651 = por %p649, %p650
      %p652 = scmp.ne.s32.totalorder %s641, %s642
      %p653 = scmp.eq.s32.totalorder %s44, 0
      %p654 = por %p652, %p653
      %p655 = scmp.ne.s32.totalorder %s641, %s642
      %p656 = scmp.eq.s32.totalorder %s45, 1
      %p657 = por %p655, %p656
      %p659 = scmp.ne.s32.totalorder %s642, %s658
      %p660 = scmp.eq.s32.totalorder %s45, 0
      %p661 = por %p659, %p660
      %p662 = scmp.le.s32.totalorder 1, %s39
      %p663 = scmp.lt.s32.totalorder %s39, 3
      %p664 = pnand %p662, %p663
      %p665 = pneg %p664
      // Predicated region
      $region9: #{tpu_custom_call.1} parent=5 // pred_check
        _
      $region10: #{tpu_custom_call.1} parent=5 // pred_check_branch
        %667 = sbr.rel (%p664) target = $region12
      $region11: #{tpu_custom_call.1} parent=5 // pred_region
        %s668 = ssub.s32 %s39, 1
        // Predicated region
        $region13: #{tpu_custom_call.1} parent=11 // pred_check
          %p669 = pneg %p60
        $region14: #{tpu_custom_call.1} parent=11 // pred_check_branch
          %671 = sbr.rel (%p669) target = $region16
        $region15: #{tpu_custom_call.1} parent=11 // pred_region
          %673 = vsyncadd [#allocation4], 0
          %s674 = sshll.u32 %s0, 4
          %s675 = int_to_ptr.hbm [resolvable:$true] %s674
          %s676 = sshll.u32 [#allocation3], 4
          %s677 = int_to_ptr.vmem [resolvable:$true] %s676
          %682 = dma.hbm_to_vmem [thread:$0]  %s675, 256, %s677, [#allocation4], 128, 128, 8
        $region16: #{tpu_custom_call.1} parent=11 // pred_fallthru
          _
        // Predicated region
        $region17: #{tpu_custom_call.1} parent=11 // pred_check
          %p683 = pneg %p81
        $region18: #{tpu_custom_call.1} parent=11 // pred_check_branch
          %685 = sbr.rel (%p683) target = $region20
        $region19: #{tpu_custom_call.1} parent=11 // pred_region
          %687 = vsyncadd [#allocation7], 0
          %s688 = sshll.u32 %s1, 4
          %s689 = int_to_ptr.hbm [resolvable:$true] %s688
          %s690 = sshll.u32 [#allocation6], 4
          %s691 = int_to_ptr.vmem [resolvable:$true] %s690
          %696 = dma.hbm_to_vmem [thread:$0]  %s689, 256, %s691, [#allocation7], 128, 128, 8
        $region20: #{tpu_custom_call.1} parent=11 // pred_fallthru
          _
        // Predicated region
        $region21: #{tpu_custom_call.1} parent=11 // pred_check
          %p697 = pneg %p102
        $region22: #{tpu_custom_call.1} parent=11 // pred_check_branch
          %699 = sbr.rel (%p697) target = $region24
        $region23: #{tpu_custom_call.1} parent=11 // pred_region
          %701 = vsyncadd [#allocation7], 0
          %s702 = sshll.u32 %s2, 4
          %s703 = int_to_ptr.hbm [resolvable:$true] %s702
          %s704 = sshll.u32 [#allocation8], 4
          %s705 = int_to_ptr.vmem [resolvable:$true] %s704
          %710 = dma.hbm_to_vmem [thread:$0]  %s703, 256, %s705, [#allocation7], 128, 128, 8
        $region24: #{tpu_custom_call.1} parent=11 // pred_fallthru
          _
        // Predicated region
        $region25: #{tpu_custom_call.1} parent=11 // pred_check
          %p711 = pneg %p123
        $region26: #{tpu_custom_call.1} parent=11 // pred_check_branch
          %713 = sbr.rel (%p711) target = $region28
        $region27: #{tpu_custom_call.1} parent=11 // pred_region
          %715 = vsyncadd [#allocation10], 0
          %s716 = sshll.u32 %s3, 4
          %s717 = int_to_ptr.hbm [resolvable:$true] %s716
          %s718 = sshll.u32 [#allocation9], 4
          %s719 = int_to_ptr.vmem [resolvable:$true] %s718
          %724 = dma.hbm_to_vmem [thread:$0]  %s717, 256, %s719, [#allocation10], 128, 128, 8
        $region28: #{tpu_custom_call.1} parent=11 // pred_fallthru
          _
        // Predicated region
        $region29: #{tpu_custom_call.1} parent=11 // pred_check
          %p725 = pneg %p144
        $region30: #{tpu_custom_call.1} parent=11 // pred_check_branch
          %727 = sbr.rel (%p725) target = $region32
        $region31: #{tpu_custom_call.1} parent=11 // pred_region
          %729 = vsyncadd [#allocation10], 0
          %s730 = sshll.u32 %s4, 4
          %s731 = int_to_ptr.hbm [resolvable:$true] %s730
          %s732 = sshll.u32 [#allocation11], 4
          %s733 = int_to_ptr.vmem [resolvable:$true] %s732
          %738 = dma.hbm_to_vmem [thread:$0]  %s731, 256, %s733, [#allocation10], 128, 128, 8
        $region32: #{tpu_custom_call.1} parent=11 // pred_fallthru
          _
        // Predicated region
        $region33: #{tpu_custom_call.1} parent=11 // pred_check
          %p739 = pneg %p165
        $region34: #{tpu_custom_call.1} parent=11 // pred_check_branch
          %741 = sbr.rel (%p739) target = $region36
        $region35: #{tpu_custom_call.1} parent=11 // pred_region
          %743 = vsyncadd [#allocation13], 0
          %s744 = sshll.u32 %s5, 4
          %s745 = int_to_ptr.hbm [resolvable:$true] %s744
          %s746 = sshll.u32 [#allocation12], 4
          %s747 = int_to_ptr.vmem [resolvable:$true] %s746
          %752 = dma.hbm_to_vmem [thread:$0]  %s745, 256, %s747, [#allocation13], 128, 128, 8
        $region36: #{tpu_custom_call.1} parent=11 // pred_fallthru
          _
      $region12: #{tpu_custom_call.1} parent=5 // pred_fallthru
        _
      %p753 = scmp.lt.s32.totalorder %s39, 2
      // Predicated region
      $region37: #{tpu_custom_call.1} parent=5 // pred_check
        %p754 = pneg %p753
      $region38: #{tpu_custom_call.1} parent=5 // pred_check_branch
        %756 = sbr.rel (%p754) target = $region40
      $region39: #{tpu_custom_call.1} parent=5 // pred_region
        // Predicated region
        $region41: #{tpu_custom_call.1} parent=39 // pred_check
          %p757 = pneg %p185
        $region42: #{tpu_custom_call.1} parent=39 // pred_check_branch
          %759 = sbr.rel (%p757) target = $region44
        $region43: #{tpu_custom_call.1} parent=39 // pred_region
          %p760 = scmp.lt.s32.totalorder %s39, 1
          %s761 = scalar_select %p760, %s39, 1
          %s762 = smul.addr %s761, 4
          %s763 = smul.addr %s762, 8
          %s764 = scalar_lea.vmem %s6, %s763
        $region44: #{tpu_custom_call.1} parent=39 // pred_fallthru
          _
        // Predicated region
        $region45: #{tpu_custom_call.1} parent=39 // pred_check
          %p765 = pneg %p211
        $region46: #{tpu_custom_call.1} parent=39 // pred_check_branch
          %767 = sbr.rel (%p765) target = $region48
        $region47: #{tpu_custom_call.1} parent=39 // pred_region
          %p768 = scmp.lt.s32.totalorder %s39, 1
          %s769 = scalar_select %p768, %s39, 1
          %s770 = smul.addr %s769, 4
          %s771 = smul.addr %s770, 8
          %s772 = scalar_lea.vmem %s7, %s771
        $region48: #{tpu_custom_call.1} parent=39 // pred_fallthru
          _
        // Predicated region
        $region49: #{tpu_custom_call.1} parent=39 // pred_check
          %p773 = pneg %p237
        $region50: #{tpu_custom_call.1} parent=39 // pred_check_branch
          %775 = sbr.rel (%p773) target = $region52
        $region51: #{tpu_custom_call.1} parent=39 // pred_region
          %p776 = scmp.lt.s32.totalorder %s39, 1
          %s777 = scalar_select %p776, %s39, 1
          %s778 = smul.addr %s777, 4
          %s779 = smul.addr %s778, 8
          %s780 = scalar_lea.vmem %s8, %s779
        $region52: #{tpu_custom_call.1} parent=39 // pred_fallthru
          _
        // Predicated region
        $region53: #{tpu_custom_call.1} parent=39 // pred_check
          %p781 = pneg %p263
        $region54: #{tpu_custom_call.1} parent=39 // pred_check_branch
          %783 = sbr.rel (%p781) target = $region56
        $region55: #{tpu_custom_call.1} parent=39 // pred_region
          %s784 = sand.u32 %s39, 1
          %s785 = scalar_lea.sflag [#allocation4], %s784
          %s786 = sand.u32 %s253, 1
          %s787 = smul.addr %s786, 32
          %s788 = scalar_lea.vmem [#allocation14], %s787
          %790 = vsyncadd %s785, 0
          %s791 = smul.addr %s39, 4
          %s792 = smul.addr %s791, 8
          %s793 = scalar_lea.hbm %s9, %s792
          %s794 = sshll.u32 %s793, 4
          %s795 = int_to_ptr.hbm [resolvable:$true] %s794
          %s796 = sshll.u32 %s788, 4
          %s797 = int_to_ptr.vmem [resolvable:$true] %s796
          %802 = dma.hbm_to_vmem [thread:$0]  %s795, 512, %s797, %s785, 128, 128, 8
        $region56: #{tpu_custom_call.1} parent=39 // pred_fallthru
          _
        // Predicated region
        $region57: #{tpu_custom_call.1} parent=39 // pred_check
          %p803 = pneg %p289
        $region58: #{tpu_custom_call.1} parent=39 // pred_check_branch
          %805 = sbr.rel (%p803) target = $region60
        $region59: #{tpu_custom_call.1} parent=39 // pred_region
          %p806 = scmp.lt.s32.totalorder %s39, 1
          %s807 = scalar_select %p806, %s39, 1
          %s808 = scalar_lea.vmem %s10, %s807
        $region60: #{tpu_custom_call.1} parent=39 // pred_fallthru
          _
        // Predicated region
        $region61: #{tpu_custom_call.1} parent=39 // pred_check
          %p809 = pneg %p315
        $region62: #{tpu_custom_call.1} parent=39 // pred_check_branch
          %811 = sbr.rel (%p809) target = $region64
        $region63: #{tpu_custom_call.1} parent=39 // pred_region
          %p812 = scmp.lt.s32.totalorder %s39, 1
          %s813 = scalar_select %p812, %s39, 1
          %s814 = scalar_lea.vmem %s11, %s813
        $region64: #{tpu_custom_call.1} parent=39 // pred_fallthru
          _
        // Predicated region
        $region65: #{tpu_custom_call.1} parent=39 // pred_check
          %p815 = pneg %p341
        $region66: #{tpu_custom_call.1} parent=39 // pred_check_branch
          %817 = sbr.rel (%p815) target = $region68
        $region67: #{tpu_custom_call.1} parent=39 // pred_region
          %s818 = sand.u32 %s39, 1
          %s819 = scalar_lea.sflag [#allocation4], %s818
          %s820 = sand.u32 %s331, 1
          %s821 = smul.addr %s820, 32
          %s822 = scalar_lea.vmem [#allocation15], %s821
          %824 = vsyncadd %s819, 0
          %s825 = smul.addr %s39, 4
          %s826 = smul.addr %s825, 8
          %s827 = scalar_lea.hbm %s12, %s826
          %s828 = sshll.u32 %s827, 4
          %s829 = int_to_ptr.hbm [resolvable:$true] %s828
          %s830 = sshll.u32 %s822, 4
          %s831 = int_to_ptr.vmem [resolvable:$true] %s830
          %836 = dma.hbm_to_vmem [thread:$0]  %s829, 512, %s831, %s819, 128, 128, 8
        $region68: #{tpu_custom_call.1} parent=39 // pred_fallthru
          _
        // Predicated region
        $region69: #{tpu_custom_call.1} parent=39 // pred_check
          %p837 = pneg %p367
        $region70: #{tpu_custom_call.1} parent=39 // pred_check_branch
          %839 = sbr.rel (%p837) target = $region72
        $region71: #{tpu_custom_call.1} parent=39 // pred_region
          %s840 = sand.u32 %s39, 1
          %s841 = scalar_lea.sflag [#allocation4], %s840
          %s842 = sand.u32 %s357, 1
          %s843 = smul.addr %s842, 32
          %s844 = scalar_lea.vmem [#allocation16], %s843
          %846 = vsyncadd %s841, 0
          %s847 = smul.addr %s39, 4
          %s848 = smul.addr %s847, 8
          %s849 = scalar_lea.hbm %s13, %s848
          %s850 = sshll.u32 %s849, 4
          %s851 = int_to_ptr.hbm [resolvable:$true] %s850
          %s852 = sshll.u32 %s844, 4
          %s853 = int_to_ptr.vmem [resolvable:$true] %s852
          %858 = dma.hbm_to_vmem [thread:$0]  %s851, 512, %s853, %s841, 128, 128, 8
        $region72: #{tpu_custom_call.1} parent=39 // pred_fallthru
          _
        // Predicated region
        $region73: #{tpu_custom_call.1} parent=39 // pred_check
          %p859 = pneg %p393
        $region74: #{tpu_custom_call.1} parent=39 // pred_check_branch
          %861 = sbr.rel (%p859) target = $region76
        $region75: #{tpu_custom_call.1} parent=39 // pred_region
          %s862 = sand.u32 %s39, 1
          %s863 = scalar_lea.sflag [#allocation4], %s862
          %s864 = sand.u32 %s383, 1
          %s865 = smul.addr %s864, 32
          %s866 = scalar_lea.vmem [#allocation17], %s865
          %868 = vsyncadd %s863, 0
          %s869 = smul.addr %s39, 4
          %s870 = smul.addr %s869, 8
          %s871 = scalar_lea.hbm %s14, %s870
          %s872 = sshll.u32 %s871, 4
          %s873 = int_to_ptr.hbm [resolvable:$true] %s872
          %s874 = sshll.u32 %s866, 4
          %s875 = int_to_ptr.vmem [resolvable:$true] %s874
          %880 = dma.hbm_to_vmem [thread:$0]  %s873, 512, %s875, %s863, 128, 128, 8
        $region76: #{tpu_custom_call.1} parent=39 // pred_fallthru
          _
        // Predicated region
        $region77: #{tpu_custom_call.1} parent=39 // pred_check
          %p881 = pneg %p419
        $region78: #{tpu_custom_call.1} parent=39 // pred_check_branch
          %883 = sbr.rel (%p881) target = $region80
        $region79: #{tpu_custom_call.1} parent=39 // pred_region
          %s884 = sand.u32 %s39, 1
          %s885 = scalar_lea.sflag [#allocation4], %s884
          %s886 = sand.u32 %s409, 1
          %s887 = smul.addr %s886, 32
          %s888 = scalar_lea.vmem [#allocation18], %s887
          %890 = vsyncadd %s885, 0
          %s891 = smul.addr %s39, 4
          %s892 = smul.addr %s891, 8
          %s893 = scalar_lea.hbm %s15, %s892
          %s894 = sshll.u32 %s893, 4
          %s895 = int_to_ptr.hbm [resolvable:$true] %s894
          %s896 = sshll.u32 %s888, 4
          %s897 = int_to_ptr.vmem [resolvable:$true] %s896
          %902 = dma.hbm_to_vmem [thread:$0]  %s895, 512, %s897, %s885, 128, 128, 8
        $region80: #{tpu_custom_call.1} parent=39 // pred_fallthru
          _
        // Predicated region
        $region81: #{tpu_custom_call.1} parent=39 // pred_check
          %p903 = pneg %p445
        $region82: #{tpu_custom_call.1} parent=39 // pred_check_branch
          %905 = sbr.rel (%p903) target = $region84
        $region83: #{tpu_custom_call.1} parent=39 // pred_region
          %p906 = scmp.lt.s32.totalorder %s39, 1
          %s907 = scalar_select %p906, %s39, 1
          %s908 = scalar_lea.vmem %s16, %s907
        $region84: #{tpu_custom_call.1} parent=39 // pred_fallthru
          _
        // Predicated region
        $region85: #{tpu_custom_call.1} parent=39 // pred_check
          %p909 = pneg %p471
        $region86: #{tpu_custom_call.1} parent=39 // pred_check_branch
          %911 = sbr.rel (%p909) target = $region88
        $region87: #{tpu_custom_call.1} parent=39 // pred_region
          %p912 = scmp.lt.s32.totalorder %s39, 1
          %s913 = scalar_select %p912, %s39, 1
          %s914 = scalar_lea.vmem %s17, %s913
        $region88: #{tpu_custom_call.1} parent=39 // pred_fallthru
          _
        // Predicated region
        $region89: #{tpu_custom_call.1} parent=39 // pred_check
          %p915 = pneg %p497
        $region90: #{tpu_custom_call.1} parent=39 // pred_check_branch
          %917 = sbr.rel (%p915) target = $region92
        $region91: #{tpu_custom_call.1} parent=39 // pred_region
          %s918 = sand.u32 %s39, 1
          %s919 = scalar_lea.sflag [#allocation4], %s918
          %s920 = sand.u32 %s487, 1
          %s921 = smul.addr %s920, 32
          %s922 = scalar_lea.vmem [#allocation19], %s921
          %924 = vsyncadd %s919, 0
          %s925 = smul.addr %s39, 4
          %s926 = smul.addr %s925, 8
          %s927 = scalar_lea.hbm %s18, %s926
          %s928 = sshll.u32 %s927, 4
          %s929 = int_to_ptr.hbm [resolvable:$true] %s928
          %s930 = sshll.u32 %s922, 4
          %s931 = int_to_ptr.vmem [resolvable:$true] %s930
          %936 = dma.hbm_to_vmem [thread:$0]  %s929, 512, %s931, %s919, 128, 128, 8
        $region92: #{tpu_custom_call.1} parent=39 // pred_fallthru
          _
        // Predicated region
        $region93: #{tpu_custom_call.1} parent=39 // pred_check
          %p937 = pneg %p523
        $region94: #{tpu_custom_call.1} parent=39 // pred_check_branch
          %939 = sbr.rel (%p937) target = $region96
        $region95: #{tpu_custom_call.1} parent=39 // pred_region
          %p940 = scmp.lt.s32.totalorder %s39, 1
          %s941 = scalar_select %p940, %s39, 1
          %s942 = smul.addr %s941, 8
          %s943 = smul.addr %s942, 8
          %s944 = scalar_lea.vmem %s19, %s943
        $region96: #{tpu_custom_call.1} parent=39 // pred_fallthru
          _
        // Predicated region
        $region97: #{tpu_custom_call.1} parent=39 // pred_check
          %p945 = pneg %p549
        $region98: #{tpu_custom_call.1} parent=39 // pred_check_branch
          %947 = sbr.rel (%p945) target = $region100
        $region99: #{tpu_custom_call.1} parent=39 // pred_region
          %p948 = scmp.lt.s32.totalorder %s39, 1
          %s949 = scalar_select %p948, %s39, 1
          %s950 = scalar_lea.vmem %s20, %s949
        $region100: #{tpu_custom_call.1} parent=39 // pred_fallthru
          _
        // Predicated region
        $region101: #{tpu_custom_call.1} parent=39 // pred_check
          %p951 = pneg %p575
        $region102: #{tpu_custom_call.1} parent=39 // pred_check_branch
          %953 = sbr.rel (%p951) target = $region104
        $region103: #{tpu_custom_call.1} parent=39 // pred_region
          %p954 = scmp.lt.s32.totalorder %s39, 1
          %s955 = scalar_select %p954, %s39, 1
          %s956 = scalar_lea.vmem %s21, %s955
        $region104: #{tpu_custom_call.1} parent=39 // pred_fallthru
          _
      $region40: #{tpu_custom_call.1} parent=5 // pred_fallthru
        _
      %p957 = scmp.le.s32.totalorder 1, %s39
      %p958 = scmp.lt.s32.totalorder %s39, 3
      %p959 = pnand %p957, %p958
      %p960 = pneg %p959
      // Predicated region
      $region105: #{tpu_custom_call.1} parent=5 // pred_check
        _
      $region106: #{tpu_custom_call.1} parent=5 // pred_check_branch
        %962 = sbr.rel (%p959) target = $region108
      $region107: #{tpu_custom_call.1} parent=5 // pred_region
        %s963 = ssub.s32 %s39, 1
        // Predicated region
        $region109: #{tpu_custom_call.1} parent=107 // pred_check
          %p964 = pneg %p60
        $region110: #{tpu_custom_call.1} parent=107 // pred_check_branch
          %966 = sbr.rel (%p964) target = $region112
        $region111: #{tpu_custom_call.1} parent=107 // pred_region
          %968 = dma.done [#allocation4], 256
        $region112: #{tpu_custom_call.1} parent=107 // pred_fallthru
          _
        // Predicated region
        $region113: #{tpu_custom_call.1} parent=107 // pred_check
          %p969 = pneg %p81
        $region114: #{tpu_custom_call.1} parent=107 // pred_check_branch
          %971 = sbr.rel (%p969) target = $region116
        $region115: #{tpu_custom_call.1} parent=107 // pred_region
          %973 = dma.done [#allocation7], 256
        $region116: #{tpu_custom_call.1} parent=107 // pred_fallthru
          _
        // Predicated region
        $region117: #{tpu_custom_call.1} parent=107 // pred_check
          %p974 = pneg %p102
        $region118: #{tpu_custom_call.1} parent=107 // pred_check_branch
          %976 = sbr.rel (%p974) target = $region120
        $region119: #{tpu_custom_call.1} parent=107 // pred_region
          %978 = dma.done [#allocation7], 256
        $region120: #{tpu_custom_call.1} parent=107 // pred_fallthru
          _
        // Predicated region
        $region121: #{tpu_custom_call.1} parent=107 // pred_check
          %p979 = pneg %p123
        $region122: #{tpu_custom_call.1} parent=107 // pred_check_branch
          %981 = sbr.rel (%p979) target = $region124
        $region123: #{tpu_custom_call.1} parent=107 // pred_region
          %983 = dma.done [#allocation10], 256
        $region124: #{tpu_custom_call.1} parent=107 // pred_fallthru
          _
        // Predicated region
        $region125: #{tpu_custom_call.1} parent=107 // pred_check
          %p984 = pneg %p144
        $region126: #{tpu_custom_call.1} parent=107 // pred_check_branch
          %986 = sbr.rel (%p984) target = $region128
        $region127: #{tpu_custom_call.1} parent=107 // pred_region
          %988 = dma.done [#allocation10], 256
        $region128: #{tpu_custom_call.1} parent=107 // pred_fallthru
          _
        // Predicated region
        $region129: #{tpu_custom_call.1} parent=107 // pred_check
          %p989 = pneg %p165
        $region130: #{tpu_custom_call.1} parent=107 // pred_check_branch
          %991 = sbr.rel (%p989) target = $region132
        $region131: #{tpu_custom_call.1} parent=107 // pred_region
          %993 = dma.done [#allocation13], 256
        $region132: #{tpu_custom_call.1} parent=107 // pred_fallthru
          _
        %s994 = sand.u32 %s44, 1
        %s995 = scalar_lea.sflag [#allocation4], %s994
        %s996 = sand.u32 %s256, 1
        %s997 = smul.addr %s996, 32
        %s998 = scalar_lea.vmem [#allocation14], %s997
        // Predicated region
        $region133: #{tpu_custom_call.1} parent=107 // pred_check
          %p999 = pneg %p269
        $region134: #{tpu_custom_call.1} parent=107 // pred_check_branch
          %1001 = sbr.rel (%p999) target = $region136
        $region135: #{tpu_custom_call.1} parent=107 // pred_region
          %1003 = dma.done %s995, 512
        $region136: #{tpu_custom_call.1} parent=107 // pred_fallthru
          _
        %s1004 = sand.u32 %s44, 1
        %s1005 = scalar_lea.sflag [#allocation4], %s1004
        %s1006 = sand.u32 %s334, 1
        %s1007 = smul.addr %s1006, 32
        %s1008 = scalar_lea.vmem [#allocation15], %s1007
        // Predicated region
        $region137: #{tpu_custom_call.1} parent=107 // pred_check
          %p1009 = pneg %p347
        $region138: #{tpu_custom_call.1} parent=107 // pred_check_branch
          %1011 = sbr.rel (%p1009) target = $region140
        $region139: #{tpu_custom_call.1} parent=107 // pred_region
          %1013 = dma.done %s1005, 512
        $region140: #{tpu_custom_call.1} parent=107 // pred_fallthru
          _
        %s1014 = sand.u32 %s44, 1
        %s1015 = scalar_lea.sflag [#allocation4], %s1014
        %s1016 = sand.u32 %s360, 1
        %s1017 = smul.addr %s1016, 32
        %s1018 = scalar_lea.vmem [#allocation16], %s1017
        // Predicated region
        $region141: #{tpu_custom_call.1} parent=107 // pred_check
          %p1019 = pneg %p373
        $region142: #{tpu_custom_call.1} parent=107 // pred_check_branch
          %1021 = sbr.rel (%p1019) target = $region144
        $region143: #{tpu_custom_call.1} parent=107 // pred_region
          %1023 = dma.done %s1015, 512
        $region144: #{tpu_custom_call.1} parent=107 // pred_fallthru
          _
        %s1024 = sand.u32 %s44, 1
        %s1025 = scalar_lea.sflag [#allocation4], %s1024
        %s1026 = sand.u32 %s386, 1
        %s1027 = smul.addr %s1026, 32
        %s1028 = scalar_lea.vmem [#allocation17], %s1027
        // Predicated region
        $region145: #{tpu_custom_call.1} parent=107 // pred_check
          %p1029 = pneg %p399
        $region146: #{tpu_custom_call.1} parent=107 // pred_check_branch
          %1031 = sbr.rel (%p1029) target = $region148
        $region147: #{tpu_custom_call.1} parent=107 // pred_region
          %1033 = dma.done %s1025, 512
        $region148: #{tpu_custom_call.1} parent=107 // pred_fallthru
          _
        %s1034 = sand.u32 %s44, 1
        %s1035 = scalar_lea.sflag [#allocation4], %s1034
        %s1036 = sand.u32 %s412, 1
        %s1037 = smul.addr %s1036, 32
        %s1038 = scalar_lea.vmem [#allocation18], %s1037
        // Predicated region
        $region149: #{tpu_custom_call.1} parent=107 // pred_check
          %p1039 = pneg %p425
        $region150: #{tpu_custom_call.1} parent=107 // pred_check_branch
          %1041 = sbr.rel (%p1039) target = $region152
        $region151: #{tpu_custom_call.1} parent=107 // pred_region
          %1043 = dma.done %s1035, 512
        $region152: #{tpu_custom_call.1} parent=107 // pred_fallthru
          _
        %s1044 = sand.u32 %s44, 1
        %s1045 = scalar_lea.sflag [#allocation4], %s1044
        %s1046 = sand.u32 %s490, 1
        %s1047 = smul.addr %s1046, 32
        %s1048 = scalar_lea.vmem [#allocation19], %s1047
        // Predicated region
        $region153: #{tpu_custom_call.1} parent=107 // pred_check
          %p1049 = pneg %p503
        $region154: #{tpu_custom_call.1} parent=107 // pred_check_branch
          %1051 = sbr.rel (%p1049) target = $region156
        $region155: #{tpu_custom_call.1} parent=107 // pred_region
          %1053 = dma.done %s1045, 512
        $region156: #{tpu_custom_call.1} parent=107 // pred_fallthru
          _
        %p1054 = pneg %p60
        %p1055 = pneg %p57
        %p1056 = pneg %p81
        %p1057 = pneg %p78
        %p1058 = pneg %p102
        %p1059 = pneg %p99
        %p1060 = pneg %p123
        %p1061 = pneg %p120
        %p1062 = pneg %p144
        %p1063 = pneg %p141
        %p1064 = pneg %p165
        %p1065 = pneg %p162
        %p1066 = scmp.lt.s32.totalorder %s44, 1
        %s1067 = scalar_select %p1066, %s44, 1
        %s1068 = smul.addr %s1067, 4
        %s1069 = smul.addr %s1068, 8
        %s1070 = scalar_lea.vmem %s6, %s1069
        %p1071 = pneg %p191
        %p1072 = pneg %p188
        %p1073 = scmp.lt.s32.totalorder %s44, 1
        %s1074 = scalar_select %p1073, %s44, 1
        %s1075 = smul.addr %s1074, 4
        %s1076 = smul.addr %s1075, 8
        %s1077 = scalar_lea.vmem %s7, %s1076
        %p1078 = pneg %p217
        %p1079 = pneg %p214
        %p1080 = scmp.lt.s32.totalorder %s44, 1
        %s1081 = scalar_select %p1080, %s44, 1
        %s1082 = smul.addr %s1081, 4
        %s1083 = smul.addr %s1082, 8
        %s1084 = scalar_lea.vmem %s8, %s1083
        %p1085 = pneg %p243
        %p1086 = pneg %p240
        %s1087 = sand.u32 %s44, 1
        %s1088 = scalar_lea.sflag [#allocation4], %s1087
        %s1089 = sand.u32 %s256, 1
        %s1090 = smul.addr %s1089, 32
        %s1091 = scalar_lea.vmem [#allocation14], %s1090
        %p1092 = pneg %p269
        %p1093 = pneg %p266
        %p1094 = scmp.lt.s32.totalorder %s44, 1
        %s1095 = scalar_select %p1094, %s44, 1
        %s1096 = scalar_lea.vmem %s10, %s1095
        %p1097 = pneg %p295
        %p1098 = pneg %p292
        %p1099 = scmp.lt.s32.totalorder %s44, 1
        %s1100 = scalar_select %p1099, %s44, 1
        %s1101 = scalar_lea.vmem %s11, %s1100
        %p1102 = pneg %p321
        %p1103 = pneg %p318
        %s1104 = sand.u32 %s44, 1
        %s1105 = scalar_lea.sflag [#allocation4], %s1104
        %s1106 = sand.u32 %s334, 1
        %s1107 = smul.addr %s1106, 32
        %s1108 = scalar_lea.vmem [#allocation15], %s1107
        %p1109 = pneg %p347
        %p1110 = pneg %p344
        %s1111 = sand.u32 %s44, 1
        %s1112 = scalar_lea.sflag [#allocation4], %s1111
        %s1113 = sand.u32 %s360, 1
        %s1114 = smul.addr %s1113, 32
        %s1115 = scalar_lea.vmem [#allocation16], %s1114
        %p1116 = pneg %p373
        %p1117 = pneg %p370
        %s1118 = sand.u32 %s44, 1
        %s1119 = scalar_lea.sflag [#allocation4], %s1118
        %s1120 = sand.u32 %s386, 1
        %s1121 = smul.addr %s1120, 32
        %s1122 = scalar_lea.vmem [#allocation17], %s1121
        %p1123 = pneg %p399
        %p1124 = pneg %p396
        %s1125 = sand.u32 %s44, 1
        %s1126 = scalar_lea.sflag [#allocation4], %s1125
        %s1127 = sand.u32 %s412, 1
        %s1128 = smul.addr %s1127, 32
        %s1129 = scalar_lea.vmem [#allocation18], %s1128
        %p1130 = pneg %p425
        %p1131 = pneg %p422
        %p1132 = scmp.lt.s32.totalorder %s44, 1
        %s1133 = scalar_select %p1132, %s44, 1
        %s1134 = scalar_lea.vmem %s16, %s1133
        %p1135 = pneg %p451
        %p1136 = pneg %p448
        %p1137 = scmp.lt.s32.totalorder %s44, 1
        %s1138 = scalar_select %p1137, %s44, 1
        %s1139 = scalar_lea.vmem %s17, %s1138
        %p1140 = pneg %p477
        %p1141 = pneg %p474
        %s1142 = sand.u32 %s44, 1
        %s1143 = scalar_lea.sflag [#allocation4], %s1142
        %s1144 = sand.u32 %s490, 1
        %s1145 = smul.addr %s1144, 32
        %s1146 = scalar_lea.vmem [#allocation19], %s1145
        %p1147 = pneg %p503
        %p1148 = pneg %p500
        %p1149 = scmp.lt.s32.totalorder %s44, 1
        %s1150 = scalar_select %p1149, %s44, 1
        %s1151 = smul.addr %s1150, 8
        %s1152 = smul.addr %s1151, 8
        %s1153 = scalar_lea.vmem %s19, %s1152
        %p1154 = pneg %p529
        %p1155 = pneg %p526
        %p1156 = scmp.lt.s32.totalorder %s44, 1
        %s1157 = scalar_select %p1156, %s44, 1
        %s1158 = scalar_lea.vmem %s20, %s1157
        %p1159 = pneg %p555
        %p1160 = pneg %p552
        %p1161 = scmp.lt.s32.totalorder %s44, 1
        %s1162 = scalar_select %p1161, %s44, 1
        %s1163 = scalar_lea.vmem %s21, %s1162
        %p1164 = pneg %p581
        %p1165 = pneg %p578
        %p1166 = pneg %p602
        %p1167 = pneg %p599
        %p1168 = pneg %p628
        %p1169 = pneg %p625
        %s1170 = sand.u32 %s44, 1
        %s1171 = scalar_lea.sflag [#allocation22], %s1170
        %s1172 = sand.u32 %s615, 1
        %s1173 = smul.addr %s1172, 64
        %s1174 = scalar_lea.vmem [#allocation21], %s1173
        %p1175 = pneg %p654
        %p1176 = pneg %p651
        %s1177 = sand.u32 %s44, 1
        %s1178 = scalar_lea.sflag [#allocation22], %s1177
        %s1179 = sand.u32 %s641, 1
        %s1180 = smul.addr %s1179, 64
        %s1181 = scalar_lea.vmem [#allocation23], %s1180
        %p1182 = scmp.lt.s32.totalorder %s44, 1
        %s1183 = scalar_select %p1182, %s44, 1
        %s1184 = smul.addr %s1183, 4
        %s1185 = smul.addr %s1184, 8
        %s1186 = scalar_lea.vmem %s6, %s1185
        %p1187 = scmp.lt.s32.totalorder %s44, 1
        %s1188 = scalar_select %p1187, %s44, 1
        %s1189 = smul.addr %s1188, 4
        %s1190 = smul.addr %s1189, 8
        %s1191 = scalar_lea.vmem %s7, %s1190
        %p1192 = scmp.lt.s32.totalorder %s44, 1
        %s1193 = scalar_select %p1192, %s44, 1
        %s1194 = smul.addr %s1193, 4
        %s1195 = smul.addr %s1194, 8
        %s1196 = scalar_lea.vmem %s8, %s1195
        %p1197 = scmp.lt.s32.totalorder %s44, 1
        %s1198 = scalar_select %p1197, %s44, 1
        %s1199 = scalar_lea.vmem %s10, %s1198
        %p1200 = scmp.lt.s32.totalorder %s44, 1
        %s1201 = scalar_select %p1200, %s44, 1
        %s1202 = scalar_lea.vmem %s11, %s1201
        %p1203 = scmp.lt.s32.totalorder %s44, 1
        %s1204 = scalar_select %p1203, %s44, 1
        %s1205 = scalar_lea.vmem %s16, %s1204
        %p1206 = scmp.lt.s32.totalorder %s44, 1
        %s1207 = scalar_select %p1206, %s44, 1
        %s1208 = scalar_lea.vmem %s17, %s1207
        %p1209 = scmp.lt.s32.totalorder %s44, 1
        %s1210 = scalar_select %p1209, %s44, 1
        %s1211 = smul.addr %s1210, 8
        %s1212 = smul.addr %s1211, 8
        %s1213 = scalar_lea.vmem %s19, %s1212
        %p1214 = scmp.lt.s32.totalorder %s44, 1
        %s1215 = scalar_select %p1214, %s44, 1
        %s1216 = scalar_lea.vmem %s20, %s1215
        %p1217 = scmp.lt.s32.totalorder %s44, 1
        %s1218 = scalar_select %p1217, %s44, 1
        %s1219 = scalar_lea.vmem %s21, %s1218
        %p1220 = scmp.eq.s32.totalorder %s44, 0
        // Predicated region
        $region157: #{tpu_custom_call.1} parent=107 // pred_check
          %p1221 = pneg %p1220
        $region158: #{tpu_custom_call.1} parent=107 // pred_check_branch
          %1223 = sbr.rel (%p1221) target = $region160
        $region159: #{tpu_custom_call.1} parent=107 // pred_region
          %v1224 = vld [vmem:[#allocation3] sm:$0xff]
          %v1225 = vld [vmem:[#allocation3 + $0x8] sm:$0xff]
          %vm1226 = vcmask 261120
          %1227 = vst.msk [vmem:[#allocation20] sm:$0xff] %vm1226, %v1224
          %1228 = vst.msk [vmem:[#allocation20 + $0x8] sm:$0xff] %vm1226, %v1225
        $region160: #{tpu_custom_call.1} parent=107 // pred_fallthru
          _
        %v1229 = vld [vmem:[#allocation20] sm:$0xff]
        %v1230 = vld [vmem:[#allocation20 + $0x8] sm:$0xff]
        %v1231 = vld [vmem:[#allocation6] sm:$0xff]
        %v1232 = vld [vmem:[#allocation6 + $0x8] sm:$0xff]
        %v1233 = vld [vmem:[%s1186] sm:$0xff]
        %v1234 = vld [vmem:[%s1186 + $0x8] sm:$0xff]
        %v1235 = vld [vmem:[%s1186 + $0x10] sm:$0xff]
        %v1236 = vld [vmem:[%s1186 + $0x18] sm:$0xff]
        %v1237 = vld [vmem:[%s1191] sm:$0xff]
        %v1238 = vld [vmem:[%s1191 + $0x8] sm:$0xff]
        %v1239 = vld [vmem:[%s1191 + $0x10] sm:$0xff]
        %v1240 = vld [vmem:[%s1191 + $0x18] sm:$0xff]
        %v1241 = vld [vmem:[%s1196] sm:$0xff]
        %v1242 = vld [vmem:[%s1196 + $0x8] sm:$0xff]
        %v1243 = vld [vmem:[%s1196 + $0x10] sm:$0xff]
        %v1244 = vld [vmem:[%s1196 + $0x18] sm:$0xff]
        %v1245 = vld [vmem:[%s998] sm:$0xff]
        %v1246 = vld [vmem:[%s998 + $0x8] sm:$0xff]
        %v1247 = vld [vmem:[%s998 + $0x10] sm:$0xff]
        %v1248 = vld [vmem:[%s998 + $0x18] sm:$0xff]
        %vm1249 = vcmask 261120
        %v1251 = vsel %vm1249, %v1229, 0
        %v1254 = vsel %vm1249, %v1230, 0
        %1256 = vmatpush.msra.mxu0 0.0
        %1257 = vmatpush.msra.mxu0 0.0
        %1258 = vmatpush.msra.mxu0 0.0
        %1259 = vmatpush.msra.mxu0 0.0
        %1260 = vmatpush.msra.mxu0 0.0
        %1261 = vmatpush.msra.mxu0 0.0
        %1262 = vmatpush.msra.mxu0 0.0
        %1263 = vmatpush.msra.mxu0 0.0
        %1264 = vmatpush.msra.mxu0 0.0
        %1265 = vmatpush.msra.mxu0 0.0
        %1266 = vmatpush.msra.mxu0 0.0
        %1267 = vmatpush.msra.mxu0 0.0
        %1268 = vmatpush.msra.mxu0 %v1236
        %1269 = vmatpush.msra.mxu0 %v1235
        %1270 = vmatpush.msra.mxu0 %v1234
        %1271 = vmatpush.msra.mxu0 %v1233
        %1272 = vmatmul.f32.gmra.mxu0 %v1251
        %v1273 = vpop.f32.mrf.mxu0
        %v1274 = vadd.f32 0.0, %v1273
        %1275 = vmatmul.f32.gmra.mxu0 %v1254
        %v1276 = vpop.f32.mrf.mxu0
        %v1277 = vadd.f32 0.0, %v1276
        %1278 = vdwg.mxu0
        %1279 = vmatpush.msra.mxu0 0.0
        %1280 = vmatpush.msra.mxu0 0.0
        %1281 = vmatpush.msra.mxu0 0.0
        %1282 = vmatpush.msra.mxu0 0.0
        %1283 = vmatpush.msra.mxu0 0.0
        %1284 = vmatpush.msra.mxu0 0.0
        %1285 = vmatpush.msra.mxu0 0.0
        %1286 = vmatpush.msra.mxu0 0.0
        %1287 = vmatpush.msra.mxu0 0.0
        %1288 = vmatpush.msra.mxu0 0.0
        %1289 = vmatpush.msra.mxu0 0.0
        %1290 = vmatpush.msra.mxu0 0.0
        %1291 = vmatpush.msra.mxu0 %v1240
        %1292 = vmatpush.msra.mxu0 %v1239
        %1293 = vmatpush.msra.mxu0 %v1238
        %1294 = vmatpush.msra.mxu0 %v1237
        %1295 = vmatmul.f32.gmra.mxu0 %v1251
        %v1296 = vpop.f32.mrf.mxu0
        %v1297 = vadd.f32 0.0, %v1296
        %1298 = vmatmul.f32.gmra.mxu0 %v1254
        %v1299 = vpop.f32.mrf.mxu0
        %v1300 = vadd.f32 0.0, %v1299
        %1301 = vdwg.mxu0
        %1302 = vmatpush.msra.mxu0 0.0
        %1303 = vmatpush.msra.mxu0 0.0
        %1304 = vmatpush.msra.mxu0 0.0
        %1305 = vmatpush.msra.mxu0 0.0
        %1306 = vmatpush.msra.mxu0 0.0
        %1307 = vmatpush.msra.mxu0 0.0
        %1308 = vmatpush.msra.mxu0 0.0
        %1309 = vmatpush.msra.mxu0 0.0
        %1310 = vmatpush.msra.mxu0 0.0
        %1311 = vmatpush.msra.mxu0 0.0
        %1312 = vmatpush.msra.mxu0 0.0
        %1313 = vmatpush.msra.mxu0 0.0
        %1314 = vmatpush.msra.mxu0 %v1244
        %1315 = vmatpush.msra.mxu0 %v1243
        %1316 = vmatpush.msra.mxu0 %v1242
        %1317 = vmatpush.msra.mxu0 %v1241
        %1318 = vmatmul.f32.gmra.mxu0 %v1251
        %v1319 = vpop.f32.mrf.mxu0
        %v1320 = vadd.f32 0.0, %v1319
        %1321 = vmatmul.f32.gmra.mxu0 %v1254
        %v1322 = vpop.f32.mrf.mxu0
        %v1323 = vadd.f32 0.0, %v1322
        %1324 = vdwg.mxu0
        %v1325 = vld [vmem:[#allocation8] sm:$0xff]
        %v1326 = vld [vmem:[#allocation9] sm:$0xff]
        %vm1327 = vcmask 64512
        %v1329 = vsel %vm1327, %v1274, 0
        %v1332 = vsel %vm1327, %v1297, 0
        %1334 = vmatpush.xpose.msra.mxu0 0.0
        %1335 = vmatpush.xpose.msra.mxu0 0.0
        %1336 = vmatpush.xpose.msra.mxu0 0.0
        %1337 = vmatpush.xpose.msra.mxu0 0.0
        %1338 = vmatpush.xpose.msra.mxu0 0.0
        %1339 = vmatpush.xpose.msra.mxu0 0.0
        %1340 = vmatpush.xpose.msra.mxu0 0.0
        %1341 = vmatpush.xpose.msra.mxu0 0.0
        %1342 = vmatpush.xpose.msra.mxu0 0.0
        %1343 = vmatpush.xpose.msra.mxu0 0.0
        %1344 = vmatpush.xpose.msra.mxu0 0.0
        %1345 = vmatpush.xpose.msra.mxu0 0.0
        %1346 = vmatpush.xpose.msra.mxu0 0.0
        %1347 = vmatpush.xpose.msra.mxu0 0.0
        %1348 = vmatpush.xpose.msra.mxu0 0.0
        %1349 = vmatpush.xpose.msra.mxu0 %v1332
        %1350 = vmatmul.f32.gmra.mxu0 %v1329
        %v1351 = vpop.f32.mrf.mxu0
        %v1352 = vadd.f32 0.0, %v1351
        %1353 = vdwg.mxu0
        %v1354 = vmul.f32 %v1352, %v1325
        %v1355 = vadd.f32 %v1354, %v1326
        %v1356 = vsel %vm1327, %v1355, -inf
        %1357 = vmax.xlane.f32.xlu0 %v1356
        %v1358 = vpop.xlane.xlu0 %1357
        %v1359 = vsub.f32 %v1355, %v1358
        %v1360 = vmul.f32 %v1359, 1.442695
        %v1361 = vpow.pop %v1360
        %v1362 = vsel %vm1327, %v1361, 0.0
        %1363 = vadd.xlane.f32.xlu0 %v1362
        %v1364 = vpop.xlane.xlu0 %1363
        %v1365 = vrcp.pop %v1364
        %v1366 = vmul.f32 %v1361, %v1365
        %1367 = vst.msk [vmem:[%s1174] sm:$0xff] %vm1327, %v1366
        %v1369 = vsel %vm1327, %v1366, 0
        %1371 = vmatpush.msra.mxu0 0.0
        %1372 = vmatpush.msra.mxu0 0.0
        %1373 = vmatpush.msra.mxu0 0.0
        %1374 = vmatpush.msra.mxu0 0.0
        %1375 = vmatpush.msra.mxu0 0.0
        %1376 = vmatpush.msra.mxu0 0.0
        %1377 = vmatpush.msra.mxu0 0.0
        %1378 = vmatpush.msra.mxu0 0.0
        %1379 = vmatpush.msra.mxu0 0.0
        %1380 = vmatpush.msra.mxu0 0.0
        %1381 = vmatpush.msra.mxu0 0.0
        %1382 = vmatpush.msra.mxu0 0.0
        %1383 = vmatpush.msra.mxu0 0.0
        %1384 = vmatpush.msra.mxu0 0.0
        %1385 = vmatpush.msra.mxu0 0.0
        %1386 = vmatpush.msra.mxu0 %v1320
        %1387 = vmatmul.f32.gmra.mxu0 %v1369
        %v1388 = vpop.f32.mrf.mxu0
        %v1389 = vadd.f32 0.0, %v1388
        %1390 = vdwg.mxu0
        %1391 = vst.msk [vmem:[#allocation2] sm:$0xff] %vm1327, %v1389
        %1392 = vrot.lane.b32.xlu0 %v1274, 120
        %v1393 = vpop.permute.xlu0 %1392
        %1394 = vrot.lane.b32.xlu0 %v1297, 120
        %v1395 = vpop.permute.xlu0 %1394
        %v1396 = vsel %vm1327, %v1393, 0
        %v1398 = vsel %vm1327, %v1395, 0
        %1400 = vmatpush.xpose.msra.mxu0 0.0
        %1401 = vmatpush.xpose.msra.mxu0 0.0
        %1402 = vmatpush.xpose.msra.mxu0 0.0
        %1403 = vmatpush.xpose.msra.mxu0 0.0
        %1404 = vmatpush.xpose.msra.mxu0 0.0
        %1405 = vmatpush.xpose.msra.mxu0 0.0
        %1406 = vmatpush.xpose.msra.mxu0 0.0
        %1407 = vmatpush.xpose.msra.mxu0 0.0
        %1408 = vmatpush.xpose.msra.mxu0 0.0
        %1409 = vmatpush.xpose.msra.mxu0 0.0
        %1410 = vmatpush.xpose.msra.mxu0 0.0
        %1411 = vmatpush.xpose.msra.mxu0 0.0
        %1412 = vmatpush.xpose.msra.mxu0 0.0
        %1413 = vmatpush.xpose.msra.mxu0 0.0
        %1414 = vmatpush.xpose.msra.mxu0 0.0
        %1415 = vmatpush.xpose.msra.mxu0 %v1398
        %1416 = vmatmul.f32.gmra.mxu0 %v1396
        %v1417 = vpop.f32.mrf.mxu0
        %v1418 = vadd.f32 0.0, %v1417
        %1419 = vdwg.mxu0
        %v1420 = vmul.f32 %v1418, %v1325
        %v1421 = vadd.f32 %v1420, %v1326
        %v1422 = vsel %vm1327, %v1421, -inf
        %1423 = vmax.xlane.f32.xlu0 %v1422
        %v1424 = vpop.xlane.xlu0 %1423
        %v1425 = vsub.f32 %v1421, %v1424
        %v1426 = vmul.f32 %v1425, 1.442695
        %v1427 = vpow.pop %v1426
        %v1428 = vsel %vm1327, %v1427, 0.0
        %1429 = vadd.xlane.f32.xlu0 %v1428
        %v1430 = vpop.xlane.xlu0 %1429
        %v1431 = vrcp.pop %v1430
        %v1432 = vmul.f32 %v1427, %v1431
        %s1433 = scalar_lea.vmem %s1174, 8 [#allocation21]
        %1434 = vst.msk [vmem:[%s1433] sm:$0xff] %vm1327, %v1432
        %1436 = vrot.lane.b32.xlu0 %v1320, 120
        %v1437 = vpop.permute.xlu0 %1436
        %v1440 = vsel %vm1327, %v1432, 0
        %1442 = vmatpush.msra.mxu0 0.0
        %1443 = vmatpush.msra.mxu0 0.0
        %1444 = vmatpush.msra.mxu0 0.0
        %1445 = vmatpush.msra.mxu0 0.0
        %1446 = vmatpush.msra.mxu0 0.0
        %1447 = vmatpush.msra.mxu0 0.0
        %1448 = vmatpush.msra.mxu0 0.0
        %1449 = vmatpush.msra.mxu0 0.0
        %1450 = vmatpush.msra.mxu0 0.0
        %1451 = vmatpush.msra.mxu0 0.0
        %1452 = vmatpush.msra.mxu0 0.0
        %1453 = vmatpush.msra.mxu0 0.0
        %1454 = vmatpush.msra.mxu0 0.0
        %1455 = vmatpush.msra.mxu0 0.0
        %1456 = vmatpush.msra.mxu0 0.0
        %1457 = vmatpush.msra.mxu0 %v1437
        %1458 = vmatmul.f32.gmra.mxu0 %v1440
        %v1459 = vpop.f32.mrf.mxu0
        %v1460 = vadd.f32 0.0, %v1459
        %1461 = vdwg.mxu0
        %1463 = vrot.lane.b32.xlu0 %v1460, 8
        %v1464 = vpop.permute.xlu0 %1463
        %vm1466 = vcmask 130112
        %1467 = vst.msk [vmem:[#allocation2] sm:$0xff] %vm1466, %v1464
        %1468 = vrot.lane.b32.xlu0 %v1274, 112
        %v1469 = vpop.permute.xlu0 %1468
        %1470 = vrot.lane.b32.xlu0 %v1297, 112
        %v1471 = vpop.permute.xlu0 %1470
        %v1472 = vsel %vm1327, %v1469, 0
        %v1474 = vsel %vm1327, %v1471, 0
        %1476 = vmatpush.xpose.msra.mxu0 0.0
        %1477 = vmatpush.xpose.msra.mxu0 0.0
        %1478 = vmatpush.xpose.msra.mxu0 0.0
        %1479 = vmatpush.xpose.msra.mxu0 0.0
        %1480 = vmatpush.xpose.msra.mxu0 0.0
        %1481 = vmatpush.xpose.msra.mxu0 0.0
        %1482 = vmatpush.xpose.msra.mxu0 0.0
        %1483 = vmatpush.xpose.msra.mxu0 0.0
        %1484 = vmatpush.xpose.msra.mxu0 0.0
        %1485 = vmatpush.xpose.msra.mxu0 0.0
        %1486 = vmatpush.xpose.msra.mxu0 0.0
        %1487 = vmatpush.xpose.msra.mxu0 0.0
        %1488 = vmatpush.xpose.msra.mxu0 0.0
        %1489 = vmatpush.xpose.msra.mxu0 0.0
        %1490 = vmatpush.xpose.msra.mxu0 0.0
        %1491 = vmatpush.xpose.msra.mxu0 %v1474
        %1492 = vmatmul.f32.gmra.mxu0 %v1472
        %v1493 = vpop.f32.mrf.mxu0
        %v1494 = vadd.f32 0.0, %v1493
        %1495 = vdwg.mxu0
        %v1496 = vmul.f32 %v1494, %v1325
        %v1497 = vadd.f32 %v1496, %v1326
        %v1498 = vsel %vm1327, %v1497, -inf
        %1499 = vmax.xlane.f32.xlu0 %v1498
        %v1500 = vpop.xlane.xlu0 %1499
        %v1501 = vsub.f32 %v1497, %v1500
        %v1502 = vmul.f32 %v1501, 1.442695
        %v1503 = vpow.pop %v1502
        %v1504 = vsel %vm1327, %v1503, 0.0
        %1505 = vadd.xlane.f32.xlu0 %v1504
        %v1506 = vpop.xlane.xlu0 %1505
        %v1507 = vrcp.pop %v1506
        %v1508 = vmul.f32 %v1503, %v1507
        %s1509 = scalar_lea.vmem %s1174, 16 [#allocation21]
        %1510 = vst.msk [vmem:[%s1509] sm:$0xff] %vm1327, %v1508
        %1511 = vrot.lane.b32.xlu0 %v1320, 112
        %v1512 = vpop.permute.xlu0 %1511
        %v1515 = vsel %vm1327, %v1508, 0
        %1517 = vmatpush.msra.mxu0 0.0
        %1518 = vmatpush.msra.mxu0 0.0
        %1519 = vmatpush.msra.mxu0 0.0
        %1520 = vmatpush.msra.mxu0 0.0
        %1521 = vmatpush.msra.mxu0 0.0
        %1522 = vmatpush.msra.mxu0 0.0
        %1523 = vmatpush.msra.mxu0 0.0
        %1524 = vmatpush.msra.mxu0 0.0
        %1525 = vmatpush.msra.mxu0 0.0
        %1526 = vmatpush.msra.mxu0 0.0
        %1527 = vmatpush.msra.mxu0 0.0
        %1528 = vmatpush.msra.mxu0 0.0
        %1529 = vmatpush.msra.mxu0 0.0
        %1530 = vmatpush.msra.mxu0 0.0
        %1531 = vmatpush.msra.mxu0 0.0
        %1532 = vmatpush.msra.mxu0 %v1512
        %1533 = vmatmul.f32.gmra.mxu0 %v1515
        %v1534 = vpop.f32.mrf.mxu0
        %v1535 = vadd.f32 0.0, %v1534
        %1536 = vdwg.mxu0
        %1538 = vrot.lane.b32.xlu0 %v1535, 16
        %v1539 = vpop.permute.xlu0 %1538
        %vm1541 = vcmask 195712
        %1542 = vst.msk [vmem:[#allocation2] sm:$0xff] %vm1541, %v1539
        %1543 = vrot.lane.b32.xlu0 %v1274, 104
        %v1544 = vpop.permute.xlu0 %1543
        %1545 = vrot.lane.b32.xlu0 %v1297, 104
        %v1546 = vpop.permute.xlu0 %1545
        %v1547 = vsel %vm1327, %v1544, 0
        %v1549 = vsel %vm1327, %v1546, 0
        %1551 = vmatpush.xpose.msra.mxu0 0.0
        %1552 = vmatpush.xpose.msra.mxu0 0.0
        %1553 = vmatpush.xpose.msra.mxu0 0.0
        %1554 = vmatpush.xpose.msra.mxu0 0.0
        %1555 = vmatpush.xpose.msra.mxu0 0.0
        %1556 = vmatpush.xpose.msra.mxu0 0.0
        %1557 = vmatpush.xpose.msra.mxu0 0.0
        %1558 = vmatpush.xpose.msra.mxu0 0.0
        %1559 = vmatpush.xpose.msra.mxu0 0.0
        %1560 = vmatpush.xpose.msra.mxu0 0.0
        %1561 = vmatpush.xpose.msra.mxu0 0.0
        %1562 = vmatpush.xpose.msra.mxu0 0.0
        %1563 = vmatpush.xpose.msra.mxu0 0.0
        %1564 = vmatpush.xpose.msra.mxu0 0.0
        %1565 = vmatpush.xpose.msra.mxu0 0.0
        %1566 = vmatpush.xpose.msra.mxu0 %v1549
        %1567 = vmatmul.f32.gmra.mxu0 %v1547
        %v1568 = vpop.f32.mrf.mxu0
        %v1569 = vadd.f32 0.0, %v1568
        %1570 = vdwg.mxu0
        %v1571 = vmul.f32 %v1569, %v1325
        %v1572 = vadd.f32 %v1571, %v1326
        %v1573 = vsel %vm1327, %v1572, -inf
        %1574 = vmax.xlane.f32.xlu0 %v1573
        %v1575 = vpop.xlane.xlu0 %1574
        %v1576 = vsub.f32 %v1572, %v1575
        %v1577 = vmul.f32 %v1576, 1.442695
        %v1578 = vpow.pop %v1577
        %v1579 = vsel %vm1327, %v1578, 0.0
        %1580 = vadd.xlane.f32.xlu0 %v1579
        %v1581 = vpop.xlane.xlu0 %1580
        %v1582 = vrcp.pop %v1581
        %v1583 = vmul.f32 %v1578, %v1582
        %s1584 = scalar_lea.vmem %s1174, 24 [#allocation21]
        %1585 = vst.msk [vmem:[%s1584] sm:$0xff] %vm1327, %v1583
        %1586 = vrot.lane.b32.xlu0 %v1320, 104
        %v1587 = vpop.permute.xlu0 %1586
        %v1590 = vsel %vm1327, %v1583, 0
        %1592 = vmatpush.msra.mxu0 0.0
        %1593 = vmatpush.msra.mxu0 0.0
        %1594 = vmatpush.msra.mxu0 0.0
        %1595 = vmatpush.msra.mxu0 0.0
        %1596 = vmatpush.msra.mxu0 0.0
        %1597 = vmatpush.msra.mxu0 0.0
        %1598 = vmatpush.msra.mxu0 0.0
        %1599 = vmatpush.msra.mxu0 0.0
        %1600 = vmatpush.msra.mxu0 0.0
        %1601 = vmatpush.msra.mxu0 0.0
        %1602 = vmatpush.msra.mxu0 0.0
        %1603 = vmatpush.msra.mxu0 0.0
        %1604 = vmatpush.msra.mxu0 0.0
        %1605 = vmatpush.msra.mxu0 0.0
        %1606 = vmatpush.msra.mxu0 0.0
        %1607 = vmatpush.msra.mxu0 %v1587
        %1608 = vmatmul.f32.gmra.mxu0 %v1590
        %v1609 = vpop.f32.mrf.mxu0
        %v1610 = vadd.f32 0.0, %v1609
        %1611 = vdwg.mxu0
        %1613 = vrot.lane.b32.xlu0 %v1610, 24
        %v1614 = vpop.permute.xlu0 %1613
        %vm1616 = vcmask 261312
        %1617 = vst.msk [vmem:[#allocation2] sm:$0xff] %vm1616, %v1614
        %s1618 = scalar_lea.vmem [#allocation8], 8
        %v1619 = vld [vmem:[%s1618] sm:$0xff]
        %s1620 = scalar_lea.vmem [#allocation9], 8
        %v1621 = vld [vmem:[%s1620] sm:$0xff]
        %v1623 = vsel %vm1327, %v1277, 0
        %v1626 = vsel %vm1327, %v1300, 0
        %1628 = vmatpush.xpose.msra.mxu0 0.0
        %1629 = vmatpush.xpose.msra.mxu0 0.0
        %1630 = vmatpush.xpose.msra.mxu0 0.0
        %1631 = vmatpush.xpose.msra.mxu0 0.0
        %1632 = vmatpush.xpose.msra.mxu0 0.0
        %1633 = vmatpush.xpose.msra.mxu0 0.0
        %1634 = vmatpush.xpose.msra.mxu0 0.0
        %1635 = vmatpush.xpose.msra.mxu0 0.0
        %1636 = vmatpush.xpose.msra.mxu0 0.0
        %1637 = vmatpush.xpose.msra.mxu0 0.0
        %1638 = vmatpush.xpose.msra.mxu0 0.0
        %1639 = vmatpush.xpose.msra.mxu0 0.0
        %1640 = vmatpush.xpose.msra.mxu0 0.0
        %1641 = vmatpush.xpose.msra.mxu0 0.0
        %1642 = vmatpush.xpose.msra.mxu0 0.0
        %1643 = vmatpush.xpose.msra.mxu0 %v1626
        %1644 = vmatmul.f32.gmra.mxu0 %v1623
        %v1645 = vpop.f32.mrf.mxu0
        %v1646 = vadd.f32 0.0, %v1645
        %1647 = vdwg.mxu0
        %v1648 = vmul.f32 %v1646, %v1619
        %v1649 = vadd.f32 %v1648, %v1621
        %v1650 = vsel %vm1327, %v1649, -inf
        %1651 = vmax.xlane.f32.xlu0 %v1650
        %v1652 = vpop.xlane.xlu0 %1651
        %v1653 = vsub.f32 %v1649, %v1652
        %v1654 = vmul.f32 %v1653, 1.442695
        %v1655 = vpow.pop %v1654
        %v1656 = vsel %vm1327, %v1655, 0.0
        %1657 = vadd.xlane.f32.xlu0 %v1656
        %v1658 = vpop.xlane.xlu0 %1657
        %v1659 = vrcp.pop %v1658
        %v1660 = vmul.f32 %v1655, %v1659
        %s1661 = scalar_lea.vmem %s1174, 32 [#allocation21]
        %1662 = vst.msk [vmem:[%s1661] sm:$0xff] %vm1327, %v1660
        %v1664 = vsel %vm1327, %v1660, 0
        %1666 = vmatpush.msra.mxu0 0.0
        %1667 = vmatpush.msra.mxu0 0.0
        %1668 = vmatpush.msra.mxu0 0.0
        %1669 = vmatpush.msra.mxu0 0.0
        %1670 = vmatpush.msra.mxu0 0.0
        %1671 = vmatpush.msra.mxu0 0.0
        %1672 = vmatpush.msra.mxu0 0.0
        %1673 = vmatpush.msra.mxu0 0.0
        %1674 = vmatpush.msra.mxu0 0.0
        %1675 = vmatpush.msra.mxu0 0.0
        %1676 = vmatpush.msra.mxu0 0.0
        %1677 = vmatpush.msra.mxu0 0.0
        %1678 = vmatpush.msra.mxu0 0.0
        %1679 = vmatpush.msra.mxu0 0.0
        %1680 = vmatpush.msra.mxu0 0.0
        %1681 = vmatpush.msra.mxu0 %v1323
        %1682 = vmatmul.f32.gmra.mxu0 %v1664
        %v1683 = vpop.f32.mrf.mxu0
        %v1684 = vadd.f32 0.0, %v1683
        %1685 = vdwg.mxu0
        %1686 = vst.msk [vmem:[#allocation2 + $0x8] sm:$0xff] %vm1327, %v1684
        %1687 = vrot.lane.b32.xlu0 %v1277, 120
        %v1688 = vpop.permute.xlu0 %1687
        %1689 = vrot.lane.b32.xlu0 %v1300, 120
        %v1690 = vpop.permute.xlu0 %1689
        %v1691 = vsel %vm1327, %v1688, 0
        %v1693 = vsel %vm1327, %v1690, 0
        %1695 = vmatpush.xpose.msra.mxu0 0.0
        %1696 = vmatpush.xpose.msra.mxu0 0.0
        %1697 = vmatpush.xpose.msra.mxu0 0.0
        %1698 = vmatpush.xpose.msra.mxu0 0.0
        %1699 = vmatpush.xpose.msra.mxu0 0.0
        %1700 = vmatpush.xpose.msra.mxu0 0.0
        %1701 = vmatpush.xpose.msra.mxu0 0.0
        %1702 = vmatpush.xpose.msra.mxu0 0.0
        %1703 = vmatpush.xpose.msra.mxu0 0.0
        %1704 = vmatpush.xpose.msra.mxu0 0.0
        %1705 = vmatpush.xpose.msra.mxu0 0.0
        %1706 = vmatpush.xpose.msra.mxu0 0.0
        %1707 = vmatpush.xpose.msra.mxu0 0.0
        %1708 = vmatpush.xpose.msra.mxu0 0.0
        %1709 = vmatpush.xpose.msra.mxu0 0.0
        %1710 = vmatpush.xpose.msra.mxu0 %v1693
        %1711 = vmatmul.f32.gmra.mxu0 %v1691
        %v1712 = vpop.f32.mrf.mxu0
        %v1713 = vadd.f32 0.0, %v1712
        %1714 = vdwg.mxu0
        %v1715 = vmul.f32 %v1713, %v1619
        %v1716 = vadd.f32 %v1715, %v1621
        %v1717 = vsel %vm1327, %v1716, -inf
        %1718 = vmax.xlane.f32.xlu0 %v1717
        %v1719 = vpop.xlane.xlu0 %1718
        %v1720 = vsub.f32 %v1716, %v1719
        %v1721 = vmul.f32 %v1720, 1.442695
        %v1722 = vpow.pop %v1721
        %v1723 = vsel %vm1327, %v1722, 0.0
        %1724 = vadd.xlane.f32.xlu0 %v1723
        %v1725 = vpop.xlane.xlu0 %1724
        %v1726 = vrcp.pop %v1725
        %v1727 = vmul.f32 %v1722, %v1726
        %s1728 = scalar_lea.vmem %s1174, 40 [#allocation21]
        %1729 = vst.msk [vmem:[%s1728] sm:$0xff] %vm1327, %v1727
        %1731 = vrot.lane.b32.xlu0 %v1323, 120
        %v1732 = vpop.permute.xlu0 %1731
        %v1735 = vsel %vm1327, %v1727, 0
        %1737 = vmatpush.msra.mxu0 0.0
        %1738 = vmatpush.msra.mxu0 0.0
        %1739 = vmatpush.msra.mxu0 0.0
        %1740 = vmatpush.msra.mxu0 0.0
        %1741 = vmatpush.msra.mxu0 0.0
        %1742 = vmatpush.msra.mxu0 0.0
        %1743 = vmatpush.msra.mxu0 0.0
        %1744 = vmatpush.msra.mxu0 0.0
        %1745 = vmatpush.msra.mxu0 0.0
        %1746 = vmatpush.msra.mxu0 0.0
        %1747 = vmatpush.msra.mxu0 0.0
        %1748 = vmatpush.msra.mxu0 0.0
        %1749 = vmatpush.msra.mxu0 0.0
        %1750 = vmatpush.msra.mxu0 0.0
        %1751 = vmatpush.msra.mxu0 0.0
        %1752 = vmatpush.msra.mxu0 %v1732
        %1753 = vmatmul.f32.gmra.mxu0 %v1735
        %v1754 = vpop.f32.mrf.mxu0
        %v1755 = vadd.f32 0.0, %v1754
        %1756 = vdwg.mxu0
        %1758 = vrot.lane.b32.xlu0 %v1755, 8
        %v1759 = vpop.permute.xlu0 %1758
        %1761 = vst.msk [vmem:[#allocation2 + $0x8] sm:$0xff] %vm1466, %v1759
        %1762 = vrot.lane.b32.xlu0 %v1277, 112
        %v1763 = vpop.permute.xlu0 %1762
        %1764 = vrot.lane.b32.xlu0 %v1300, 112
        %v1765 = vpop.permute.xlu0 %1764
        %v1766 = vsel %vm1327, %v1763, 0
        %v1768 = vsel %vm1327, %v1765, 0
        %1770 = vmatpush.xpose.msra.mxu0 0.0
        %1771 = vmatpush.xpose.msra.mxu0 0.0
        %1772 = vmatpush.xpose.msra.mxu0 0.0
        %1773 = vmatpush.xpose.msra.mxu0 0.0
        %1774 = vmatpush.xpose.msra.mxu0 0.0
        %1775 = vmatpush.xpose.msra.mxu0 0.0
        %1776 = vmatpush.xpose.msra.mxu0 0.0
        %1777 = vmatpush.xpose.msra.mxu0 0.0
        %1778 = vmatpush.xpose.msra.mxu0 0.0
        %1779 = vmatpush.xpose.msra.mxu0 0.0
        %1780 = vmatpush.xpose.msra.mxu0 0.0
        %1781 = vmatpush.xpose.msra.mxu0 0.0
        %1782 = vmatpush.xpose.msra.mxu0 0.0
        %1783 = vmatpush.xpose.msra.mxu0 0.0
        %1784 = vmatpush.xpose.msra.mxu0 0.0
        %1785 = vmatpush.xpose.msra.mxu0 %v1768
        %1786 = vmatmul.f32.gmra.mxu0 %v1766
        %v1787 = vpop.f32.mrf.mxu0
        %v1788 = vadd.f32 0.0, %v1787
        %1789 = vdwg.mxu0
        %v1790 = vmul.f32 %v1788, %v1619
        %v1791 = vadd.f32 %v1790, %v1621
        %v1792 = vsel %vm1327, %v1791, -inf
        %1793 = vmax.xlane.f32.xlu0 %v1792
        %v1794 = vpop.xlane.xlu0 %1793
        %v1795 = vsub.f32 %v1791, %v1794
        %v1796 = vmul.f32 %v1795, 1.442695
        %v1797 = vpow.pop %v1796
        %v1798 = vsel %vm1327, %v1797, 0.0
        %1799 = vadd.xlane.f32.xlu0 %v1798
        %v1800 = vpop.xlane.xlu0 %1799
        %v1801 = vrcp.pop %v1800
        %v1802 = vmul.f32 %v1797, %v1801
        %s1803 = scalar_lea.vmem %s1174, 48 [#allocation21]
        %1804 = vst.msk [vmem:[%s1803] sm:$0xff] %vm1327, %v1802
        %1805 = vrot.lane.b32.xlu0 %v1323, 112
        %v1806 = vpop.permute.xlu0 %1805
        %v1809 = vsel %vm1327, %v1802, 0
        %1811 = vmatpush.msra.mxu0 0.0
        %1812 = vmatpush.msra.mxu0 0.0
        %1813 = vmatpush.msra.mxu0 0.0
        %1814 = vmatpush.msra.mxu0 0.0
        %1815 = vmatpush.msra.mxu0 0.0
        %1816 = vmatpush.msra.mxu0 0.0
        %1817 = vmatpush.msra.mxu0 0.0
        %1818 = vmatpush.msra.mxu0 0.0
        %1819 = vmatpush.msra.mxu0 0.0
        %1820 = vmatpush.msra.mxu0 0.0
        %1821 = vmatpush.msra.mxu0 0.0
        %1822 = vmatpush.msra.mxu0 0.0
        %1823 = vmatpush.msra.mxu0 0.0
        %1824 = vmatpush.msra.mxu0 0.0
        %1825 = vmatpush.msra.mxu0 0.0
        %1826 = vmatpush.msra.mxu0 %v1806
        %1827 = vmatmul.f32.gmra.mxu0 %v1809
        %v1828 = vpop.f32.mrf.mxu0
        %v1829 = vadd.f32 0.0, %v1828
        %1830 = vdwg.mxu0
        %1832 = vrot.lane.b32.xlu0 %v1829, 16
        %v1833 = vpop.permute.xlu0 %1832
        %1835 = vst.msk [vmem:[#allocation2 + $0x8] sm:$0xff] %vm1541, %v1833
        %1836 = vrot.lane.b32.xlu0 %v1277, 104
        %v1837 = vpop.permute.xlu0 %1836
        %1838 = vrot.lane.b32.xlu0 %v1300, 104
        %v1839 = vpop.permute.xlu0 %1838
        %v1840 = vsel %vm1327, %v1837, 0
        %v1842 = vsel %vm1327, %v1839, 0
        %1844 = vmatpush.xpose.msra.mxu0 0.0
        %1845 = vmatpush.xpose.msra.mxu0 0.0
        %1846 = vmatpush.xpose.msra.mxu0 0.0
        %1847 = vmatpush.xpose.msra.mxu0 0.0
        %1848 = vmatpush.xpose.msra.mxu0 0.0
        %1849 = vmatpush.xpose.msra.mxu0 0.0
        %1850 = vmatpush.xpose.msra.mxu0 0.0
        %1851 = vmatpush.xpose.msra.mxu0 0.0
        %1852 = vmatpush.xpose.msra.mxu0 0.0
        %1853 = vmatpush.xpose.msra.mxu0 0.0
        %1854 = vmatpush.xpose.msra.mxu0 0.0
        %1855 = vmatpush.xpose.msra.mxu0 0.0
        %1856 = vmatpush.xpose.msra.mxu0 0.0
        %1857 = vmatpush.xpose.msra.mxu0 0.0
        %1858 = vmatpush.xpose.msra.mxu0 0.0
        %1859 = vmatpush.xpose.msra.mxu0 %v1842
        %1860 = vmatmul.f32.gmra.mxu0 %v1840
        %v1861 = vpop.f32.mrf.mxu0
        %v1862 = vadd.f32 0.0, %v1861
        %1863 = vdwg.mxu0
        %v1864 = vmul.f32 %v1862, %v1619
        %v1865 = vadd.f32 %v1864, %v1621
        %v1866 = vsel %vm1327, %v1865, -inf
        %1867 = vmax.xlane.f32.xlu0 %v1866
        %v1868 = vpop.xlane.xlu0 %1867
        %v1869 = vsub.f32 %v1865, %v1868
        %v1870 = vmul.f32 %v1869, 1.442695
        %v1871 = vpow.pop %v1870
        %v1872 = vsel %vm1327, %v1871, 0.0
        %1873 = vadd.xlane.f32.xlu0 %v1872
        %v1874 = vpop.xlane.xlu0 %1873
        %v1875 = vrcp.pop %v1874
        %v1876 = vmul.f32 %v1871, %v1875
        %s1877 = scalar_lea.vmem %s1174, 56 [#allocation21]
        %1878 = vst.msk [vmem:[%s1877] sm:$0xff] %vm1327, %v1876
        %1879 = vrot.lane.b32.xlu0 %v1323, 104
        %v1880 = vpop.permute.xlu0 %1879
        %v1883 = vsel %vm1327, %v1876, 0
        %1885 = vmatpush.msra.mxu0 0.0
        %1886 = vmatpush.msra.mxu0 0.0
        %1887 = vmatpush.msra.mxu0 0.0
        %1888 = vmatpush.msra.mxu0 0.0
        %1889 = vmatpush.msra.mxu0 0.0
        %1890 = vmatpush.msra.mxu0 0.0
        %1891 = vmatpush.msra.mxu0 0.0
        %1892 = vmatpush.msra.mxu0 0.0
        %1893 = vmatpush.msra.mxu0 0.0
        %1894 = vmatpush.msra.mxu0 0.0
        %1895 = vmatpush.msra.mxu0 0.0
        %1896 = vmatpush.msra.mxu0 0.0
        %1897 = vmatpush.msra.mxu0 0.0
        %1898 = vmatpush.msra.mxu0 0.0
        %1899 = vmatpush.msra.mxu0 0.0
        %1900 = vmatpush.msra.mxu0 %v1880
        %1901 = vmatmul.f32.gmra.mxu0 %v1883
        %v1902 = vpop.f32.mrf.mxu0
        %v1903 = vadd.f32 0.0, %v1902
        %1904 = vdwg.mxu0
        %1906 = vrot.lane.b32.xlu0 %v1903, 24
        %v1907 = vpop.permute.xlu0 %1906
        %1909 = vst.msk [vmem:[#allocation2 + $0x8] sm:$0xff] %vm1616, %v1907
        %v1910 = vld [vmem:[#allocation2] sm:$0xff]
        %v1911 = vld [vmem:[#allocation2 + $0x8] sm:$0xff]
        %v1913 = vsel %vm1249, %v1910, 0
        %v1916 = vsel %vm1249, %v1911, 0
        %1918 = vmatpush.msra.mxu0 0.0
        %1919 = vmatpush.msra.mxu0 0.0
        %1920 = vmatpush.msra.mxu0 0.0
        %1921 = vmatpush.msra.mxu0 0.0
        %1922 = vmatpush.msra.mxu0 0.0
        %1923 = vmatpush.msra.mxu0 0.0
        %1924 = vmatpush.msra.mxu0 0.0
        %1925 = vmatpush.msra.mxu0 0.0
        %1926 = vmatpush.msra.mxu0 0.0
        %1927 = vmatpush.msra.mxu0 0.0
        %1928 = vmatpush.msra.mxu0 0.0
        %1929 = vmatpush.msra.mxu0 0.0
        %1930 = vmatpush.msra.mxu0 %v1248
        %1931 = vmatpush.msra.mxu0 %v1247
        %1932 = vmatpush.msra.mxu0 %v1246
        %1933 = vmatpush.msra.mxu0 %v1245
        %1934 = vmatmul.f32.gmra.mxu0 %v1913
        %v1935 = vpop.f32.mrf.mxu0
        %v1936 = vadd.f32 %v1229, %v1935
        %1937 = vmatmul.f32.gmra.mxu0 %v1916
        %v1938 = vpop.f32.mrf.mxu0
        %v1939 = vadd.f32 %v1230, %v1938
        %1940 = vdwg.mxu0
        %v1941 = vld [vmem:[%s1199] sm:$0x1]
        %v1942 = vld [vmem:[%s1202] sm:$0x1]
        %v1943 = vsel %vm1249, %v1936, 0.0
        %1944 = vadd.xlane.f32.xlu0 %v1943
        %v1945 = vpop.xlane.xlu0 %1944
        %v1946 = vsel %vm1249, %v1939, 0.0
        %1947 = vadd.xlane.f32.xlu0 %v1946
        %v1948 = vpop.xlane.xlu0 %1947
        %v1949 = vmul.f32 %v1945, 0.03125
        %v1950 = vmul.f32 %v1948, 0.03125
        %v1951 = vmul.f32 %v1936, %v1936
        %v1952 = vmul.f32 %v1939, %v1939
        %v1953 = vsel %vm1249, %v1951, 0.0
        %1954 = vadd.xlane.f32.xlu0 %v1953
        %v1955 = vpop.xlane.xlu0 %1954
        %v1956 = vsel %vm1249, %v1952, 0.0
        %1957 = vadd.xlane.f32.xlu0 %v1956
        %v1958 = vpop.xlane.xlu0 %1957
        %v1959 = vmul.f32 %v1955, 0.03125
        %v1960 = vmul.f32 %v1958, 0.03125
        %v1961 = vmul.f32 %v1949, %v1949
        %v1962 = vmul.f32 %v1950, %v1950
        %v1963 = vsub.f32 %v1959, %v1961
        %v1964 = vsub.f32 %v1960, %v1962
        %v1965 = vsub.f32 %v1936, %v1949
        %v1966 = vsub.f32 %v1939, %v1950
        %v1967 = vadd.f32 %v1963, 1e-05
        %v1968 = vadd.f32 %v1964, 1e-05
        %v1969 = vrsqrt.pop %v1967
        %v1970 = vmul.f32 %v1969, %v1967
        %v1971 = vmul.f32 %v1970, %v1969
        %v1972 = vmul.f32 0.5, %v1971
        %v1973 = vsub.f32 1.5, %v1972
        %v1974 = vmul.f32 %v1969, %v1973
        %vm1975 = vweird.f32 %v1967
        %vm1976 = vweird.f32 %v1969
        %vm1977 = vmor %vm1975, %vm1976
        %v1978 = vsel %vm1977, %v1969, %v1974
        %v1979 = vrsqrt.pop %v1968
        %v1980 = vmul.f32 %v1979, %v1968
        %v1981 = vmul.f32 %v1980, %v1979
        %v1982 = vmul.f32 0.5, %v1981
        %v1983 = vsub.f32 1.5, %v1982
        %v1984 = vmul.f32 %v1979, %v1983
        %vm1985 = vweird.f32 %v1968
        %vm1986 = vweird.f32 %v1979
        %vm1987 = vmor %vm1985, %vm1986
        %v1988 = vsel %vm1987, %v1979, %v1984
        %v1989 = vmul.f32 %v1965, %v1978
        %v1990 = vmul.f32 %v1966, %v1988
        %v1992 = vperm.slane %v1941, 0
        %v1994 = vmul.f32 %v1989, %v1992
        %v1995 = vmul.f32 %v1990, %v1992
        %v1997 = vperm.slane %v1942, 0
        %v1999 = vadd.f32 %v1994, %v1997
        %v2000 = vadd.f32 %v1995, %v1997
        %v2001 = vld [vmem:[%s1008] sm:$0xff]
        %v2002 = vld [vmem:[%s1008 + $0x8] sm:$0xff]
        %v2003 = vld [vmem:[%s1008 + $0x10] sm:$0xff]
        %v2004 = vld [vmem:[%s1008 + $0x18] sm:$0xff]
        %v2005 = vld [vmem:[%s1018] sm:$0xff]
        %v2006 = vld [vmem:[%s1018 + $0x8] sm:$0xff]
        %v2007 = vld [vmem:[%s1018 + $0x10] sm:$0xff]
        %v2008 = vld [vmem:[%s1018 + $0x18] sm:$0xff]
        %v2009 = vld [vmem:[%s1028] sm:$0xff]
        %v2010 = vld [vmem:[%s1028 + $0x8] sm:$0xff]
        %v2011 = vld [vmem:[%s1028 + $0x10] sm:$0xff]
        %v2012 = vld [vmem:[%s1028 + $0x18] sm:$0xff]
        %v2013 = vld [vmem:[%s1038] sm:$0xff]
        %v2014 = vld [vmem:[%s1038 + $0x8] sm:$0xff]
        %v2015 = vld [vmem:[%s1038 + $0x10] sm:$0xff]
        %v2016 = vld [vmem:[%s1038 + $0x18] sm:$0xff]
        %v2018 = vsel %vm1249, %v1999, 0
        %v2021 = vsel %vm1249, %v2000, 0
        %2023 = vmatpush.msra.mxu0 0.0
        %2024 = vmatpush.msra.mxu0 0.0
        %2025 = vmatpush.msra.mxu0 0.0
        %2026 = vmatpush.msra.mxu0 0.0
        %2027 = vmatpush.msra.mxu0 0.0
        %2028 = vmatpush.msra.mxu0 0.0
        %2029 = vmatpush.msra.mxu0 0.0
        %2030 = vmatpush.msra.mxu0 0.0
        %2031 = vmatpush.msra.mxu0 0.0
        %2032 = vmatpush.msra.mxu0 0.0
        %2033 = vmatpush.msra.mxu0 0.0
        %2034 = vmatpush.msra.mxu0 0.0
        %2035 = vmatpush.msra.mxu0 %v2004
        %2036 = vmatpush.msra.mxu0 %v2003
        %2037 = vmatpush.msra.mxu0 %v2002
        %2038 = vmatpush.msra.mxu0 %v2001
        %2039 = vmatmul.f32.gmra.mxu0 %v2018
        %v2040 = vpop.f32.mrf.mxu0
        %v2041 = vadd.f32 0.0, %v2040
        %2042 = vmatmul.f32.gmra.mxu0 %v2021
        %v2043 = vpop.f32.mrf.mxu0
        %v2044 = vadd.f32 0.0, %v2043
        %2045 = vdwg.mxu0
        %v2047 = vsel %vm1249, %v1231, 0
        %v2050 = vsel %vm1249, %v1232, 0
        %2052 = vmatpush.msra.mxu0 0.0
        %2053 = vmatpush.msra.mxu0 0.0
        %2054 = vmatpush.msra.mxu0 0.0
        %2055 = vmatpush.msra.mxu0 0.0
        %2056 = vmatpush.msra.mxu0 0.0
        %2057 = vmatpush.msra.mxu0 0.0
        %2058 = vmatpush.msra.mxu0 0.0
        %2059 = vmatpush.msra.mxu0 0.0
        %2060 = vmatpush.msra.mxu0 0.0
        %2061 = vmatpush.msra.mxu0 0.0
        %2062 = vmatpush.msra.mxu0 0.0
        %2063 = vmatpush.msra.mxu0 0.0
        %2064 = vmatpush.msra.mxu0 %v2008
        %2065 = vmatpush.msra.mxu0 %v2007
        %2066 = vmatpush.msra.mxu0 %v2006
        %2067 = vmatpush.msra.mxu0 %v2005
        %2068 = vmatmul.f32.gmra.mxu0 %v2047
        %v2069 = vpop.f32.mrf.mxu0
        %v2070 = vadd.f32 0.0, %v2069
        %2071 = vmatmul.f32.gmra.mxu0 %v2050
        %v2072 = vpop.f32.mrf.mxu0
        %v2073 = vadd.f32 0.0, %v2072
        %2074 = vdwg.mxu0
        %2075 = vmatpush.msra.mxu0 0.0
        %2076 = vmatpush.msra.mxu0 0.0
        %2077 = vmatpush.msra.mxu0 0.0
        %2078 = vmatpush.msra.mxu0 0.0
        %2079 = vmatpush.msra.mxu0 0.0
        %2080 = vmatpush.msra.mxu0 0.0
        %2081 = vmatpush.msra.mxu0 0.0
        %2082 = vmatpush.msra.mxu0 0.0
        %2083 = vmatpush.msra.mxu0 0.0
        %2084 = vmatpush.msra.mxu0 0.0
        %2085 = vmatpush.msra.mxu0 0.0
        %2086 = vmatpush.msra.mxu0 0.0
        %2087 = vmatpush.msra.mxu0 %v2012
        %2088 = vmatpush.msra.mxu0 %v2011
        %2089 = vmatpush.msra.mxu0 %v2010
        %2090 = vmatpush.msra.mxu0 %v2009
        %2091 = vmatmul.f32.gmra.mxu0 %v2047
        %v2092 = vpop.f32.mrf.mxu0
        %v2093 = vadd.f32 0.0, %v2092
        %2094 = vmatmul.f32.gmra.mxu0 %v2050
        %v2095 = vpop.f32.mrf.mxu0
        %v2096 = vadd.f32 0.0, %v2095
        %2097 = vdwg.mxu0
        %v2098 = vld [vmem:[#allocation11] sm:$0xff]
        %v2099 = vld [vmem:[#allocation12] sm:$0xff]
        %v2101 = vsel %vm1327, %v2041, 0
        %v2104 = vsel %vm1327, %v2070, 0
        %2106 = vmatpush.xpose.msra.mxu0 0.0
        %2107 = vmatpush.xpose.msra.mxu0 0.0
        %2108 = vmatpush.xpose.msra.mxu0 0.0
        %2109 = vmatpush.xpose.msra.mxu0 0.0
        %2110 = vmatpush.xpose.msra.mxu0 0.0
        %2111 = vmatpush.xpose.msra.mxu0 0.0
        %2112 = vmatpush.xpose.msra.mxu0 0.0
        %2113 = vmatpush.xpose.msra.mxu0 0.0
        %2114 = vmatpush.xpose.msra.mxu0 0.0
        %2115 = vmatpush.xpose.msra.mxu0 0.0
        %2116 = vmatpush.xpose.msra.mxu0 0.0
        %2117 = vmatpush.xpose.msra.mxu0 0.0
        %2118 = vmatpush.xpose.msra.mxu0 0.0
        %2119 = vmatpush.xpose.msra.mxu0 0.0
        %2120 = vmatpush.xpose.msra.mxu0 0.0
        %2121 = vmatpush.xpose.msra.mxu0 %v2104
        %2122 = vmatmul.f32.gmra.mxu0 %v2101
        %v2123 = vpop.f32.mrf.mxu0
        %v2124 = vadd.f32 0.0, %v2123
        %2125 = vdwg.mxu0
        %v2126 = vmul.f32 %v2124, %v2098
        %v2127 = vadd.f32 %v2126, %v2099
        %v2128 = vsel %vm1327, %v2127, -inf
        %2129 = vmax.xlane.f32.xlu0 %v2128
        %v2130 = vpop.xlane.xlu0 %2129
        %v2131 = vsub.f32 %v2127, %v2130
        %v2132 = vmul.f32 %v2131, 1.442695
        %v2133 = vpow.pop %v2132
        %v2134 = vsel %vm1327, %v2133, 0.0
        %2135 = vadd.xlane.f32.xlu0 %v2134
        %v2136 = vpop.xlane.xlu0 %2135
        %v2137 = vrcp.pop %v2136
        %v2138 = vmul.f32 %v2133, %v2137
        %2139 = vst.msk [vmem:[%s1181] sm:$0xff] %vm1327, %v2138
        %v2141 = vsel %vm1327, %v2138, 0
        %2143 = vmatpush.msra.mxu0 0.0
        %2144 = vmatpush.msra.mxu0 0.0
        %2145 = vmatpush.msra.mxu0 0.0
        %2146 = vmatpush.msra.mxu0 0.0
        %2147 = vmatpush.msra.mxu0 0.0
        %2148 = vmatpush.msra.mxu0 0.0
        %2149 = vmatpush.msra.mxu0 0.0
        %2150 = vmatpush.msra.mxu0 0.0
        %2151 = vmatpush.msra.mxu0 0.0
        %2152 = vmatpush.msra.mxu0 0.0
        %2153 = vmatpush.msra.mxu0 0.0
        %2154 = vmatpush.msra.mxu0 0.0
        %2155 = vmatpush.msra.mxu0 0.0
        %2156 = vmatpush.msra.mxu0 0.0
        %2157 = vmatpush.msra.mxu0 0.0
        %2158 = vmatpush.msra.mxu0 %v2093
        %2159 = vmatmul.f32.gmra.mxu0 %v2141
        %v2160 = vpop.f32.mrf.mxu0
        %v2161 = vadd.f32 0.0, %v2160
        %2162 = vdwg.mxu0
        %2163 = vst.msk [vmem:[#allocation2] sm:$0xff] %vm1327, %v2161
        %2164 = vrot.lane.b32.xlu0 %v2041, 120
        %v2165 = vpop.permute.xlu0 %2164
        %2166 = vrot.lane.b32.xlu0 %v2070, 120
        %v2167 = vpop.permute.xlu0 %2166
        %v2168 = vsel %vm1327, %v2165, 0
        %v2170 = vsel %vm1327, %v2167, 0
        %2172 = vmatpush.xpose.msra.mxu0 0.0
        %2173 = vmatpush.xpose.msra.mxu0 0.0
        %2174 = vmatpush.xpose.msra.mxu0 0.0
        %2175 = vmatpush.xpose.msra.mxu0 0.0
        %2176 = vmatpush.xpose.msra.mxu0 0.0
        %2177 = vmatpush.xpose.msra.mxu0 0.0
        %2178 = vmatpush.xpose.msra.mxu0 0.0
        %2179 = vmatpush.xpose.msra.mxu0 0.0
        %2180 = vmatpush.xpose.msra.mxu0 0.0
        %2181 = vmatpush.xpose.msra.mxu0 0.0
        %2182 = vmatpush.xpose.msra.mxu0 0.0
        %2183 = vmatpush.xpose.msra.mxu0 0.0
        %2184 = vmatpush.xpose.msra.mxu0 0.0
        %2185 = vmatpush.xpose.msra.mxu0 0.0
        %2186 = vmatpush.xpose.msra.mxu0 0.0
        %2187 = vmatpush.xpose.msra.mxu0 %v2170
        %2188 = vmatmul.f32.gmra.mxu0 %v2168
        %v2189 = vpop.f32.mrf.mxu0
        %v2190 = vadd.f32 0.0, %v2189
        %2191 = vdwg.mxu0
        %v2192 = vmul.f32 %v2190, %v2098
        %v2193 = vadd.f32 %v2192, %v2099
        %v2194 = vsel %vm1327, %v2193, -inf
        %2195 = vmax.xlane.f32.xlu0 %v2194
        %v2196 = vpop.xlane.xlu0 %2195
        %v2197 = vsub.f32 %v2193, %v2196
        %v2198 = vmul.f32 %v2197, 1.442695
        %v2199 = vpow.pop %v2198
        %v2200 = vsel %vm1327, %v2199, 0.0
        %2201 = vadd.xlane.f32.xlu0 %v2200
        %v2202 = vpop.xlane.xlu0 %2201
        %v2203 = vrcp.pop %v2202
        %v2204 = vmul.f32 %v2199, %v2203
        %s2205 = scalar_lea.vmem %s1181, 8 [#allocation23]
        %2206 = vst.msk [vmem:[%s2205] sm:$0xff] %vm1327, %v2204
        %2208 = vrot.lane.b32.xlu0 %v2093, 120
        %v2209 = vpop.permute.xlu0 %2208
        %v2212 = vsel %vm1327, %v2204, 0
        %2214 = vmatpush.msra.mxu0 0.0
        %2215 = vmatpush.msra.mxu0 0.0
        %2216 = vmatpush.msra.mxu0 0.0
        %2217 = vmatpush.msra.mxu0 0.0
        %2218 = vmatpush.msra.mxu0 0.0
        %2219 = vmatpush.msra.mxu0 0.0
        %2220 = vmatpush.msra.mxu0 0.0
        %2221 = vmatpush.msra.mxu0 0.0
        %2222 = vmatpush.msra.mxu0 0.0
        %2223 = vmatpush.msra.mxu0 0.0
        %2224 = vmatpush.msra.mxu0 0.0
        %2225 = vmatpush.msra.mxu0 0.0
        %2226 = vmatpush.msra.mxu0 0.0
        %2227 = vmatpush.msra.mxu0 0.0
        %2228 = vmatpush.msra.mxu0 0.0
        %2229 = vmatpush.msra.mxu0 %v2209
        %2230 = vmatmul.f32.gmra.mxu0 %v2212
        %v2231 = vpop.f32.mrf.mxu0
        %v2232 = vadd.f32 0.0, %v2231
        %2233 = vdwg.mxu0
        %2235 = vrot.lane.b32.xlu0 %v2232, 8
        %v2236 = vpop.permute.xlu0 %2235
        %2238 = vst.msk [vmem:[#allocation2] sm:$0xff] %vm1466, %v2236
        %2239 = vrot.lane.b32.xlu0 %v2041, 112
        %v2240 = vpop.permute.xlu0 %2239
        %2241 = vrot.lane.b32.xlu0 %v2070, 112
        %v2242 = vpop.permute.xlu0 %2241
        %v2243 = vsel %vm1327, %v2240, 0
        %v2245 = vsel %vm1327, %v2242, 0
        %2247 = vmatpush.xpose.msra.mxu0 0.0
        %2248 = vmatpush.xpose.msra.mxu0 0.0
        %2249 = vmatpush.xpose.msra.mxu0 0.0
        %2250 = vmatpush.xpose.msra.mxu0 0.0
        %2251 = vmatpush.xpose.msra.mxu0 0.0
        %2252 = vmatpush.xpose.msra.mxu0 0.0
        %2253 = vmatpush.xpose.msra.mxu0 0.0
        %2254 = vmatpush.xpose.msra.mxu0 0.0
        %2255 = vmatpush.xpose.msra.mxu0 0.0
        %2256 = vmatpush.xpose.msra.mxu0 0.0
        %2257 = vmatpush.xpose.msra.mxu0 0.0
        %2258 = vmatpush.xpose.msra.mxu0 0.0
        %2259 = vmatpush.xpose.msra.mxu0 0.0
        %2260 = vmatpush.xpose.msra.mxu0 0.0
        %2261 = vmatpush.xpose.msra.mxu0 0.0
        %2262 = vmatpush.xpose.msra.mxu0 %v2245
        %2263 = vmatmul.f32.gmra.mxu0 %v2243
        %v2264 = vpop.f32.mrf.mxu0
        %v2265 = vadd.f32 0.0, %v2264
        %2266 = vdwg.mxu0
        %v2267 = vmul.f32 %v2265, %v2098
        %v2268 = vadd.f32 %v2267, %v2099
        %v2269 = vsel %vm1327, %v2268, -inf
        %2270 = vmax.xlane.f32.xlu0 %v2269
        %v2271 = vpop.xlane.xlu0 %2270
        %v2272 = vsub.f32 %v2268, %v2271
        %v2273 = vmul.f32 %v2272, 1.442695
        %v2274 = vpow.pop %v2273
        %v2275 = vsel %vm1327, %v2274, 0.0
        %2276 = vadd.xlane.f32.xlu0 %v2275
        %v2277 = vpop.xlane.xlu0 %2276
        %v2278 = vrcp.pop %v2277
        %v2279 = vmul.f32 %v2274, %v2278
        %s2280 = scalar_lea.vmem %s1181, 16 [#allocation23]
        %2281 = vst.msk [vmem:[%s2280] sm:$0xff] %vm1327, %v2279
        %2282 = vrot.lane.b32.xlu0 %v2093, 112
        %v2283 = vpop.permute.xlu0 %2282
        %v2286 = vsel %vm1327, %v2279, 0
        %2288 = vmatpush.msra.mxu0 0.0
        %2289 = vmatpush.msra.mxu0 0.0
        %2290 = vmatpush.msra.mxu0 0.0
        %2291 = vmatpush.msra.mxu0 0.0
        %2292 = vmatpush.msra.mxu0 0.0
        %2293 = vmatpush.msra.mxu0 0.0
        %2294 = vmatpush.msra.mxu0 0.0
        %2295 = vmatpush.msra.mxu0 0.0
        %2296 = vmatpush.msra.mxu0 0.0
        %2297 = vmatpush.msra.mxu0 0.0
        %2298 = vmatpush.msra.mxu0 0.0
        %2299 = vmatpush.msra.mxu0 0.0
        %2300 = vmatpush.msra.mxu0 0.0
        %2301 = vmatpush.msra.mxu0 0.0
        %2302 = vmatpush.msra.mxu0 0.0
        %2303 = vmatpush.msra.mxu0 %v2283
        %2304 = vmatmul.f32.gmra.mxu0 %v2286
        %v2305 = vpop.f32.mrf.mxu0
        %v2306 = vadd.f32 0.0, %v2305
        %2307 = vdwg.mxu0
        %2309 = vrot.lane.b32.xlu0 %v2306, 16
        %v2310 = vpop.permute.xlu0 %2309
        %2312 = vst.msk [vmem:[#allocation2] sm:$0xff] %vm1541, %v2310
        %2313 = vrot.lane.b32.xlu0 %v2041, 104
        %v2314 = vpop.permute.xlu0 %2313
        %2315 = vrot.lane.b32.xlu0 %v2070, 104
        %v2316 = vpop.permute.xlu0 %2315
        %v2317 = vsel %vm1327, %v2314, 0
        %v2319 = vsel %vm1327, %v2316, 0
        %2321 = vmatpush.xpose.msra.mxu0 0.0
        %2322 = vmatpush.xpose.msra.mxu0 0.0
        %2323 = vmatpush.xpose.msra.mxu0 0.0
        %2324 = vmatpush.xpose.msra.mxu0 0.0
        %2325 = vmatpush.xpose.msra.mxu0 0.0
        %2326 = vmatpush.xpose.msra.mxu0 0.0
        %2327 = vmatpush.xpose.msra.mxu0 0.0
        %2328 = vmatpush.xpose.msra.mxu0 0.0
        %2329 = vmatpush.xpose.msra.mxu0 0.0
        %2330 = vmatpush.xpose.msra.mxu0 0.0
        %2331 = vmatpush.xpose.msra.mxu0 0.0
        %2332 = vmatpush.xpose.msra.mxu0 0.0
        %2333 = vmatpush.xpose.msra.mxu0 0.0
        %2334 = vmatpush.xpose.msra.mxu0 0.0
        %2335 = vmatpush.xpose.msra.mxu0 0.0
        %2336 = vmatpush.xpose.msra.mxu0 %v2319
        %2337 = vmatmul.f32.gmra.mxu0 %v2317
        %v2338 = vpop.f32.mrf.mxu0
        %v2339 = vadd.f32 0.0, %v2338
        %2340 = vdwg.mxu0
        %v2341 = vmul.f32 %v2339, %v2098
        %v2342 = vadd.f32 %v2341, %v2099
        %v2343 = vsel %vm1327, %v2342, -inf
        %2344 = vmax.xlane.f32.xlu0 %v2343
        %v2345 = vpop.xlane.xlu0 %2344
        %v2346 = vsub.f32 %v2342, %v2345
        %v2347 = vmul.f32 %v2346, 1.442695
        %v2348 = vpow.pop %v2347
        %v2349 = vsel %vm1327, %v2348, 0.0
        %2350 = vadd.xlane.f32.xlu0 %v2349
        %v2351 = vpop.xlane.xlu0 %2350
        %v2352 = vrcp.pop %v2351
        %v2353 = vmul.f32 %v2348, %v2352
        %s2354 = scalar_lea.vmem %s1181, 24 [#allocation23]
        %2355 = vst.msk [vmem:[%s2354] sm:$0xff] %vm1327, %v2353
        %2356 = vrot.lane.b32.xlu0 %v2093, 104
        %v2357 = vpop.permute.xlu0 %2356
        %v2360 = vsel %vm1327, %v2353, 0
        %2362 = vmatpush.msra.mxu0 0.0
        %2363 = vmatpush.msra.mxu0 0.0
        %2364 = vmatpush.msra.mxu0 0.0
        %2365 = vmatpush.msra.mxu0 0.0
        %2366 = vmatpush.msra.mxu0 0.0
        %2367 = vmatpush.msra.mxu0 0.0
        %2368 = vmatpush.msra.mxu0 0.0
        %2369 = vmatpush.msra.mxu0 0.0
        %2370 = vmatpush.msra.mxu0 0.0
        %2371 = vmatpush.msra.mxu0 0.0
        %2372 = vmatpush.msra.mxu0 0.0
        %2373 = vmatpush.msra.mxu0 0.0
        %2374 = vmatpush.msra.mxu0 0.0
        %2375 = vmatpush.msra.mxu0 0.0
        %2376 = vmatpush.msra.mxu0 0.0
        %2377 = vmatpush.msra.mxu0 %v2357
        %2378 = vmatmul.f32.gmra.mxu0 %v2360
        %v2379 = vpop.f32.mrf.mxu0
        %v2380 = vadd.f32 0.0, %v2379
        %2381 = vdwg.mxu0
        %2383 = vrot.lane.b32.xlu0 %v2380, 24
        %v2384 = vpop.permute.xlu0 %2383
        %2386 = vst.msk [vmem:[#allocation2] sm:$0xff] %vm1616, %v2384
        %s2387 = scalar_lea.vmem [#allocation11], 8
        %v2388 = vld [vmem:[%s2387] sm:$0xff]
        %s2389 = scalar_lea.vmem [#allocation12], 8
        %v2390 = vld [vmem:[%s2389] sm:$0xff]
        %v2392 = vsel %vm1327, %v2044, 0
        %v2395 = vsel %vm1327, %v2073, 0
        %2397 = vmatpush.xpose.msra.mxu0 0.0
        %2398 = vmatpush.xpose.msra.mxu0 0.0
        %2399 = vmatpush.xpose.msra.mxu0 0.0
        %2400 = vmatpush.xpose.msra.mxu0 0.0
        %2401 = vmatpush.xpose.msra.mxu0 0.0
        %2402 = vmatpush.xpose.msra.mxu0 0.0
        %2403 = vmatpush.xpose.msra.mxu0 0.0
        %2404 = vmatpush.xpose.msra.mxu0 0.0
        %2405 = vmatpush.xpose.msra.mxu0 0.0
        %2406 = vmatpush.xpose.msra.mxu0 0.0
        %2407 = vmatpush.xpose.msra.mxu0 0.0
        %2408 = vmatpush.xpose.msra.mxu0 0.0
        %2409 = vmatpush.xpose.msra.mxu0 0.0
        %2410 = vmatpush.xpose.msra.mxu0 0.0
        %2411 = vmatpush.xpose.msra.mxu0 0.0
        %2412 = vmatpush.xpose.msra.mxu0 %v2395
        %2413 = vmatmul.f32.gmra.mxu0 %v2392
        %v2414 = vpop.f32.mrf.mxu0
        %v2415 = vadd.f32 0.0, %v2414
        %2416 = vdwg.mxu0
        %v2417 = vmul.f32 %v2415, %v2388
        %v2418 = vadd.f32 %v2417, %v2390
        %v2419 = vsel %vm1327, %v2418, -inf
        %2420 = vmax.xlane.f32.xlu0 %v2419
        %v2421 = vpop.xlane.xlu0 %2420
        %v2422 = vsub.f32 %v2418, %v2421
        %v2423 = vmul.f32 %v2422, 1.442695
        %v2424 = vpow.pop %v2423
        %v2425 = vsel %vm1327, %v2424, 0.0
        %2426 = vadd.xlane.f32.xlu0 %v2425
        %v2427 = vpop.xlane.xlu0 %2426
        %v2428 = vrcp.pop %v2427
        %v2429 = vmul.f32 %v2424, %v2428
        %s2430 = scalar_lea.vmem %s1181, 32 [#allocation23]
        %2431 = vst.msk [vmem:[%s2430] sm:$0xff] %vm1327, %v2429
        %v2433 = vsel %vm1327, %v2429, 0
        %2435 = vmatpush.msra.mxu0 0.0
        %2436 = vmatpush.msra.mxu0 0.0
        %2437 = vmatpush.msra.mxu0 0.0
        %2438 = vmatpush.msra.mxu0 0.0
        %2439 = vmatpush.msra.mxu0 0.0
        %2440 = vmatpush.msra.mxu0 0.0
        %2441 = vmatpush.msra.mxu0 0.0
        %2442 = vmatpush.msra.mxu0 0.0
        %2443 = vmatpush.msra.mxu0 0.0
        %2444 = vmatpush.msra.mxu0 0.0
        %2445 = vmatpush.msra.mxu0 0.0
        %2446 = vmatpush.msra.mxu0 0.0
        %2447 = vmatpush.msra.mxu0 0.0
        %2448 = vmatpush.msra.mxu0 0.0
        %2449 = vmatpush.msra.mxu0 0.0
        %2450 = vmatpush.msra.mxu0 %v2096
        %2451 = vmatmul.f32.gmra.mxu0 %v2433
        %v2452 = vpop.f32.mrf.mxu0
        %v2453 = vadd.f32 0.0, %v2452
        %2454 = vdwg.mxu0
        %2455 = vst.msk [vmem:[#allocation2 + $0x8] sm:$0xff] %vm1327, %v2453
        %2456 = vrot.lane.b32.xlu0 %v2044, 120
        %v2457 = vpop.permute.xlu0 %2456
        %2458 = vrot.lane.b32.xlu0 %v2073, 120
        %v2459 = vpop.permute.xlu0 %2458
        %v2460 = vsel %vm1327, %v2457, 0
        %v2462 = vsel %vm1327, %v2459, 0
        %2464 = vmatpush.xpose.msra.mxu0 0.0
        %2465 = vmatpush.xpose.msra.mxu0 0.0
        %2466 = vmatpush.xpose.msra.mxu0 0.0
        %2467 = vmatpush.xpose.msra.mxu0 0.0
        %2468 = vmatpush.xpose.msra.mxu0 0.0
        %2469 = vmatpush.xpose.msra.mxu0 0.0
        %2470 = vmatpush.xpose.msra.mxu0 0.0
        %2471 = vmatpush.xpose.msra.mxu0 0.0
        %2472 = vmatpush.xpose.msra.mxu0 0.0
        %2473 = vmatpush.xpose.msra.mxu0 0.0
        %2474 = vmatpush.xpose.msra.mxu0 0.0
        %2475 = vmatpush.xpose.msra.mxu0 0.0
        %2476 = vmatpush.xpose.msra.mxu0 0.0
        %2477 = vmatpush.xpose.msra.mxu0 0.0
        %2478 = vmatpush.xpose.msra.mxu0 0.0
        %2479 = vmatpush.xpose.msra.mxu0 %v2462
        %2480 = vmatmul.f32.gmra.mxu0 %v2460
        %v2481 = vpop.f32.mrf.mxu0
        %v2482 = vadd.f32 0.0, %v2481
        %2483 = vdwg.mxu0
        %v2484 = vmul.f32 %v2482, %v2388
        %v2485 = vadd.f32 %v2484, %v2390
        %v2486 = vsel %vm1327, %v2485, -inf
        %2487 = vmax.xlane.f32.xlu0 %v2486
        %v2488 = vpop.xlane.xlu0 %2487
        %v2489 = vsub.f32 %v2485, %v2488
        %v2490 = vmul.f32 %v2489, 1.442695
        %v2491 = vpow.pop %v2490
        %v2492 = vsel %vm1327, %v2491, 0.0
        %2493 = vadd.xlane.f32.xlu0 %v2492
        %v2494 = vpop.xlane.xlu0 %2493
        %v2495 = vrcp.pop %v2494
        %v2496 = vmul.f32 %v2491, %v2495
        %s2497 = scalar_lea.vmem %s1181, 40 [#allocation23]
        %2498 = vst.msk [vmem:[%s2497] sm:$0xff] %vm1327, %v2496
        %2500 = vrot.lane.b32.xlu0 %v2096, 120
        %v2501 = vpop.permute.xlu0 %2500
        %v2504 = vsel %vm1327, %v2496, 0
        %2506 = vmatpush.msra.mxu0 0.0
        %2507 = vmatpush.msra.mxu0 0.0
        %2508 = vmatpush.msra.mxu0 0.0
        %2509 = vmatpush.msra.mxu0 0.0
        %2510 = vmatpush.msra.mxu0 0.0
        %2511 = vmatpush.msra.mxu0 0.0
        %2512 = vmatpush.msra.mxu0 0.0
        %2513 = vmatpush.msra.mxu0 0.0
        %2514 = vmatpush.msra.mxu0 0.0
        %2515 = vmatpush.msra.mxu0 0.0
        %2516 = vmatpush.msra.mxu0 0.0
        %2517 = vmatpush.msra.mxu0 0.0
        %2518 = vmatpush.msra.mxu0 0.0
        %2519 = vmatpush.msra.mxu0 0.0
        %2520 = vmatpush.msra.mxu0 0.0
        %2521 = vmatpush.msra.mxu0 %v2501
        %2522 = vmatmul.f32.gmra.mxu0 %v2504
        %v2523 = vpop.f32.mrf.mxu0
        %v2524 = vadd.f32 0.0, %v2523
        %2525 = vdwg.mxu0
        %2527 = vrot.lane.b32.xlu0 %v2524, 8
        %v2528 = vpop.permute.xlu0 %2527
        %2530 = vst.msk [vmem:[#allocation2 + $0x8] sm:$0xff] %vm1466, %v2528
        %2531 = vrot.lane.b32.xlu0 %v2044, 112
        %v2532 = vpop.permute.xlu0 %2531
        %2533 = vrot.lane.b32.xlu0 %v2073, 112
        %v2534 = vpop.permute.xlu0 %2533
        %v2535 = vsel %vm1327, %v2532, 0
        %v2537 = vsel %vm1327, %v2534, 0
        %2539 = vmatpush.xpose.msra.mxu0 0.0
        %2540 = vmatpush.xpose.msra.mxu0 0.0
        %2541 = vmatpush.xpose.msra.mxu0 0.0
        %2542 = vmatpush.xpose.msra.mxu0 0.0
        %2543 = vmatpush.xpose.msra.mxu0 0.0
        %2544 = vmatpush.xpose.msra.mxu0 0.0
        %2545 = vmatpush.xpose.msra.mxu0 0.0
        %2546 = vmatpush.xpose.msra.mxu0 0.0
        %2547 = vmatpush.xpose.msra.mxu0 0.0
        %2548 = vmatpush.xpose.msra.mxu0 0.0
        %2549 = vmatpush.xpose.msra.mxu0 0.0
        %2550 = vmatpush.xpose.msra.mxu0 0.0
        %2551 = vmatpush.xpose.msra.mxu0 0.0
        %2552 = vmatpush.xpose.msra.mxu0 0.0
        %2553 = vmatpush.xpose.msra.mxu0 0.0
        %2554 = vmatpush.xpose.msra.mxu0 %v2537
        %2555 = vmatmul.f32.gmra.mxu0 %v2535
        %v2556 = vpop.f32.mrf.mxu0
        %v2557 = vadd.f32 0.0, %v2556
        %2558 = vdwg.mxu0
        %v2559 = vmul.f32 %v2557, %v2388
        %v2560 = vadd.f32 %v2559, %v2390
        %v2561 = vsel %vm1327, %v2560, -inf
        %2562 = vmax.xlane.f32.xlu0 %v2561
        %v2563 = vpop.xlane.xlu0 %2562
        %v2564 = vsub.f32 %v2560, %v2563
        %v2565 = vmul.f32 %v2564, 1.442695
        %v2566 = vpow.pop %v2565
        %v2567 = vsel %vm1327, %v2566, 0.0
        %2568 = vadd.xlane.f32.xlu0 %v2567
        %v2569 = vpop.xlane.xlu0 %2568
        %v2570 = vrcp.pop %v2569
        %v2571 = vmul.f32 %v2566, %v2570
        %s2572 = scalar_lea.vmem %s1181, 48 [#allocation23]
        %2573 = vst.msk [vmem:[%s2572] sm:$0xff] %vm1327, %v2571
        %2574 = vrot.lane.b32.xlu0 %v2096, 112
        %v2575 = vpop.permute.xlu0 %2574
        %v2578 = vsel %vm1327, %v2571, 0
        %2580 = vmatpush.msra.mxu0 0.0
        %2581 = vmatpush.msra.mxu0 0.0
        %2582 = vmatpush.msra.mxu0 0.0
        %2583 = vmatpush.msra.mxu0 0.0
        %2584 = vmatpush.msra.mxu0 0.0
        %2585 = vmatpush.msra.mxu0 0.0
        %2586 = vmatpush.msra.mxu0 0.0
        %2587 = vmatpush.msra.mxu0 0.0
        %2588 = vmatpush.msra.mxu0 0.0
        %2589 = vmatpush.msra.mxu0 0.0
        %2590 = vmatpush.msra.mxu0 0.0
        %2591 = vmatpush.msra.mxu0 0.0
        %2592 = vmatpush.msra.mxu0 0.0
        %2593 = vmatpush.msra.mxu0 0.0
        %2594 = vmatpush.msra.mxu0 0.0
        %2595 = vmatpush.msra.mxu0 %v2575
        %2596 = vmatmul.f32.gmra.mxu0 %v2578
        %v2597 = vpop.f32.mrf.mxu0
        %v2598 = vadd.f32 0.0, %v2597
        %2599 = vdwg.mxu0
        %2601 = vrot.lane.b32.xlu0 %v2598, 16
        %v2602 = vpop.permute.xlu0 %2601
        %2604 = vst.msk [vmem:[#allocation2 + $0x8] sm:$0xff] %vm1541, %v2602
        %2605 = vrot.lane.b32.xlu0 %v2044, 104
        %v2606 = vpop.permute.xlu0 %2605
        %2607 = vrot.lane.b32.xlu0 %v2073, 104
        %v2608 = vpop.permute.xlu0 %2607
        %v2609 = vsel %vm1327, %v2606, 0
        %v2611 = vsel %vm1327, %v2608, 0
        %2613 = vmatpush.xpose.msra.mxu0 0.0
        %2614 = vmatpush.xpose.msra.mxu0 0.0
        %2615 = vmatpush.xpose.msra.mxu0 0.0
        %2616 = vmatpush.xpose.msra.mxu0 0.0
        %2617 = vmatpush.xpose.msra.mxu0 0.0
        %2618 = vmatpush.xpose.msra.mxu0 0.0
        %2619 = vmatpush.xpose.msra.mxu0 0.0
        %2620 = vmatpush.xpose.msra.mxu0 0.0
        %2621 = vmatpush.xpose.msra.mxu0 0.0
        %2622 = vmatpush.xpose.msra.mxu0 0.0
        %2623 = vmatpush.xpose.msra.mxu0 0.0
        %2624 = vmatpush.xpose.msra.mxu0 0.0
        %2625 = vmatpush.xpose.msra.mxu0 0.0
        %2626 = vmatpush.xpose.msra.mxu0 0.0
        %2627 = vmatpush.xpose.msra.mxu0 0.0
        %2628 = vmatpush.xpose.msra.mxu0 %v2611
        %2629 = vmatmul.f32.gmra.mxu0 %v2609
        %v2630 = vpop.f32.mrf.mxu0
        %v2631 = vadd.f32 0.0, %v2630
        %2632 = vdwg.mxu0
        %v2633 = vmul.f32 %v2631, %v2388
        %v2634 = vadd.f32 %v2633, %v2390
        %v2635 = vsel %vm1327, %v2634, -inf
        %2636 = vmax.xlane.f32.xlu0 %v2635
        %v2637 = vpop.xlane.xlu0 %2636
        %v2638 = vsub.f32 %v2634, %v2637
        %v2639 = vmul.f32 %v2638, 1.442695
        %v2640 = vpow.pop %v2639
        %v2641 = vsel %vm1327, %v2640, 0.0
        %2642 = vadd.xlane.f32.xlu0 %v2641
        %v2643 = vpop.xlane.xlu0 %2642
        %v2644 = vrcp.pop %v2643
        %v2645 = vmul.f32 %v2640, %v2644
        %s2646 = scalar_lea.vmem %s1181, 56 [#allocation23]
        %2647 = vst.msk [vmem:[%s2646] sm:$0xff] %vm1327, %v2645
        %2648 = vrot.lane.b32.xlu0 %v2096, 104
        %v2649 = vpop.permute.xlu0 %2648
        %v2652 = vsel %vm1327, %v2645, 0
        %2654 = vmatpush.msra.mxu0 0.0
        %2655 = vmatpush.msra.mxu0 0.0
        %2656 = vmatpush.msra.mxu0 0.0
        %2657 = vmatpush.msra.mxu0 0.0
        %2658 = vmatpush.msra.mxu0 0.0
        %2659 = vmatpush.msra.mxu0 0.0
        %2660 = vmatpush.msra.mxu0 0.0
        %2661 = vmatpush.msra.mxu0 0.0
        %2662 = vmatpush.msra.mxu0 0.0
        %2663 = vmatpush.msra.mxu0 0.0
        %2664 = vmatpush.msra.mxu0 0.0
        %2665 = vmatpush.msra.mxu0 0.0
        %2666 = vmatpush.msra.mxu0 0.0
        %2667 = vmatpush.msra.mxu0 0.0
        %2668 = vmatpush.msra.mxu0 0.0
        %2669 = vmatpush.msra.mxu0 %v2649
        %2670 = vmatmul.f32.gmra.mxu0 %v2652
        %v2671 = vpop.f32.mrf.mxu0
        %v2672 = vadd.f32 0.0, %v2671
        %2673 = vdwg.mxu0
        %2675 = vrot.lane.b32.xlu0 %v2672, 24
        %v2676 = vpop.permute.xlu0 %2675
        %2678 = vst.msk [vmem:[#allocation2 + $0x8] sm:$0xff] %vm1616, %v2676
        %v2679 = vld [vmem:[#allocation2] sm:$0xff]
        %v2680 = vld [vmem:[#allocation2 + $0x8] sm:$0xff]
        %v2682 = vsel %vm1249, %v2679, 0
        %v2685 = vsel %vm1249, %v2680, 0
        %2687 = vmatpush.msra.mxu0 0.0
        %2688 = vmatpush.msra.mxu0 0.0
        %2689 = vmatpush.msra.mxu0 0.0
        %2690 = vmatpush.msra.mxu0 0.0
        %2691 = vmatpush.msra.mxu0 0.0
        %2692 = vmatpush.msra.mxu0 0.0
        %2693 = vmatpush.msra.mxu0 0.0
        %2694 = vmatpush.msra.mxu0 0.0
        %2695 = vmatpush.msra.mxu0 0.0
        %2696 = vmatpush.msra.mxu0 0.0
        %2697 = vmatpush.msra.mxu0 0.0
        %2698 = vmatpush.msra.mxu0 0.0
        %2699 = vmatpush.msra.mxu0 %v2016
        %2700 = vmatpush.msra.mxu0 %v2015
        %2701 = vmatpush.msra.mxu0 %v2014
        %2702 = vmatpush.msra.mxu0 %v2013
        %2703 = vmatmul.f32.gmra.mxu0 %v2682
        %v2704 = vpop.f32.mrf.mxu0
        %v2705 = vadd.f32 %v1999, %v2704
        %2706 = vmatmul.f32.gmra.mxu0 %v2685
        %v2707 = vpop.f32.mrf.mxu0
        %v2708 = vadd.f32 %v2000, %v2707
        %2709 = vdwg.mxu0
        %v2710 = vld [vmem:[%s1205] sm:$0x1]
        %v2711 = vld [vmem:[%s1208] sm:$0x1]
        %v2712 = vsel %vm1249, %v2705, 0.0
        %2713 = vadd.xlane.f32.xlu0 %v2712
        %v2714 = vpop.xlane.xlu0 %2713
        %v2715 = vsel %vm1249, %v2708, 0.0
        %2716 = vadd.xlane.f32.xlu0 %v2715
        %v2717 = vpop.xlane.xlu0 %2716
        %v2718 = vmul.f32 %v2714, 0.03125
        %v2719 = vmul.f32 %v2717, 0.03125
        %v2720 = vmul.f32 %v2705, %v2705
        %v2721 = vmul.f32 %v2708, %v2708
        %v2722 = vsel %vm1249, %v2720, 0.0
        %2723 = vadd.xlane.f32.xlu0 %v2722
        %v2724 = vpop.xlane.xlu0 %2723
        %v2725 = vsel %vm1249, %v2721, 0.0
        %2726 = vadd.xlane.f32.xlu0 %v2725
        %v2727 = vpop.xlane.xlu0 %2726
        %v2728 = vmul.f32 %v2724, 0.03125
        %v2729 = vmul.f32 %v2727, 0.03125
        %v2730 = vmul.f32 %v2718, %v2718
        %v2731 = vmul.f32 %v2719, %v2719
        %v2732 = vsub.f32 %v2728, %v2730
        %v2733 = vsub.f32 %v2729, %v2731
        %v2734 = vsub.f32 %v2705, %v2718
        %v2735 = vsub.f32 %v2708, %v2719
        %v2736 = vadd.f32 %v2732, 1e-05
        %v2737 = vadd.f32 %v2733, 1e-05
        %v2738 = vrsqrt.pop %v2736
        %v2739 = vmul.f32 %v2738, %v2736
        %v2740 = vmul.f32 %v2739, %v2738
        %v2741 = vmul.f32 0.5, %v2740
        %v2742 = vsub.f32 1.5, %v2741
        %v2743 = vmul.f32 %v2738, %v2742
        %vm2744 = vweird.f32 %v2736
        %vm2745 = vweird.f32 %v2738
        %vm2746 = vmor %vm2744, %vm2745
        %v2747 = vsel %vm2746, %v2738, %v2743
        %v2748 = vrsqrt.pop %v2737
        %v2749 = vmul.f32 %v2748, %v2737
        %v2750 = vmul.f32 %v2749, %v2748
        %v2751 = vmul.f32 0.5, %v2750
        %v2752 = vsub.f32 1.5, %v2751
        %v2753 = vmul.f32 %v2748, %v2752
        %vm2754 = vweird.f32 %v2737
        %vm2755 = vweird.f32 %v2748
        %vm2756 = vmor %vm2754, %vm2755
        %v2757 = vsel %vm2756, %v2748, %v2753
        %v2758 = vmul.f32 %v2734, %v2747
        %v2759 = vmul.f32 %v2735, %v2757
        %v2761 = vperm.slane %v2710, 0
        %v2763 = vmul.f32 %v2758, %v2761
        %v2764 = vmul.f32 %v2759, %v2761
        %v2766 = vperm.slane %v2711, 0
        %v2768 = vadd.f32 %v2763, %v2766
        %v2769 = vadd.f32 %v2764, %v2766
        %v2770 = vld [vmem:[%s1048] sm:$0xff]
        %v2771 = vld [vmem:[%s1048 + $0x8] sm:$0xff]
        %v2772 = vld [vmem:[%s1048 + $0x10] sm:$0xff]
        %v2773 = vld [vmem:[%s1048 + $0x18] sm:$0xff]
        %v2775 = vsel %vm1249, %v2768, 0
        %v2778 = vsel %vm1249, %v2769, 0
        %2780 = vmatpush.msra.mxu0 0.0
        %2781 = vmatpush.msra.mxu0 0.0
        %2782 = vmatpush.msra.mxu0 0.0
        %2783 = vmatpush.msra.mxu0 0.0
        %2784 = vmatpush.msra.mxu0 0.0
        %2785 = vmatpush.msra.mxu0 0.0
        %2786 = vmatpush.msra.mxu0 0.0
        %2787 = vmatpush.msra.mxu0 0.0
        %2788 = vmatpush.msra.mxu0 0.0
        %2789 = vmatpush.msra.mxu0 0.0
        %2790 = vmatpush.msra.mxu0 0.0
        %2791 = vmatpush.msra.mxu0 0.0
        %2792 = vmatpush.msra.mxu0 %v2773
        %2793 = vmatpush.msra.mxu0 %v2772
        %2794 = vmatpush.msra.mxu0 %v2771
        %2795 = vmatpush.msra.mxu0 %v2770
        %2796 = vmatmul.f32.gmra.mxu0 %v2775
        %v2797 = vpop.f32.mrf.mxu0
        %v2798 = vadd.f32 0.0, %v2797
        %2799 = vmatmul.f32.gmra.mxu0 %v2778
        %v2800 = vpop.f32.mrf.mxu0
        %v2801 = vadd.f32 0.0, %v2800
        %2802 = vdwg.mxu0
        %v2803 = vmax.f32 %v2798, 0.0
        %v2804 = vmax.f32 %v2801, 0.0
        %v2805 = vld [vmem:[%s1213] sm:$0xff]
        %v2806 = vld [vmem:[%s1213 + $0x8] sm:$0xff]
        %v2807 = vld [vmem:[%s1213 + $0x10] sm:$0xff]
        %v2808 = vld [vmem:[%s1213 + $0x18] sm:$0xff]
        %v2809 = vld [vmem:[%s1213 + $0x20] sm:$0xff]
        %v2810 = vld [vmem:[%s1213 + $0x28] sm:$0xff]
        %v2811 = vld [vmem:[%s1213 + $0x30] sm:$0xff]
        %v2812 = vld [vmem:[%s1213 + $0x38] sm:$0xff]
        %vm2813 = vcmask 523264
        %v2815 = vsel %vm2813, %v2803, 0
        %v2818 = vsel %vm2813, %v2804, 0
        %2820 = vmatpush.msra.mxu0 0.0
        %2821 = vmatpush.msra.mxu0 0.0
        %2822 = vmatpush.msra.mxu0 0.0
        %2823 = vmatpush.msra.mxu0 0.0
        %2824 = vmatpush.msra.mxu0 0.0
        %2825 = vmatpush.msra.mxu0 0.0
        %2826 = vmatpush.msra.mxu0 0.0
        %2827 = vmatpush.msra.mxu0 0.0
        %2828 = vmatpush.msra.mxu0 %v2812
        %2829 = vmatpush.msra.mxu0 %v2811
        %2830 = vmatpush.msra.mxu0 %v2810
        %2831 = vmatpush.msra.mxu0 %v2809
        %2832 = vmatpush.msra.mxu0 %v2808
        %2833 = vmatpush.msra.mxu0 %v2807
        %2834 = vmatpush.msra.mxu0 %v2806
        %2835 = vmatpush.msra.mxu0 %v2805
        %2836 = vmatmul.f32.gmra.mxu0 %v2815
        %v2837 = vpop.f32.mrf.mxu0
        %v2838 = vadd.f32 %v2768, %v2837
        %2839 = vmatmul.f32.gmra.mxu0 %v2818
        %v2840 = vpop.f32.mrf.mxu0
        %v2841 = vadd.f32 %v2769, %v2840
        %2842 = vdwg.mxu0
        %v2843 = vld [vmem:[%s1216] sm:$0x1]
        %v2844 = vld [vmem:[%s1219] sm:$0x1]
        %v2845 = vsel %vm1249, %v2838, 0.0
        %2846 = vadd.xlane.f32.xlu0 %v2845
        %v2847 = vpop.xlane.xlu0 %2846
        %v2848 = vsel %vm1249, %v2841, 0.0
        %2849 = vadd.xlane.f32.xlu0 %v2848
        %v2850 = vpop.xlane.xlu0 %2849
        %v2851 = vmul.f32 %v2847, 0.03125
        %v2852 = vmul.f32 %v2850, 0.03125
        %v2853 = vmul.f32 %v2838, %v2838
        %v2854 = vmul.f32 %v2841, %v2841
        %v2855 = vsel %vm1249, %v2853, 0.0
        %2856 = vadd.xlane.f32.xlu0 %v2855
        %v2857 = vpop.xlane.xlu0 %2856
        %v2858 = vsel %vm1249, %v2854, 0.0
        %2859 = vadd.xlane.f32.xlu0 %v2858
        %v2860 = vpop.xlane.xlu0 %2859
        %v2861 = vmul.f32 %v2857, 0.03125
        %v2862 = vmul.f32 %v2860, 0.03125
        %v2863 = vmul.f32 %v2851, %v2851
        %v2864 = vmul.f32 %v2852, %v2852
        %v2865 = vsub.f32 %v2861, %v2863
        %v2866 = vsub.f32 %v2862, %v2864
        %v2867 = vsub.f32 %v2838, %v2851
        %v2868 = vsub.f32 %v2841, %v2852
        %v2869 = vadd.f32 %v2865, 1e-05
        %v2870 = vadd.f32 %v2866, 1e-05
        %v2871 = vrsqrt.pop %v2869
        %v2872 = vmul.f32 %v2871, %v2869
        %v2873 = vmul.f32 %v2872, %v2871
        %v2874 = vmul.f32 0.5, %v2873
        %v2875 = vsub.f32 1.5, %v2874
        %v2876 = vmul.f32 %v2871, %v2875
        %vm2877 = vweird.f32 %v2869
        %vm2878 = vweird.f32 %v2871
        %vm2879 = vmor %vm2877, %vm2878
        %v2880 = vsel %vm2879, %v2871, %v2876
        %v2881 = vrsqrt.pop %v2870
        %v2882 = vmul.f32 %v2881, %v2870
        %v2883 = vmul.f32 %v2882, %v2881
        %v2884 = vmul.f32 0.5, %v2883
        %v2885 = vsub.f32 1.5, %v2884
        %v2886 = vmul.f32 %v2881, %v2885
        %vm2887 = vweird.f32 %v2870
        %vm2888 = vweird.f32 %v2881
        %vm2889 = vmor %vm2887, %vm2888
        %v2890 = vsel %vm2889, %v2881, %v2886
        %v2891 = vmul.f32 %v2867, %v2880
        %v2892 = vmul.f32 %v2868, %v2890
        %v2894 = vperm.slane %v2843, 0
        %v2896 = vmul.f32 %v2891, %v2894
        %v2897 = vmul.f32 %v2892, %v2894
        %v2899 = vperm.slane %v2844, 0
        %v2901 = vadd.f32 %v2896, %v2899
        %v2902 = vadd.f32 %v2897, %v2899
        %2903 = vst.msk [vmem:[#allocation20] sm:$0xff] %vm1249, %v2901
        %2904 = vst.msk [vmem:[#allocation20 + $0x8] sm:$0xff] %vm1249, %v2902
        %s2905 = sand.u32 %s44, 1
        %s2906 = scalar_lea.sflag [#allocation22], %s2905
        %s2907 = sand.u32 %s615, 1
        %s2908 = smul.addr %s2907, 64
        %s2909 = scalar_lea.vmem [#allocation21], %s2908
        %s2910 = sand.u32 %s44, 1
        %s2911 = scalar_lea.sflag [#allocation22], %s2910
        %s2912 = sand.u32 %s641, 1
        %s2913 = smul.addr %s2912, 64
        %s2914 = scalar_lea.vmem [#allocation23], %s2913
        // Predicated region
        $region161: #{tpu_custom_call.1} parent=107 // pred_check
          %p2915 = pneg %p599
        $region162: #{tpu_custom_call.1} parent=107 // pred_check_branch
          %2917 = sbr.rel (%p2915) target = $region164
        $region163: #{tpu_custom_call.1} parent=107 // pred_region
          %2919 = vsyncadd [#allocation5], 0
          %s2920 = sshll.u32 [#allocation20], 4
          %s2921 = int_to_ptr.vmem [resolvable:$true] %s2920
          %s2922 = sshll.u32 %s22, 4
          %s2923 = int_to_ptr.hbm [resolvable:$true] %s2922
          %2928 = dma.vmem_to_hbm [thread:$0]  %s2921, 256, %s2923, [#allocation5], 128, 128, 8
        $region164: #{tpu_custom_call.1} parent=107 // pred_fallthru
          _
        // Predicated region
        $region165: #{tpu_custom_call.1} parent=107 // pred_check
          %p2929 = pneg %p625
        $region166: #{tpu_custom_call.1} parent=107 // pred_check_branch
          %2931 = sbr.rel (%p2929) target = $region168
        $region167: #{tpu_custom_call.1} parent=107 // pred_region
          %2933 = vsyncadd %s2906, 0
          %s2934 = smul.addr %s44, 8
          %s2935 = smul.addr %s2934, 8
          %s2936 = scalar_lea.hbm %s23, %s2935
          %s2937 = sshll.u32 %s2909, 4
          %s2938 = int_to_ptr.vmem [resolvable:$true] %s2937
          %s2939 = sshll.u32 %s2936, 4
          %s2940 = int_to_ptr.hbm [resolvable:$true] %s2939
          %2945 = dma.vmem_to_hbm [thread:$0]  %s2938, 1024, %s2940, %s2906, 128, 128, 8
        $region168: #{tpu_custom_call.1} parent=107 // pred_fallthru
          _
        // Predicated region
        $region169: #{tpu_custom_call.1} parent=107 // pred_check
          %p2946 = pneg %p651
        $region170: #{tpu_custom_call.1} parent=107 // pred_check_branch
          %2948 = sbr.rel (%p2946) target = $region172
        $region171: #{tpu_custom_call.1} parent=107 // pred_region
          %2950 = vsyncadd %s2911, 0
          %s2951 = smul.addr %s44, 8
          %s2952 = smul.addr %s2951, 8
          %s2953 = scalar_lea.hbm %s24, %s2952
          %s2954 = sshll.u32 %s2914, 4
          %s2955 = int_to_ptr.vmem [resolvable:$true] %s2954
          %s2956 = sshll.u32 %s2953, 4
          %s2957 = int_to_ptr.hbm [resolvable:$true] %s2956
          %2962 = dma.vmem_to_hbm [thread:$0]  %s2955, 1024, %s2957, %s2911, 128, 128, 8
        $region172: #{tpu_custom_call.1} parent=107 // pred_fallthru
          _
        // Predicated region
        $region173: #{tpu_custom_call.1} parent=107 // pred_check
          %p2963 = pneg %p599
        $region174: #{tpu_custom_call.1} parent=107 // pred_check_branch
          %2965 = sbr.rel (%p2963) target = $region176
        $region175: #{tpu_custom_call.1} parent=107 // pred_region
          %2967 = dma.done [#allocation5], 256
        $region176: #{tpu_custom_call.1} parent=107 // pred_fallthru
          _
      $region108: #{tpu_custom_call.1} parent=5 // pred_fallthru
        _
      %p2968 = scmp.le.s32.totalorder 2, %s39
      // Predicated region
      $region177: #{tpu_custom_call.1} parent=5 // pred_check
        %p2969 = pneg %p2968
      $region178: #{tpu_custom_call.1} parent=5 // pred_check_branch
        %2971 = sbr.rel (%p2969) target = $region180
      $region179: #{tpu_custom_call.1} parent=5 // pred_region
        %s2972 = ssub.s32 %s39, 2
        // Predicated region
        $region181: #{tpu_custom_call.1} parent=179 // pred_check
          %p2973 = pneg %p631
        $region182: #{tpu_custom_call.1} parent=179 // pred_check_branch
          %2975 = sbr.rel (%p2973) target = $region184
        $region183: #{tpu_custom_call.1} parent=179 // pred_region
          %s2976 = sand.u32 %s45, 1
          %s2977 = scalar_lea.sflag [#allocation22], %s2976
          %s2978 = sand.u32 %s616, 1
          %s2979 = smul.addr %s2978, 64
          %s2980 = scalar_lea.vmem [#allocation21], %s2979
          %2982 = dma.done %s2977, 1024
        $region184: #{tpu_custom_call.1} parent=179 // pred_fallthru
          _
        // Predicated region
        $region185: #{tpu_custom_call.1} parent=179 // pred_check
          %p2983 = pneg %p657
        $region186: #{tpu_custom_call.1} parent=179 // pred_check_branch
          %2985 = sbr.rel (%p2983) target = $region188
        $region187: #{tpu_custom_call.1} parent=179 // pred_region
          %s2986 = sand.u32 %s45, 1
          %s2987 = scalar_lea.sflag [#allocation22], %s2986
          %s2988 = sand.u32 %s642, 1
          %s2989 = smul.addr %s2988, 64
          %s2990 = scalar_lea.vmem [#allocation23], %s2989
          %2992 = dma.done %s2987, 1024
        $region188: #{tpu_custom_call.1} parent=179 // pred_fallthru
          _
      $region180: #{tpu_custom_call.1} parent=5 // pred_fallthru
        _
    $region6: #{tpu_custom_call.1} parent=1 // loop_footer
      %s43 = sadd.s32 1, %s39
    $region7: #{tpu_custom_call.1} parent=1 // loop_footer_branch
      %38 = sbr.rel target = $region3
    $region8: #{tpu_custom_call.1} parent=1 // loop_exit
      _
    %2993 = vsyncpa [#allocation4], 1
    %s2994 = scalar_lea.sflag [#allocation4], 1
    %2995 = vsyncpa %s2994, 1
    %2996 = vsyncpa [#allocation7], 1
    %2997 = vsyncpa [#allocation10], 1
    %2998 = vsyncpa [#allocation13], 1
    %2999 = vsyncpa [#allocation5], 1
    %s3000 = scalar_lea.sflag [#allocation5], 1
    %3001 = vsyncpa %s3000, 1
    %3002 = vsyncpa [#allocation22], 1
    %s3003 = scalar_lea.sflag [#allocation22], 1
    %3004 = vsyncpa %s3003, 1

</llo_original>
